<compile_context>
chip_gen: v7x
topology: tpu7x:2x2x1
jax: 0.10.0
libtpu: 0.0.40
codegen_flags: <defaults>
</compile_context>

<pallas_src>
import functools
import math

import jax
import jax.numpy as jnp
from jax.experimental import pallas as pl
from jax.experimental.pallas import tpu as pltpu

_VMEM_LIMIT = 32 * 1024 * 1024       # scoped VMEM limit handed to Mosaic
_VMEM_BUDGET = 20 * 1024 * 1024      # double-buffered footprint target for tiling
_TARGET_ROWS = 256                   # default batch tile (rows)


def _round_up(x, m):
    return (x + m - 1) // m * m


def _choose_block(n_rows, bytes_per_row, target=_TARGET_ROWS, budget=_VMEM_BUDGET):
    """Pick a batch-row tile (multiple of 8) and the padded row count.

    VMEM-aware (double-buffered per-row footprint <= budget) and splits into
    >= 2 blocks when there is enough work so v7x's two TensorCores both get a
    shard.  The padded total is always a multiple of the tile (no fallback to
    the full batch for awkward sizes)."""
    npad = _round_up(max(n_rows, 1), 8)
    cap = max(8, (budget // max(bytes_per_row, 1)) // 8 * 8)
    rows = min(target, cap, npad)
    if rows >= npad and npad >= 16:
        rows = _round_up(npad // 2, 8)      # >= 2 grid blocks for dual-TC v7x
    rows = max(8, rows // 8 * 8)
    npad = _round_up(npad, rows)
    return rows, npad


# -----------------------------------------------------------------------------
# Kernels.  Gate order is PyTorch's [r | z | n]; gi already holds
# x @ W_ih + b_ih (+ b_hr / b_hz folded in for the r and z gates), so only the
# merged recurrent matmul, the n-gate bias and the gate math run in-kernel.
# -----------------------------------------------------------------------------
def _make_word_kernel(W, Hp, rows):
    H2 = 2 * Hp

    def kernel(gif_ref, gib_ref, whf_ref, bhnf_ref, bhnb_ref, out_ref):
        wf = whf_ref[...]                                            # (Hp,3Hp) bf16
        bnf = jnp.broadcast_to(bhnf_ref[...], (rows, Hp))            # hoisted
        h = jnp.zeros((rows, Hp), jnp.float32)
        for t in range(W):                   # fully unrolled; h stays in vregs
            g = gif_ref[t].astype(jnp.float32)                       # (rows,3Hp)
            gh = jnp.dot(h.astype(jnp.bfloat16), wf,
                         preferred_element_type=jnp.float32)         # one matmul
            rz = jax.nn.sigmoid(g[:, :H2] + gh[:, :H2])
            n = jnp.tanh(g[:, H2:] + rz[:, :Hp] * (gh[:, H2:] + bnf))
            h = (1.0 - rz[:, Hp:]) * n + rz[:, Hp:] * h
        # Backward word direction collapsed to ONE step from h0 = 0: only
        # output[:, -1, :] of the word BiGRU is consumed downstream, and the
        # reverse scan's output at the last word is its first step (gh == 0,
        # b_hr/b_hz already folded into gi, so no recurrent matmul at all).
        gb = gib_ref[...].astype(jnp.float32)
        rzb = jax.nn.sigmoid(gb[:, :H2])
        bnb = jnp.broadcast_to(bhnb_ref[...], (rows, Hp))
        nb_ = jnp.tanh(gb[:, H2:] + rzb[:, :Hp] * bnb)
        hb = (1.0 - rzb[:, Hp:]) * nb_
        out_ref[...] = jnp.concatenate([h, hb], axis=-1)   # one full-lane store
    return kernel


def _make_bidir_kernel(S, Hp, rows, with_reset):
    H2 = 2 * Hp

    def cell(g, h_prev, w, bn):
        gf = g.astype(jnp.float32)
        gh = jnp.dot(h_prev.astype(jnp.bfloat16), w,
                     preferred_element_type=jnp.float32)             # one matmul
        rz = jax.nn.sigmoid(gf[:, :H2] + gh[:, :H2])
        n = jnp.tanh(gf[:, H2:] + rz[:, :Hp] * (gh[:, H2:] + bn))
        return (1.0 - rz[:, Hp:]) * n + rz[:, Hp:] * h_prev

    def body(gif, gib, whf, whb, bhnf, bhnb, mf, mb, out_ref, hb_scr):
        wf = whf[...]
        wb = whb[...]
        bnf = jnp.broadcast_to(bhnf[...], (rows, Hp))   # hoisted out of the scan
        bnb = jnp.broadcast_to(bhnb[...], (rows, Hp))
        # ---- backward scan first, states parked in VMEM scratch -------------
        hb = jnp.zeros((rows, Hp), jnp.float32)
        for i in range(S):                               # fully unrolled
            t = S - 1 - i
            hprev = hb * mb[t] if with_reset else hb     # h0 = 0 -> mask is a no-op at t=S-1
            hb = cell(gib[t], hprev, wb, bnb)
            hb_scr[t] = hb
        # ---- forward scan; one lane-dense (rows, 2Hp) store per step --------
        hf = jnp.zeros((rows, Hp), jnp.float32)
        for t in range(S):
            hprev = hf * mf[t] if with_reset else hf     # h0 = 0 -> mask is a no-op at t=0
            hf = cell(gif[t], hprev, wf, bnf)
            out_ref[t] = jnp.concatenate([hf, hb_scr[t]], axis=-1)

    if with_reset:
        def kernel(gif, gib, whf, whb, bhnf, bhnb, mf, mb, out_ref, hb_scr):
            body(gif, gib, whf, whb, bhnf, bhnb, mf, mb, out_ref, hb_scr)
    else:
        def kernel(gif, gib, whf, whb, bhnf, bhnb, out_ref, hb_scr):
            body(gif, gib, whf, whb, bhnf, bhnb, None, None, out_ref, hb_scr)
    return kernel


# -----------------------------------------------------------------------------
# pallas_call wrappers.
# -----------------------------------------------------------------------------
def word_level_gru(gi_f, gi_b, w_rec_f, b_hn_f, b_hn_b, *, block_rows):
    """gi_f: (W, Npad, 3Hp) bf16, gi_b: (Npad, 3Hp) bf16.  Returns (Npad, 2Hp) f32."""
    W, Npad, G3 = gi_f.shape
    Hp = G3 // 3
    rows = block_rows
    kernel = _make_word_kernel(W, Hp, rows)
    return pl.pallas_call(
        kernel,
        out_shape=jax.ShapeDtypeStruct((Npad, 2 * Hp), jnp.float32),
        grid=(Npad // rows,),
        in_specs=[
            pl.BlockSpec((W, rows, G3), lambda i: (0, i, 0)),
            pl.BlockSpec((rows, G3), lambda i: (i, 0)),
            pl.BlockSpec((Hp, G3), lambda i: (0, 0)),
            pl.BlockSpec((1, Hp), lambda i: (0, 0)),
            pl.BlockSpec((1, Hp), lambda i: (0, 0)),
        ],
        out_specs=pl.BlockSpec((rows, 2 * Hp), lambda i: (i, 0)),
        compiler_params=pltpu.CompilerParams(
            dimension_semantics=("parallel",),
            vmem_limit_bytes=_VMEM_LIMIT),
    )(gi_f, gi_b, w_rec_f, b_hn_f, b_hn_b)


def bidir_gru_level(gi_f, gi_b, prep_f, prep_b, m_f=None, m_b=None, *, block_rows):
    """gi_f/gi_b: (S, Bpad, 3Hp) bf16.  Returns (S, Bpad, 2Hp) f32."""
    S, Bpad, G3 = gi_f.shape
    Hp = G3 // 3
    rows = block_rows
    with_reset = m_f is not None
    kernel = _make_bidir_kernel(S, Hp, rows, with_reset)
    in_specs = [
        pl.BlockSpec((S, rows, G3), lambda i: (0, i, 0)),
        pl.BlockSpec((S, rows, G3), lambda i: (0, i, 0)),
        pl.BlockSpec((Hp, G3), lambda i: (0, 0)),
        pl.BlockSpec((Hp, G3), lambda i: (0, 0)),
        pl.BlockSpec((1, Hp), lambda i: (0, 0)),
        pl.BlockSpec((1, Hp), lambda i: (0, 0)),
    ]
    args = [gi_f, gi_b, prep_f["w_rec"], prep_b["w_rec"],
            prep_f["b_hn"], prep_b["b_hn"]]
    if with_reset:
        in_specs += [pl.BlockSpec((S, rows, Hp), lambda i: (0, i, 0)),
                     pl.BlockSpec((S, rows, Hp), lambda i: (0, i, 0))]
        args += [m_f, m_b]
    return pl.pallas_call(
        kernel,
        out_shape=jax.ShapeDtypeStruct((S, Bpad, 2 * Hp), jnp.float32),
        grid=(Bpad // rows,),
        in_specs=in_specs,
        out_specs=pl.BlockSpec((S, rows, 2 * Hp), lambda i: (0, i, 0)),
        scratch_shapes=[pltpu.VMEM((S, rows, Hp), jnp.float32)],
        compiler_params=pltpu.CompilerParams(
            dimension_semantics=("parallel",),
            vmem_limit_bytes=_VMEM_LIMIT),
    )(*args)


# -----------------------------------------------------------------------------
# Parameters (raw PyTorch-style) and kernel-side prepared tensors.
# -----------------------------------------------------------------------------
def _init_gru_dir(key, in_size, hidden):
    """Raw PyTorch GRU(Cell) parameters for one direction: W_ih (3H, in),
    W_hh (3H, H), b_ih (3H,), b_hh (3H,)  with gate order [r | z | n]."""
    k = 1.0 / math.sqrt(hidden)
    k1, k2, k3, k4 = jax.random.split(key, 4)
    return {
        "wih": jax.random.uniform(k1, (3 * hidden, in_size), jnp.float32, -k, k),
        "whh": jax.random.uniform(k2, (3 * hidden, hidden), jnp.float32, -k, k),
        "bih": jax.random.uniform(k3, (3 * hidden,), jnp.float32, -k, k),
        "bhh": jax.random.uniform(k4, (3 * hidden,), jnp.float32, -k, k),
    }


def _prepare_dir(raw, H, Hp, in_is_padded_bi):
    """Build the kernel-side tensors for one GRU direction with the hidden
    width zero-padded to Hp (lane-dense):
      w_proj (Fp, 3Hp) bf16  -- input projection, gate g in columns [g*Hp, g*Hp+H)
      b_proj (1, 3Hp)  f32   -- b_ih with b_hr/b_hz folded in (not b_hn)
      w_rec  (Hp, 3Hp) bf16  -- merged per-gate recurrent weights
      b_hn   (1, Hp)   f32
    Zero padding keeps the padded hidden lanes identically zero through the
    recurrence, so un-padding is a simple slice at the end."""
    wih, whh, bih, bhh = raw["wih"], raw["whh"], raw["bih"], raw["bhh"]
    w_cols, b_cols, wr_cols = [], [], []
    for g in range(3):
        wg = wih[g * H:(g + 1) * H, :].T                 # (F, H)
        if in_is_padded_bi:
            # input features live at [0:H] and [Hp:Hp+H] of a 2Hp padded vector
            top = jnp.pad(wg[:H], ((0, Hp - H), (0, 0)))
            bot = jnp.pad(wg[H:], ((0, Hp - H), (0, 0)))
            wg = jnp.concatenate([top, bot], axis=0)     # (2Hp, H)
        w_cols.append(jnp.pad(wg, ((0, 0), (0, Hp - H))))
        bg = bih[g * H:(g + 1) * H]
        if g < 2:                                        # fold b_hr / b_hz
            bg = bg + bhh[g * H:(g + 1) * H]
        b_cols.append(jnp.pad(bg, (0, Hp - H)))
        wr = whh[g * H:(g + 1) * H, :].T                 # (H, H)
        wr_cols.append(jnp.pad(wr, ((0, Hp - H), (0, Hp - H))))
    w_proj = jnp.concatenate(w_cols, axis=1)             # (Fp, 3Hp)
    b_proj = jnp.concatenate(b_cols).reshape(1, 3 * Hp)  # (1, 3Hp)
    w_rec = jnp.concatenate(wr_cols, axis=1)             # (Hp, 3Hp)
    b_hn = jnp.pad(bhh[2 * H:3 * H], (0, Hp - H)).reshape(1, Hp)
    return {"w_proj": w_proj.astype(jnp.bfloat16), "b_proj": b_proj,
            "w_rec": w_rec.astype(jnp.bfloat16), "b_hn": b_hn}


def _project_seq(x, prep):
    """Hoisted input projection for a whole (T, N, F) sequence: one large
    (T*N, F) @ (F, 3Hp) MXU matmul (bf16 operands, f32 accumulation), bias
    added, result shipped to the kernels in bf16 and already packed (T,N,3Hp)
    -- no wrapper-side transpose of the big gi tensor."""
    T, N, F = x.shape
    gi = jnp.dot(x.reshape(T * N, F).astype(jnp.bfloat16), prep["w_proj"],
                 preferred_element_type=jnp.float32) + prep["b_proj"]
    return gi.reshape(T, N, -1).astype(jnp.bfloat16)


def _project_step(x, prep):
    """Projection of a single timestep: (N, F) -> (N, 3Hp) bf16."""
    gi = jnp.dot(x.astype(jnp.bfloat16), prep["w_proj"],
                 preferred_element_type=jnp.float32) + prep["b_proj"]
    return gi.astype(jnp.bfloat16)


def hierarchical_encoder(X, P, params, *, hidden):
    """
    X: (B, S, W, I)  -- X[:, t, ...] is the batch_first input of the word GRU.
    P: (B, S) binary speaker-change indicator (P.T is the reset mask D).
    Returns (hs, Hi): hs (S, B, 2H) f32, Hi (B, 2H) f32 -- matching the
    PyTorch module's forward pass.
    """
    B, S, W, I = X.shape
    H = hidden
    Hp = _round_up(H, 128)            # lane-dense hidden width (no-op for H=128)

    prep = {name: _prepare_dir(params[name], H, Hp,
                               in_is_padded_bi=(name not in ("word_f", "word_b")))
            for name in params}

    # ===== word level: BiGRU, only output[:, -1, :] is consumed ==============
    # order rows as (s, b) so the word output reshapes straight to (S, B, .)
    N = S * B
    xw = jnp.transpose(X, (2, 1, 0, 3)).reshape(W, N, I).astype(jnp.float32)
    bytes_row_w = 2 * (W * 3 * Hp * 2 + 3 * Hp * 2) + 2 * (2 * Hp * 4)
    rows_w, Npad = _choose_block(N, bytes_row_w)
    xw = jnp.pad(xw, ((0, 0), (0, Npad - N), (0, 0)))
    gi_wf = _project_seq(xw, prep["word_f"])                 # (W, Npad, 3Hp) bf16
    gi_wb = _project_step(xw[W - 1], prep["word_b"])         # (Npad, 3Hp) bf16
    last = word_level_gru(gi_wf, gi_wb, prep["word_f"]["w_rec"],
                          prep["word_f"]["b_hn"], prep["word_b"]["b_hn"],
                          block_rows=rows_w)                 # (Npad, 2Hp)
    hw = last[:N].reshape(S, B, 2 * Hp)                      # time-major, no transpose

    # persona / sentence levels share the padded batch layout
    bytes_row_s = 2 * (2 * S * 3 * Hp * 2) + 2 * (S * 2 * Hp * 4) + S * Hp * 4
    bytes_row_p = bytes_row_s + 2 * (2 * S * Hp * 4)         # + reset masks
    rows_b, Bpad = _choose_block(B, bytes_row_p)
    hw_p = jnp.pad(hw, ((0, 0), (0, Bpad - B), (0, 0)))      # (S, Bpad, 2Hp)

    # ===== persona level: DiscontinuedGRU (reset h on speaker change) ========
    D = jnp.transpose(P).astype(jnp.float32)                 # (S, B)
    Dp = jnp.pad(D, ((0, 0), (0, Bpad - B)))
    Dnx = jnp.concatenate([Dp[1:], jnp.zeros((1, Bpad), jnp.float32)], axis=0)
    # pre-broadcast reset masks to (S, Bpad, Hp): no per-step lane broadcast
    m_f = jnp.broadcast_to((1.0 - Dp)[:, :, None], (S, Bpad, Hp))
    m_b = jnp.broadcast_to((1.0 - Dnx)[:, :, None], (S, Bpad, Hp))
    gi_pf = _project_seq(hw_p, prep["pers_f"])
    gi_pb = _project_seq(hw_p, prep["pers_b"])
    hp = bidir_gru_level(gi_pf, gi_pb, prep["pers_f"], prep["pers_b"],
                         m_f, m_b, block_rows=rows_b)        # (S, Bpad, 2Hp)

    # ===== sentence level: plain BiGRU (no reset masks) =======================
    gi_sf = _project_seq(hp, prep["sent_f"])
    gi_sb = _project_seq(hp, prep["sent_b"])
    hs_p = bidir_gru_level(gi_sf, gi_sb, prep["sent_f"], prep["sent_b"],
                           block_rows=rows_b)                # (S, Bpad, 2Hp)

    # un-pad: real H lanes of each direction half
    hs = jnp.concatenate([hs_p[:, :B, 0:H], hs_p[:, :B, Hp:Hp + H]], axis=-1)
    Hi = hs[-1]
    return hs, Hi


# -----------------------------------------------------------------------------
# Pure-JAX f32 reference (mirrors the PyTorch module) for a sanity check.
# -----------------------------------------------------------------------------
def _ref_cell(x, h, p, H):
    gi = x @ p["wih"].T + p["bih"]
    gh = h @ p["whh"].T + p["bhh"]
    r = jax.nn.sigmoid(gi[:, :H] + gh[:, :H])
    z = jax.nn.sigmoid(gi[:, H:2 * H] + gh[:, H:2 * H])
    n = jnp.tanh(gi[:, 2 * H:] + r * gh[:, 2 * H:])
    return (1.0 - z) * n + z * h


def reference_encoder(X, P, params, H):
    B, S, W, _ = X.shape
    hw = []
    for s in range(S):
        x = X[:, s]
        hf = jnp.zeros((B, H), jnp.float32)
        for t in range(W):
            hf = _ref_cell(x[:, t], hf, params["word_f"], H)
        # reverse-direction output at the last word == one step from h0 = 0
        hb = _ref_cell(x[:, W - 1], jnp.zeros((B, H), jnp.float32),
                       params["word_b"], H)
        hw.append(jnp.concatenate([hf, hb], axis=1))
    hw = jnp.stack(hw, axis=0)
    D = jnp.transpose(P).astype(jnp.float32)
    h = jnp.zeros((B, H), jnp.float32); hpf = []
    for t in range(S):
        hin = h * (1.0 - D[t])[:, None] if t > 0 else jnp.zeros((B, H), jnp.float32)
        h = _ref_cell(hw[t], hin, params["pers_f"], H); hpf.append(h)
    h = jnp.zeros((B, H), jnp.float32); hpb = [None] * S
    for t in reversed(range(S)):
        hin = h * (1.0 - D[t + 1])[:, None] if t < S - 1 else jnp.zeros((B, H), jnp.float32)
        h = _ref_cell(hw[t], hin, params["pers_b"], H); hpb[t] = h
    hp = jnp.concatenate([jnp.stack(hpf), jnp.stack(hpb)], axis=2)
    h = jnp.zeros((B, H), jnp.float32); hsf = []
    for t in range(S):
        h = _ref_cell(hp[t], h, params["sent_f"], H); hsf.append(h)
    h = jnp.zeros((B, H), jnp.float32); hsb = [None] * S
    for t in reversed(range(S)):
        h = _ref_cell(hp[t], h, params["sent_b"], H); hsb[t] = h
    hs = jnp.concatenate([jnp.stack(hsf), jnp.stack(hsb)], axis=2)
    return hs, hs[-1]


if __name__ == "__main__":
    B, S, W, I, H = 2, 5, 6, 16, 32   # batch, sentences, words, input, hidden

    key = jax.random.PRNGKey(0)
    kx, kp, *wkeys = jax.random.split(key, 2 + 6)
    X = jax.random.normal(kx, (B, S, W, I), jnp.float32)
    P = (jax.random.uniform(kp, (B, S)) > 0.5).astype(jnp.float32)

    params = {
        "word_f": _init_gru_dir(wkeys[0], I, H),
        "word_b": _init_gru_dir(wkeys[1], I, H),
        "pers_f": _init_gru_dir(wkeys[2], 2 * H, H),
        "pers_b": _init_gru_dir(wkeys[3], 2 * H, H),
        "sent_f": _init_gru_dir(wkeys[4], 2 * H, H),
        "sent_b": _init_gru_dir(wkeys[5], 2 * H, H),
    }

    fn = jax.jit(functools.partial(hierarchical_encoder, hidden=H))
    hs, Hi = fn(X, P, params)
    jax.block_until_ready((hs, Hi))
    assert hs.shape == (S, B, 2 * H) and Hi.shape == (B, 2 * H)
    assert hs.dtype == jnp.float32 and Hi.dtype == jnp.float32

    # Sanity check vs pure-JAX f32 reference (projections AND recurrence use
    # bf16 operands with f32 accumulation, so tolerance is loose by design).
    hs_ref, _ = reference_encoder(X, P, params, H)
    max_err = float(jnp.max(jnp.abs(hs - hs_ref)))
    assert max_err < 2e-1, f"mismatch vs reference: {max_err}"

    print("KERNEL_OK")
</pallas_src>

<mosaic_0001>
module attributes {stable_mosaic.version = 11 : i64} {
  func.func @kernel(%arg0: i32, %arg1: memref<6x8x384xbf16, #tpu.memory_space<vmem>>, %arg2: memref<8x384xbf16, #tpu.memory_space<vmem>>, %arg3: memref<128x384xbf16, #tpu.memory_space<vmem>>, %arg4: memref<1x128xf32, #tpu.memory_space<vmem>>, %arg5: memref<1x128xf32, #tpu.memory_space<vmem>>, %arg6: memref<8x256xf32, #tpu.memory_space<vmem>>) attributes {dimension_semantics = [#tpu.dimension_semantics<parallel>], iteration_bounds = array<i64: 2>, scalar_prefetch = 0 : i64, scratch_operands = 0 : i64, tpu.core_type = #tpu.core_type<tc>, window_params = [{transform_indices = @transform_0, window_bounds = array<i64: 6, 8, 384>}, {transform_indices = @transform_1, window_bounds = array<i64: 8, 384>}, {pipeline_mode = #tpu.pipeline_mode<synchronous>, transform_indices = @transform_2, window_bounds = array<i64: 128, 384>}, {pipeline_mode = #tpu.pipeline_mode<synchronous>, transform_indices = @transform_3, window_bounds = array<i64: 1, 128>}, {pipeline_mode = #tpu.pipeline_mode<synchronous>, transform_indices = @transform_4, window_bounds = array<i64: 1, 128>}, {transform_indices = @transform_5, window_bounds = array<i64: 8, 256>}]} {
    %c0 = arith.constant 0 : index
    %c0_0 = arith.constant 0 : index
    %0 = vector.load %arg3[%c0, %c0_0] : memref<128x384xbf16, #tpu.memory_space<vmem>>, vector<128x384xbf16>
    %c0_1 = arith.constant 0 : index
    %c0_2 = arith.constant 0 : index
    %1 = vector.load %arg4[%c0_1, %c0_2] : memref<1x128xf32, #tpu.memory_space<vmem>>, vector<1x128xf32>
    %2 = vector.shape_cast %1 : vector<1x128xf32> to vector<1x128xf32>
    %3 = vector.broadcast %2 : vector<1x128xf32> to vector<8x128xf32>
    %cst = arith.constant 0.000000e+00 : f32
    %4 = vector.broadcast %cst : f32 to vector<8x128xf32>
    %c0_3 = arith.constant 0 : index
    %c0_4 = arith.constant 0 : index
    %c0_5 = arith.constant 0 : index
    %5 = vector.load %arg1[%c0_3, %c0_4, %c0_5] : memref<6x8x384xbf16, #tpu.memory_space<vmem>>, vector<1x8x384xbf16>
    %6 = vector.shape_cast %5 : vector<1x8x384xbf16> to vector<8x384xbf16>
    %7 = arith.extf %6 : vector<8x384xbf16> to vector<8x384xf32>
    %8 = arith.truncf %4 : vector<8x128xf32> to vector<8x128xbf16>
    %cst_6 = arith.constant dense<0.000000e+00> : vector<8x384xf32>
    %9 = tpu.matmul %8, %0, %cst_6 {dimension_numbers = #tpu.dot_dimension_numbers<[1], [0], [0], [1], [0, 0, 1, 1], [], []>} : vector<8x128xbf16>, vector<128x384xbf16>, vector<8x384xf32> -> vector<8x384xf32>
    %10 = vector.extract_strided_slice %7 {offsets = [0, 0], sizes = [8, 256], strides = [1, 1]} : vector<8x384xf32> to vector<8x256xf32>
    %11 = vector.extract_strided_slice %9 {offsets = [0, 0], sizes = [8, 256], strides = [1, 1]} : vector<8x384xf32> to vector<8x256xf32>
    %12 = arith.addf %10, %11 : vector<8x256xf32>
    %13 = arith.negf %12 : vector<8x256xf32>
    %14 = math.exp %13 : vector<8x256xf32>
    %cst_7 = arith.constant 1.000000e+00 : f32
    %15 = vector.broadcast %cst_7 : f32 to vector<8x256xf32>
    %16 = arith.addf %15, %14 : vector<8x256xf32>
    %17 = arith.divf %15, %16 : vector<8x256xf32>
    %18 = vector.extract_strided_slice %7 {offsets = [0, 256], sizes = [8, 128], strides = [1, 1]} : vector<8x384xf32> to vector<8x128xf32>
    %19 = vector.extract_strided_slice %17 {offsets = [0, 0], sizes = [8, 128], strides = [1, 1]} : vector<8x256xf32> to vector<8x128xf32>
    %20 = vector.extract_strided_slice %9 {offsets = [0, 256], sizes = [8, 128], strides = [1, 1]} : vector<8x384xf32> to vector<8x128xf32>
    %21 = arith.addf %20, %3 : vector<8x128xf32>
    %22 = arith.mulf %19, %21 : vector<8x128xf32>
    %23 = arith.addf %18, %22 : vector<8x128xf32>
    %24 = math.tanh %23 : vector<8x128xf32>
    %25 = vector.extract_strided_slice %17 {offsets = [0, 128], sizes = [8, 128], strides = [1, 1]} : vector<8x256xf32> to vector<8x128xf32>
    %cst_8 = arith.constant 1.000000e+00 : f32
    %26 = vector.broadcast %cst_8 : f32 to vector<8x128xf32>
    %27 = arith.subf %26, %25 : vector<8x128xf32>
    %28 = arith.mulf %27, %24 : vector<8x128xf32>
    %29 = vector.extract_strided_slice %17 {offsets = [0, 128], sizes = [8, 128], strides = [1, 1]} : vector<8x256xf32> to vector<8x128xf32>
    %30 = arith.mulf %29, %4 : vector<8x128xf32>
    %31 = arith.addf %28, %30 : vector<8x128xf32>
    %c1 = arith.constant 1 : index
    %c0_9 = arith.constant 0 : index
    %c0_10 = arith.constant 0 : index
    %32 = vector.load %arg1[%c1, %c0_9, %c0_10] : memref<6x8x384xbf16, #tpu.memory_space<vmem>>, vector<1x8x384xbf16>
    %33 = vector.shape_cast %32 : vector<1x8x384xbf16> to vector<8x384xbf16>
    %34 = arith.extf %33 : vector<8x384xbf16> to vector<8x384xf32>
    %35 = arith.truncf %31 : vector<8x128xf32> to vector<8x128xbf16>
    %cst_11 = arith.constant dense<0.000000e+00> : vector<8x384xf32>
    %36 = tpu.matmul %35, %0, %cst_11 {dimension_numbers = #tpu.dot_dimension_numbers<[1], [0], [0], [1], [0, 0, 1, 1], [], []>} : vector<8x128xbf16>, vector<128x384xbf16>, vector<8x384xf32> -> vector<8x384xf32>
    %37 = vector.extract_strided_slice %34 {offsets = [0, 0], sizes = [8, 256], strides = [1, 1]} : vector<8x384xf32> to vector<8x256xf32>
    %38 = vector.extract_strided_slice %36 {offsets = [0, 0], sizes = [8, 256], strides = [1, 1]} : vector<8x384xf32> to vector<8x256xf32>
    %39 = arith.addf %37, %38 : vector<8x256xf32>
    %40 = arith.negf %39 : vector<8x256xf32>
    %41 = math.exp %40 : vector<8x256xf32>
    %cst_12 = arith.constant 1.000000e+00 : f32
    %42 = vector.broadcast %cst_12 : f32 to vector<8x256xf32>
    %43 = arith.addf %42, %41 : vector<8x256xf32>
    %44 = arith.divf %42, %43 : vector<8x256xf32>
    %45 = vector.extract_strided_slice %34 {offsets = [0, 256], sizes = [8, 128], strides = [1, 1]} : vector<8x384xf32> to vector<8x128xf32>
    %46 = vector.extract_strided_slice %44 {offsets = [0, 0], sizes = [8, 128], strides = [1, 1]} : vector<8x256xf32> to vector<8x128xf32>
    %47 = vector.extract_strided_slice %36 {offsets = [0, 256], sizes = [8, 128], strides = [1, 1]} : vector<8x384xf32> to vector<8x128xf32>
    %48 = arith.addf %47, %3 : vector<8x128xf32>
    %49 = arith.mulf %46, %48 : vector<8x128xf32>
    %50 = arith.addf %45, %49 : vector<8x128xf32>
    %51 = math.tanh %50 : vector<8x128xf32>
    %52 = vector.extract_strided_slice %44 {offsets = [0, 128], sizes = [8, 128], strides = [1, 1]} : vector<8x256xf32> to vector<8x128xf32>
    %cst_13 = arith.constant 1.000000e+00 : f32
    %53 = vector.broadcast %cst_13 : f32 to vector<8x128xf32>
    %54 = arith.subf %53, %52 : vector<8x128xf32>
    %55 = arith.mulf %54, %51 : vector<8x128xf32>
    %56 = vector.extract_strided_slice %44 {offsets = [0, 128], sizes = [8, 128], strides = [1, 1]} : vector<8x256xf32> to vector<8x128xf32>
    %57 = arith.mulf %56, %31 : vector<8x128xf32>
    %58 = arith.addf %55, %57 : vector<8x128xf32>
    %c2 = arith.constant 2 : index
    %c0_14 = arith.constant 0 : index
    %c0_15 = arith.constant 0 : index
    %59 = vector.load %arg1[%c2, %c0_14, %c0_15] : memref<6x8x384xbf16, #tpu.memory_space<vmem>>, vector<1x8x384xbf16>
    %60 = vector.shape_cast %59 : vector<1x8x384xbf16> to vector<8x384xbf16>
    %61 = arith.extf %60 : vector<8x384xbf16> to vector<8x384xf32>
    %62 = arith.truncf %58 : vector<8x128xf32> to vector<8x128xbf16>
    %cst_16 = arith.constant dense<0.000000e+00> : vector<8x384xf32>
    %63 = tpu.matmul %62, %0, %cst_16 {dimension_numbers = #tpu.dot_dimension_numbers<[1], [0], [0], [1], [0, 0, 1, 1], [], []>} : vector<8x128xbf16>, vector<128x384xbf16>, vector<8x384xf32> -> vector<8x384xf32>
    %64 = vector.extract_strided_slice %61 {offsets = [0, 0], sizes = [8, 256], strides = [1, 1]} : vector<8x384xf32> to vector<8x256xf32>
    %65 = vector.extract_strided_slice %63 {offsets = [0, 0], sizes = [8, 256], strides = [1, 1]} : vector<8x384xf32> to vector<8x256xf32>
    %66 = arith.addf %64, %65 : vector<8x256xf32>
    %67 = arith.negf %66 : vector<8x256xf32>
    %68 = math.exp %67 : vector<8x256xf32>
    %cst_17 = arith.constant 1.000000e+00 : f32
    %69 = vector.broadcast %cst_17 : f32 to vector<8x256xf32>
    %70 = arith.addf %69, %68 : vector<8x256xf32>
    %71 = arith.divf %69, %70 : vector<8x256xf32>
    %72 = vector.extract_strided_slice %61 {offsets = [0, 256], sizes = [8, 128], strides = [1, 1]} : vector<8x384xf32> to vector<8x128xf32>
    %73 = vector.extract_strided_slice %71 {offsets = [0, 0], sizes = [8, 128], strides = [1, 1]} : vector<8x256xf32> to vector<8x128xf32>
    %74 = vector.extract_strided_slice %63 {offsets = [0, 256], sizes = [8, 128], strides = [1, 1]} : vector<8x384xf32> to vector<8x128xf32>
    %75 = arith.addf %74, %3 : vector<8x128xf32>
    %76 = arith.mulf %73, %75 : vector<8x128xf32>
    %77 = arith.addf %72, %76 : vector<8x128xf32>
    %78 = math.tanh %77 : vector<8x128xf32>
    %79 = vector.extract_strided_slice %71 {offsets = [0, 128], sizes = [8, 128], strides = [1, 1]} : vector<8x256xf32> to vector<8x128xf32>
    %cst_18 = arith.constant 1.000000e+00 : f32
    %80 = vector.broadcast %cst_18 : f32 to vector<8x128xf32>
    %81 = arith.subf %80, %79 : vector<8x128xf32>
    %82 = arith.mulf %81, %78 : vector<8x128xf32>
    %83 = vector.extract_strided_slice %71 {offsets = [0, 128], sizes = [8, 128], strides = [1, 1]} : vector<8x256xf32> to vector<8x128xf32>
    %84 = arith.mulf %83, %58 : vector<8x128xf32>
    %85 = arith.addf %82, %84 : vector<8x128xf32>
    %c3 = arith.constant 3 : index
    %c0_19 = arith.constant 0 : index
    %c0_20 = arith.constant 0 : index
    %86 = vector.load %arg1[%c3, %c0_19, %c0_20] : memref<6x8x384xbf16, #tpu.memory_space<vmem>>, vector<1x8x384xbf16>
    %87 = vector.shape_cast %86 : vector<1x8x384xbf16> to vector<8x384xbf16>
    %88 = arith.extf %87 : vector<8x384xbf16> to vector<8x384xf32>
    %89 = arith.truncf %85 : vector<8x128xf32> to vector<8x128xbf16>
    %cst_21 = arith.constant dense<0.000000e+00> : vector<8x384xf32>
    %90 = tpu.matmul %89, %0, %cst_21 {dimension_numbers = #tpu.dot_dimension_numbers<[1], [0], [0], [1], [0, 0, 1, 1], [], []>} : vector<8x128xbf16>, vector<128x384xbf16>, vector<8x384xf32> -> vector<8x384xf32>
    %91 = vector.extract_strided_slice %88 {offsets = [0, 0], sizes = [8, 256], strides = [1, 1]} : vector<8x384xf32> to vector<8x256xf32>
    %92 = vector.extract_strided_slice %90 {offsets = [0, 0], sizes = [8, 256], strides = [1, 1]} : vector<8x384xf32> to vector<8x256xf32>
    %93 = arith.addf %91, %92 : vector<8x256xf32>
    %94 = arith.negf %93 : vector<8x256xf32>
    %95 = math.exp %94 : vector<8x256xf32>
    %cst_22 = arith.constant 1.000000e+00 : f32
    %96 = vector.broadcast %cst_22 : f32 to vector<8x256xf32>
    %97 = arith.addf %96, %95 : vector<8x256xf32>
    %98 = arith.divf %96, %97 : vector<8x256xf32>
    %99 = vector.extract_strided_slice %88 {offsets = [0, 256], sizes = [8, 128], strides = [1, 1]} : vector<8x384xf32> to vector<8x128xf32>
    %100 = vector.extract_strided_slice %98 {offsets = [0, 0], sizes = [8, 128], strides = [1, 1]} : vector<8x256xf32> to vector<8x128xf32>
    %101 = vector.extract_strided_slice %90 {offsets = [0, 256], sizes = [8, 128], strides = [1, 1]} : vector<8x384xf32> to vector<8x128xf32>
    %102 = arith.addf %101, %3 : vector<8x128xf32>
    %103 = arith.mulf %100, %102 : vector<8x128xf32>
    %104 = arith.addf %99, %103 : vector<8x128xf32>
    %105 = math.tanh %104 : vector<8x128xf32>
    %106 = vector.extract_strided_slice %98 {offsets = [0, 128], sizes = [8, 128], strides = [1, 1]} : vector<8x256xf32> to vector<8x128xf32>
    %cst_23 = arith.constant 1.000000e+00 : f32
    %107 = vector.broadcast %cst_23 : f32 to vector<8x128xf32>
    %108 = arith.subf %107, %106 : vector<8x128xf32>
    %109 = arith.mulf %108, %105 : vector<8x128xf32>
    %110 = vector.extract_strided_slice %98 {offsets = [0, 128], sizes = [8, 128], strides = [1, 1]} : vector<8x256xf32> to vector<8x128xf32>
    %111 = arith.mulf %110, %85 : vector<8x128xf32>
    %112 = arith.addf %109, %111 : vector<8x128xf32>
    %c4 = arith.constant 4 : index
    %c0_24 = arith.constant 0 : index
    %c0_25 = arith.constant 0 : index
    %113 = vector.load %arg1[%c4, %c0_24, %c0_25] : memref<6x8x384xbf16, #tpu.memory_space<vmem>>, vector<1x8x384xbf16>
    %114 = vector.shape_cast %113 : vector<1x8x384xbf16> to vector<8x384xbf16>
    %115 = arith.extf %114 : vector<8x384xbf16> to vector<8x384xf32>
    %116 = arith.truncf %112 : vector<8x128xf32> to vector<8x128xbf16>
    %cst_26 = arith.constant dense<0.000000e+00> : vector<8x384xf32>
    %117 = tpu.matmul %116, %0, %cst_26 {dimension_numbers = #tpu.dot_dimension_numbers<[1], [0], [0], [1], [0, 0, 1, 1], [], []>} : vector<8x128xbf16>, vector<128x384xbf16>, vector<8x384xf32> -> vector<8x384xf32>
    %118 = vector.extract_strided_slice %115 {offsets = [0, 0], sizes = [8, 256], strides = [1, 1]} : vector<8x384xf32> to vector<8x256xf32>
    %119 = vector.extract_strided_slice %117 {offsets = [0, 0], sizes = [8, 256], strides = [1, 1]} : vector<8x384xf32> to vector<8x256xf32>
    %120 = arith.addf %118, %119 : vector<8x256xf32>
    %121 = arith.negf %120 : vector<8x256xf32>
    %122 = math.exp %121 : vector<8x256xf32>
    %cst_27 = arith.constant 1.000000e+00 : f32
    %123 = vector.broadcast %cst_27 : f32 to vector<8x256xf32>
    %124 = arith.addf %123, %122 : vector<8x256xf32>
    %125 = arith.divf %123, %124 : vector<8x256xf32>
    %126 = vector.extract_strided_slice %115 {offsets = [0, 256], sizes = [8, 128], strides = [1, 1]} : vector<8x384xf32> to vector<8x128xf32>
    %127 = vector.extract_strided_slice %125 {offsets = [0, 0], sizes = [8, 128], strides = [1, 1]} : vector<8x256xf32> to vector<8x128xf32>
    %128 = vector.extract_strided_slice %117 {offsets = [0, 256], sizes = [8, 128], strides = [1, 1]} : vector<8x384xf32> to vector<8x128xf32>
    %129 = arith.addf %128, %3 : vector<8x128xf32>
    %130 = arith.mulf %127, %129 : vector<8x128xf32>
    %131 = arith.addf %126, %130 : vector<8x128xf32>
    %132 = math.tanh %131 : vector<8x128xf32>
    %133 = vector.extract_strided_slice %125 {offsets = [0, 128], sizes = [8, 128], strides = [1, 1]} : vector<8x256xf32> to vector<8x128xf32>
    %cst_28 = arith.constant 1.000000e+00 : f32
    %134 = vector.broadcast %cst_28 : f32 to vector<8x128xf32>
    %135 = arith.subf %134, %133 : vector<8x128xf32>
    %136 = arith.mulf %135, %132 : vector<8x128xf32>
    %137 = vector.extract_strided_slice %125 {offsets = [0, 128], sizes = [8, 128], strides = [1, 1]} : vector<8x256xf32> to vector<8x128xf32>
    %138 = arith.mulf %137, %112 : vector<8x128xf32>
    %139 = arith.addf %136, %138 : vector<8x128xf32>
    %c5 = arith.constant 5 : index
    %c0_29 = arith.constant 0 : index
    %c0_30 = arith.constant 0 : index
    %140 = vector.load %arg1[%c5, %c0_29, %c0_30] : memref<6x8x384xbf16, #tpu.memory_space<vmem>>, vector<1x8x384xbf16>
    %141 = vector.shape_cast %140 : vector<1x8x384xbf16> to vector<8x384xbf16>
    %142 = arith.extf %141 : vector<8x384xbf16> to vector<8x384xf32>
    %143 = arith.truncf %139 : vector<8x128xf32> to vector<8x128xbf16>
    %cst_31 = arith.constant dense<0.000000e+00> : vector<8x384xf32>
    %144 = tpu.matmul %143, %0, %cst_31 {dimension_numbers = #tpu.dot_dimension_numbers<[1], [0], [0], [1], [0, 0, 1, 1], [], []>} : vector<8x128xbf16>, vector<128x384xbf16>, vector<8x384xf32> -> vector<8x384xf32>
    %145 = vector.extract_strided_slice %142 {offsets = [0, 0], sizes = [8, 256], strides = [1, 1]} : vector<8x384xf32> to vector<8x256xf32>
    %146 = vector.extract_strided_slice %144 {offsets = [0, 0], sizes = [8, 256], strides = [1, 1]} : vector<8x384xf32> to vector<8x256xf32>
    %147 = arith.addf %145, %146 : vector<8x256xf32>
    %148 = arith.negf %147 : vector<8x256xf32>
    %149 = math.exp %148 : vector<8x256xf32>
    %cst_32 = arith.constant 1.000000e+00 : f32
    %150 = vector.broadcast %cst_32 : f32 to vector<8x256xf32>
    %151 = arith.addf %150, %149 : vector<8x256xf32>
    %152 = arith.divf %150, %151 : vector<8x256xf32>
    %153 = vector.extract_strided_slice %142 {offsets = [0, 256], sizes = [8, 128], strides = [1, 1]} : vector<8x384xf32> to vector<8x128xf32>
    %154 = vector.extract_strided_slice %152 {offsets = [0, 0], sizes = [8, 128], strides = [1, 1]} : vector<8x256xf32> to vector<8x128xf32>
    %155 = vector.extract_strided_slice %144 {offsets = [0, 256], sizes = [8, 128], strides = [1, 1]} : vector<8x384xf32> to vector<8x128xf32>
    %156 = arith.addf %155, %3 : vector<8x128xf32>
    %157 = arith.mulf %154, %156 : vector<8x128xf32>
    %158 = arith.addf %153, %157 : vector<8x128xf32>
    %159 = math.tanh %158 : vector<8x128xf32>
    %160 = vector.extract_strided_slice %152 {offsets = [0, 128], sizes = [8, 128], strides = [1, 1]} : vector<8x256xf32> to vector<8x128xf32>
    %cst_33 = arith.constant 1.000000e+00 : f32
    %161 = vector.broadcast %cst_33 : f32 to vector<8x128xf32>
    %162 = arith.subf %161, %160 : vector<8x128xf32>
    %163 = arith.mulf %162, %159 : vector<8x128xf32>
    %164 = vector.extract_strided_slice %152 {offsets = [0, 128], sizes = [8, 128], strides = [1, 1]} : vector<8x256xf32> to vector<8x128xf32>
    %165 = arith.mulf %164, %139 : vector<8x128xf32>
    %166 = arith.addf %163, %165 : vector<8x128xf32>
    %c0_34 = arith.constant 0 : index
    %c0_35 = arith.constant 0 : index
    %167 = vector.load %arg2[%c0_34, %c0_35] : memref<8x384xbf16, #tpu.memory_space<vmem>>, vector<8x384xbf16>
    %168 = arith.extf %167 : vector<8x384xbf16> to vector<8x384xf32>
    %169 = vector.extract_strided_slice %168 {offsets = [0, 0], sizes = [8, 256], strides = [1, 1]} : vector<8x384xf32> to vector<8x256xf32>
    %170 = arith.negf %169 : vector<8x256xf32>
    %171 = math.exp %170 : vector<8x256xf32>
    %cst_36 = arith.constant 1.000000e+00 : f32
    %172 = vector.broadcast %cst_36 : f32 to vector<8x256xf32>
    %173 = arith.addf %172, %171 : vector<8x256xf32>
    %174 = arith.divf %172, %173 : vector<8x256xf32>
    %c0_37 = arith.constant 0 : index
    %c0_38 = arith.constant 0 : index
    %175 = vector.load %arg5[%c0_37, %c0_38] : memref<1x128xf32, #tpu.memory_space<vmem>>, vector<1x128xf32>
    %176 = vector.shape_cast %175 : vector<1x128xf32> to vector<1x128xf32>
    %177 = vector.broadcast %176 : vector<1x128xf32> to vector<8x128xf32>
    %178 = vector.extract_strided_slice %168 {offsets = [0, 256], sizes = [8, 128], strides = [1, 1]} : vector<8x384xf32> to vector<8x128xf32>
    %179 = vector.extract_strided_slice %174 {offsets = [0, 0], sizes = [8, 128], strides = [1, 1]} : vector<8x256xf32> to vector<8x128xf32>
    %180 = arith.mulf %179, %177 : vector<8x128xf32>
    %181 = arith.addf %178, %180 : vector<8x128xf32>
    %182 = math.tanh %181 : vector<8x128xf32>
    %183 = vector.extract_strided_slice %174 {offsets = [0, 128], sizes = [8, 128], strides = [1, 1]} : vector<8x256xf32> to vector<8x128xf32>
    %cst_39 = arith.constant 1.000000e+00 : f32
    %184 = vector.broadcast %cst_39 : f32 to vector<8x128xf32>
    %185 = arith.subf %184, %183 : vector<8x128xf32>
    %186 = arith.mulf %185, %182 : vector<8x128xf32>
    %187 = tpu.concatenate %166, %186 in 1 : vector<8x128xf32>, vector<8x128xf32> -> vector<8x256xf32>
    %c0_40 = arith.constant 0 : index
    %c0_41 = arith.constant 0 : index
    %188 = vector.load %arg6[%c0_40, %c0_41] : memref<8x256xf32, #tpu.memory_space<vmem>>, vector<8x256xf32>
    tpu.vector_store %arg6[%c0_40, %c0_41], %187 {strides = array<i32>} : memref<8x256xf32, #tpu.memory_space<vmem>>, vector<8x256xf32>,
    return
  }
  func.func @transform_0(%arg0: i32) -> (i32, i32, i32) {
    %c0_i32 = arith.constant 0 : i32
    %c0_i32_0 = arith.constant 0 : i32
    %c0_i32_1 = arith.constant 0 : i32
    return %c0_i32, %arg0, %c0_i32_0 : i32, i32, i32
  }
  func.func @transform_1(%arg0: i32) -> (i32, i32) {
    %c0_i32 = arith.constant 0 : i32
    %c0_i32_0 = arith.constant 0 : i32
    return %arg0, %c0_i32 : i32, i32
  }
  func.func @transform_2(%arg0: i32) -> (i32, i32) {
    %c0_i32 = arith.constant 0 : i32
    %c0_i32_0 = arith.constant 0 : i32
    %c0_i32_1 = arith.constant 0 : i32
    return %c0_i32, %c0_i32_0 : i32, i32
  }
  func.func @transform_3(%arg0: i32) -> (i32, i32) {
    %c0_i32 = arith.constant 0 : i32
    %c0_i32_0 = arith.constant 0 : i32
    %c0_i32_1 = arith.constant 0 : i32
    return %c0_i32, %c0_i32_0 : i32, i32
  }
  func.func @transform_4(%arg0: i32) -> (i32, i32) {
    %c0_i32 = arith.constant 0 : i32
    %c0_i32_0 = arith.constant 0 : i32
    %c0_i32_1 = arith.constant 0 : i32
    return %c0_i32, %c0_i32_0 : i32, i32
  }
  func.func @transform_5(%arg0: i32) -> (i32, i32) {
    %c0_i32 = arith.constant 0 : i32
    %c0_i32_0 = arith.constant 0 : i32
    return %arg0, %c0_i32 : i32, i32
  }
}

module attributes {stable_mosaic.version = 11 : i64} {
  func.func @kernel(%arg0: i32, %arg1: memref<5x8x384xbf16, #tpu.memory_space<vmem>>, %arg2: memref<5x8x384xbf16, #tpu.memory_space<vmem>>, %arg3: memref<128x384xbf16, #tpu.memory_space<vmem>>, %arg4: memref<128x384xbf16, #tpu.memory_space<vmem>>, %arg5: memref<1x128xf32, #tpu.memory_space<vmem>>, %arg6: memref<1x128xf32, #tpu.memory_space<vmem>>, %arg7: memref<5x8x128xf32, #tpu.memory_space<vmem>>, %arg8: memref<5x8x128xf32, #tpu.memory_space<vmem>>, %arg9: memref<5x8x256xf32, #tpu.memory_space<vmem>>, %arg10: memref<5x8x128xf32, #tpu.memory_space<vmem>>) attributes {dimension_semantics = [#tpu.dimension_semantics<parallel>], iteration_bounds = array<i64: 1>, scalar_prefetch = 0 : i64, scratch_operands = 1 : i64, tpu.core_type = #tpu.core_type<tc>, window_params = [{transform_indices = @transform_0, window_bounds = array<i64: 5, 8, 384>}, {transform_indices = @transform_1, window_bounds = array<i64: 5, 8, 384>}, {pipeline_mode = #tpu.pipeline_mode<synchronous>, transform_indices = @transform_2, window_bounds = array<i64: 128, 384>}, {pipeline_mode = #tpu.pipeline_mode<synchronous>, transform_indices = @transform_3, window_bounds = array<i64: 128, 384>}, {pipeline_mode = #tpu.pipeline_mode<synchronous>, transform_indices = @transform_4, window_bounds = array<i64: 1, 128>}, {pipeline_mode = #tpu.pipeline_mode<synchronous>, transform_indices = @transform_5, window_bounds = array<i64: 1, 128>}, {transform_indices = @transform_6, window_bounds = array<i64: 5, 8, 128>}, {transform_indices = @transform_7, window_bounds = array<i64: 5, 8, 128>}, {transform_indices = @transform_8, window_bounds = array<i64: 5, 8, 256>}]} {
    %c0 = arith.constant 0 : index
    %c0_0 = arith.constant 0 : index
    %0 = vector.load %arg3[%c0, %c0_0] : memref<128x384xbf16, #tpu.memory_space<vmem>>, vector<128x384xbf16>
    %c0_1 = arith.constant 0 : index
    %c0_2 = arith.constant 0 : index
    %1 = vector.load %arg4[%c0_1, %c0_2] : memref<128x384xbf16, #tpu.memory_space<vmem>>, vector<128x384xbf16>
    %c0_3 = arith.constant 0 : index
    %c0_4 = arith.constant 0 : index
    %2 = vector.load %arg5[%c0_3, %c0_4] : memref<1x128xf32, #tpu.memory_space<vmem>>, vector<1x128xf32>
    %3 = vector.shape_cast %2 : vector<1x128xf32> to vector<1x128xf32>
    %4 = vector.broadcast %3 : vector<1x128xf32> to vector<8x128xf32>
    %c0_5 = arith.constant 0 : index
    %c0_6 = arith.constant 0 : index
    %5 = vector.load %arg6[%c0_5, %c0_6] : memref<1x128xf32, #tpu.memory_space<vmem>>, vector<1x128xf32>
    %6 = vector.shape_cast %5 : vector<1x128xf32> to vector<1x128xf32>
    %7 = vector.broadcast %6 : vector<1x128xf32> to vector<8x128xf32>
    %cst = arith.constant 0.000000e+00 : f32
    %8 = vector.broadcast %cst : f32 to vector<8x128xf32>
    %c4 = arith.constant 4 : index
    %c0_7 = arith.constant 0 : index
    %c0_8 = arith.constant 0 : index
    %9 = vector.load %arg8[%c4, %c0_7, %c0_8] : memref<5x8x128xf32, #tpu.memory_space<vmem>>, vector<1x8x128xf32>
    %10 = vector.shape_cast %9 : vector<1x8x128xf32> to vector<8x128xf32>
    %11 = arith.mulf %8, %10 : vector<8x128xf32>
    %c4_9 = arith.constant 4 : index
    %c0_10 = arith.constant 0 : index
    %c0_11 = arith.constant 0 : index
    %12 = vector.load %arg2[%c4_9, %c0_10, %c0_11] : memref<5x8x384xbf16, #tpu.memory_space<vmem>>, vector<1x8x384xbf16>
    %13 = vector.shape_cast %12 : vector<1x8x384xbf16> to vector<8x384xbf16>
    %14 = arith.extf %13 : vector<8x384xbf16> to vector<8x384xf32>
    %15 = arith.truncf %11 : vector<8x128xf32> to vector<8x128xbf16>
    %cst_12 = arith.constant dense<0.000000e+00> : vector<8x384xf32>
    %16 = tpu.matmul %15, %1, %cst_12 {dimension_numbers = #tpu.dot_dimension_numbers<[1], [0], [0], [1], [0, 0, 1, 1], [], []>} : vector<8x128xbf16>, vector<128x384xbf16>, vector<8x384xf32> -> vector<8x384xf32>
    %17 = vector.extract_strided_slice %14 {offsets = [0, 0], sizes = [8, 256], strides = [1, 1]} : vector<8x384xf32> to vector<8x256xf32>
    %18 = vector.extract_strided_slice %16 {offsets = [0, 0], sizes = [8, 256], strides = [1, 1]} : vector<8x384xf32> to vector<8x256xf32>
    %19 = arith.addf %17, %18 : vector<8x256xf32>
    %20 = arith.negf %19 : vector<8x256xf32>
    %21 = math.exp %20 : vector<8x256xf32>
    %cst_13 = arith.constant 1.000000e+00 : f32
    %22 = vector.broadcast %cst_13 : f32 to vector<8x256xf32>
    %23 = arith.addf %22, %21 : vector<8x256xf32>
    %24 = arith.divf %22, %23 : vector<8x256xf32>
    %25 = vector.extract_strided_slice %14 {offsets = [0, 256], sizes = [8, 128], strides = [1, 1]} : vector<8x384xf32> to vector<8x128xf32>
    %26 = vector.extract_strided_slice %24 {offsets = [0, 0], sizes = [8, 128], strides = [1, 1]} : vector<8x256xf32> to vector<8x128xf32>
    %27 = vector.extract_strided_slice %16 {offsets = [0, 256], sizes = [8, 128], strides = [1, 1]} : vector<8x384xf32> to vector<8x128xf32>
    %28 = arith.addf %27, %7 : vector<8x128xf32>
    %29 = arith.mulf %26, %28 : vector<8x128xf32>
    %30 = arith.addf %25, %29 : vector<8x128xf32>
    %31 = math.tanh %30 : vector<8x128xf32>
    %32 = vector.extract_strided_slice %24 {offsets = [0, 128], sizes = [8, 128], strides = [1, 1]} : vector<8x256xf32> to vector<8x128xf32>
    %cst_14 = arith.constant 1.000000e+00 : f32
    %33 = vector.broadcast %cst_14 : f32 to vector<8x128xf32>
    %34 = arith.subf %33, %32 : vector<8x128xf32>
    %35 = arith.mulf %34, %31 : vector<8x128xf32>
    %36 = vector.extract_strided_slice %24 {offsets = [0, 128], sizes = [8, 128], strides = [1, 1]} : vector<8x256xf32> to vector<8x128xf32>
    %37 = arith.mulf %36, %11 : vector<8x128xf32>
    %38 = arith.addf %35, %37 : vector<8x128xf32>
    %c4_15 = arith.constant 4 : index
    %c0_16 = arith.constant 0 : index
    %c0_17 = arith.constant 0 : index
    %39 = vector.load %arg10[%c4_15, %c0_16, %c0_17] : memref<5x8x128xf32, #tpu.memory_space<vmem>>, vector<1x8x128xf32>
    %40 = vector.shape_cast %39 : vector<1x8x128xf32> to vector<8x128xf32>
    %41 = vector.shape_cast %38 : vector<8x128xf32> to vector<1x8x128xf32>
    tpu.vector_store %arg10[%c4_15, %c0_16, %c0_17], %41 {strides = array<i32>} : memref<5x8x128xf32, #tpu.memory_space<vmem>>, vector<1x8x128xf32>,
    %c3 = arith.constant 3 : index
    %c0_18 = arith.constant 0 : index
    %c0_19 = arith.constant 0 : index
    %42 = vector.load %arg8[%c3, %c0_18, %c0_19] : memref<5x8x128xf32, #tpu.memory_space<vmem>>, vector<1x8x128xf32>
    %43 = vector.shape_cast %42 : vector<1x8x128xf32> to vector<8x128xf32>
    %44 = arith.mulf %38, %43 : vector<8x128xf32>
    %c3_20 = arith.constant 3 : index
    %c0_21 = arith.constant 0 : index
    %c0_22 = arith.constant 0 : index
    %45 = vector.load %arg2[%c3_20, %c0_21, %c0_22] : memref<5x8x384xbf16, #tpu.memory_space<vmem>>, vector<1x8x384xbf16>
    %46 = vector.shape_cast %45 : vector<1x8x384xbf16> to vector<8x384xbf16>
    %47 = arith.extf %46 : vector<8x384xbf16> to vector<8x384xf32>
    %48 = arith.truncf %44 : vector<8x128xf32> to vector<8x128xbf16>
    %cst_23 = arith.constant dense<0.000000e+00> : vector<8x384xf32>
    %49 = tpu.matmul %48, %1, %cst_23 {dimension_numbers = #tpu.dot_dimension_numbers<[1], [0], [0], [1], [0, 0, 1, 1], [], []>} : vector<8x128xbf16>, vector<128x384xbf16>, vector<8x384xf32> -> vector<8x384xf32>
    %50 = vector.extract_strided_slice %47 {offsets = [0, 0], sizes = [8, 256], strides = [1, 1]} : vector<8x384xf32> to vector<8x256xf32>
    %51 = vector.extract_strided_slice %49 {offsets = [0, 0], sizes = [8, 256], strides = [1, 1]} : vector<8x384xf32> to vector<8x256xf32>
    %52 = arith.addf %50, %51 : vector<8x256xf32>
    %53 = arith.negf %52 : vector<8x256xf32>
    %54 = math.exp %53 : vector<8x256xf32>
    %cst_24 = arith.constant 1.000000e+00 : f32
    %55 = vector.broadcast %cst_24 : f32 to vector<8x256xf32>
    %56 = arith.addf %55, %54 : vector<8x256xf32>
    %57 = arith.divf %55, %56 : vector<8x256xf32>
    %58 = vector.extract_strided_slice %47 {offsets = [0, 256], sizes = [8, 128], strides = [1, 1]} : vector<8x384xf32> to vector<8x128xf32>
    %59 = vector.extract_strided_slice %57 {offsets = [0, 0], sizes = [8, 128], strides = [1, 1]} : vector<8x256xf32> to vector<8x128xf32>
    %60 = vector.extract_strided_slice %49 {offsets = [0, 256], sizes = [8, 128], strides = [1, 1]} : vector<8x384xf32> to vector<8x128xf32>
    %61 = arith.addf %60, %7 : vector<8x128xf32>
    %62 = arith.mulf %59, %61 : vector<8x128xf32>
    %63 = arith.addf %58, %62 : vector<8x128xf32>
    %64 = math.tanh %63 : vector<8x128xf32>
    %65 = vector.extract_strided_slice %57 {offsets = [0, 128], sizes = [8, 128], strides = [1, 1]} : vector<8x256xf32> to vector<8x128xf32>
    %cst_25 = arith.constant 1.000000e+00 : f32
    %66 = vector.broadcast %cst_25 : f32 to vector<8x128xf32>
    %67 = arith.subf %66, %65 : vector<8x128xf32>
    %68 = arith.mulf %67, %64 : vector<8x128xf32>
    %69 = vector.extract_strided_slice %57 {offsets = [0, 128], sizes = [8, 128], strides = [1, 1]} : vector<8x256xf32> to vector<8x128xf32>
    %70 = arith.mulf %69, %44 : vector<8x128xf32>
    %71 = arith.addf %68, %70 : vector<8x128xf32>
    %c3_26 = arith.constant 3 : index
    %c0_27 = arith.constant 0 : index
    %c0_28 = arith.constant 0 : index
    %72 = vector.load %arg10[%c3_26, %c0_27, %c0_28] : memref<5x8x128xf32, #tpu.memory_space<vmem>>, vector<1x8x128xf32>
    %73 = vector.shape_cast %72 : vector<1x8x128xf32> to vector<8x128xf32>
    %74 = vector.shape_cast %71 : vector<8x128xf32> to vector<1x8x128xf32>
    tpu.vector_store %arg10[%c3_26, %c0_27, %c0_28], %74 {strides = array<i32>} : memref<5x8x128xf32, #tpu.memory_space<vmem>>, vector<1x8x128xf32>,
    %c2 = arith.constant 2 : index
    %c0_29 = arith.constant 0 : index
    %c0_30 = arith.constant 0 : index
    %75 = vector.load %arg8[%c2, %c0_29, %c0_30] : memref<5x8x128xf32, #tpu.memory_space<vmem>>, vector<1x8x128xf32>
    %76 = vector.shape_cast %75 : vector<1x8x128xf32> to vector<8x128xf32>
    %77 = arith.mulf %71, %76 : vector<8x128xf32>
    %c2_31 = arith.constant 2 : index
    %c0_32 = arith.constant 0 : index
    %c0_33 = arith.constant 0 : index
    %78 = vector.load %arg2[%c2_31, %c0_32, %c0_33] : memref<5x8x384xbf16, #tpu.memory_space<vmem>>, vector<1x8x384xbf16>
    %79 = vector.shape_cast %78 : vector<1x8x384xbf16> to vector<8x384xbf16>
    %80 = arith.extf %79 : vector<8x384xbf16> to vector<8x384xf32>
    %81 = arith.truncf %77 : vector<8x128xf32> to vector<8x128xbf16>
    %cst_34 = arith.constant dense<0.000000e+00> : vector<8x384xf32>
    %82 = tpu.matmul %81, %1, %cst_34 {dimension_numbers = #tpu.dot_dimension_numbers<[1], [0], [0], [1], [0, 0, 1, 1], [], []>} : vector<8x128xbf16>, vector<128x384xbf16>, vector<8x384xf32> -> vector<8x384xf32>
    %83 = vector.extract_strided_slice %80 {offsets = [0, 0], sizes = [8, 256], strides = [1, 1]} : vector<8x384xf32> to vector<8x256xf32>
    %84 = vector.extract_strided_slice %82 {offsets = [0, 0], sizes = [8, 256], strides = [1, 1]} : vector<8x384xf32> to vector<8x256xf32>
    %85 = arith.addf %83, %84 : vector<8x256xf32>
    %86 = arith.negf %85 : vector<8x256xf32>
    %87 = math.exp %86 : vector<8x256xf32>
    %cst_35 = arith.constant 1.000000e+00 : f32
    %88 = vector.broadcast %cst_35 : f32 to vector<8x256xf32>
    %89 = arith.addf %88, %87 : vector<8x256xf32>
    %90 = arith.divf %88, %89 : vector<8x256xf32>
    %91 = vector.extract_strided_slice %80 {offsets = [0, 256], sizes = [8, 128], strides = [1, 1]} : vector<8x384xf32> to vector<8x128xf32>
    %92 = vector.extract_strided_slice %90 {offsets = [0, 0], sizes = [8, 128], strides = [1, 1]} : vector<8x256xf32> to vector<8x128xf32>
    %93 = vector.extract_strided_slice %82 {offsets = [0, 256], sizes = [8, 128], strides = [1, 1]} : vector<8x384xf32> to vector<8x128xf32>
    %94 = arith.addf %93, %7 : vector<8x128xf32>
    %95 = arith.mulf %92, %94 : vector<8x128xf32>
    %96 = arith.addf %91, %95 : vector<8x128xf32>
    %97 = math.tanh %96 : vector<8x128xf32>
    %98 = vector.extract_strided_slice %90 {offsets = [0, 128], sizes = [8, 128], strides = [1, 1]} : vector<8x256xf32> to vector<8x128xf32>
    %cst_36 = arith.constant 1.000000e+00 : f32
    %99 = vector.broadcast %cst_36 : f32 to vector<8x128xf32>
    %100 = arith.subf %99, %98 : vector<8x128xf32>
    %101 = arith.mulf %100, %97 : vector<8x128xf32>
    %102 = vector.extract_strided_slice %90 {offsets = [0, 128], sizes = [8, 128], strides = [1, 1]} : vector<8x256xf32> to vector<8x128xf32>
    %103 = arith.mulf %102, %77 : vector<8x128xf32>
    %104 = arith.addf %101, %103 : vector<8x128xf32>
    %c2_37 = arith.constant 2 : index
    %c0_38 = arith.constant 0 : index
    %c0_39 = arith.constant 0 : index
    %105 = vector.load %arg10[%c2_37, %c0_38, %c0_39] : memref<5x8x128xf32, #tpu.memory_space<vmem>>, vector<1x8x128xf32>
    %106 = vector.shape_cast %105 : vector<1x8x128xf32> to vector<8x128xf32>
    %107 = vector.shape_cast %104 : vector<8x128xf32> to vector<1x8x128xf32>
    tpu.vector_store %arg10[%c2_37, %c0_38, %c0_39], %107 {strides = array<i32>} : memref<5x8x128xf32, #tpu.memory_space<vmem>>, vector<1x8x128xf32>,
    %c1 = arith.constant 1 : index
    %c0_40 = arith.constant 0 : index
    %c0_41 = arith.constant 0 : index
    %108 = vector.load %arg8[%c1, %c0_40, %c0_41] : memref<5x8x128xf32, #tpu.memory_space<vmem>>, vector<1x8x128xf32>
    %109 = vector.shape_cast %108 : vector<1x8x128xf32> to vector<8x128xf32>
    %110 = arith.mulf %104, %109 : vector<8x128xf32>
    %c1_42 = arith.constant 1 : index
    %c0_43 = arith.constant 0 : index
    %c0_44 = arith.constant 0 : index
    %111 = vector.load %arg2[%c1_42, %c0_43, %c0_44] : memref<5x8x384xbf16, #tpu.memory_space<vmem>>, vector<1x8x384xbf16>
    %112 = vector.shape_cast %111 : vector<1x8x384xbf16> to vector<8x384xbf16>
    %113 = arith.extf %112 : vector<8x384xbf16> to vector<8x384xf32>
    %114 = arith.truncf %110 : vector<8x128xf32> to vector<8x128xbf16>
    %cst_45 = arith.constant dense<0.000000e+00> : vector<8x384xf32>
    %115 = tpu.matmul %114, %1, %cst_45 {dimension_numbers = #tpu.dot_dimension_numbers<[1], [0], [0], [1], [0, 0, 1, 1], [], []>} : vector<8x128xbf16>, vector<128x384xbf16>, vector<8x384xf32> -> vector<8x384xf32>
    %116 = vector.extract_strided_slice %113 {offsets = [0, 0], sizes = [8, 256], strides = [1, 1]} : vector<8x384xf32> to vector<8x256xf32>
    %117 = vector.extract_strided_slice %115 {offsets = [0, 0], sizes = [8, 256], strides = [1, 1]} : vector<8x384xf32> to vector<8x256xf32>
    %118 = arith.addf %116, %117 : vector<8x256xf32>
    %119 = arith.negf %118 : vector<8x256xf32>
    %120 = math.exp %119 : vector<8x256xf32>
    %cst_46 = arith.constant 1.000000e+00 : f32
    %121 = vector.broadcast %cst_46 : f32 to vector<8x256xf32>
    %122 = arith.addf %121, %120 : vector<8x256xf32>
    %123 = arith.divf %121, %122 : vector<8x256xf32>
    %124 = vector.extract_strided_slice %113 {offsets = [0, 256], sizes = [8, 128], strides = [1, 1]} : vector<8x384xf32> to vector<8x128xf32>
    %125 = vector.extract_strided_slice %123 {offsets = [0, 0], sizes = [8, 128], strides = [1, 1]} : vector<8x256xf32> to vector<8x128xf32>
    %126 = vector.extract_strided_slice %115 {offsets = [0, 256], sizes = [8, 128], strides = [1, 1]} : vector<8x384xf32> to vector<8x128xf32>
    %127 = arith.addf %126, %7 : vector<8x128xf32>
    %128 = arith.mulf %125, %127 : vector<8x128xf32>
    %129 = arith.addf %124, %128 : vector<8x128xf32>
    %130 = math.tanh %129 : vector<8x128xf32>
    %131 = vector.extract_strided_slice %123 {offsets = [0, 128], sizes = [8, 128], strides = [1, 1]} : vector<8x256xf32> to vector<8x128xf32>
    %cst_47 = arith.constant 1.000000e+00 : f32
    %132 = vector.broadcast %cst_47 : f32 to vector<8x128xf32>
    %133 = arith.subf %132, %131 : vector<8x128xf32>
    %134 = arith.mulf %133, %130 : vector<8x128xf32>
    %135 = vector.extract_strided_slice %123 {offsets = [0, 128], sizes = [8, 128], strides = [1, 1]} : vector<8x256xf32> to vector<8x128xf32>
    %136 = arith.mulf %135, %110 : vector<8x128xf32>
    %137 = arith.addf %134, %136 : vector<8x128xf32>
    %c1_48 = arith.constant 1 : index
    %c0_49 = arith.constant 0 : index
    %c0_50 = arith.constant 0 : index
    %138 = vector.load %arg10[%c1_48, %c0_49, %c0_50] : memref<5x8x128xf32, #tpu.memory_space<vmem>>, vector<1x8x128xf32>
    %139 = vector.shape_cast %138 : vector<1x8x128xf32> to vector<8x128xf32>
    %140 = vector.shape_cast %137 : vector<8x128xf32> to vector<1x8x128xf32>
    tpu.vector_store %arg10[%c1_48, %c0_49, %c0_50], %140 {strides = array<i32>} : memref<5x8x128xf32, #tpu.memory_space<vmem>>, vector<1x8x128xf32>,
    %c0_51 = arith.constant 0 : index
    %c0_52 = arith.constant 0 : index
    %c0_53 = arith.constant 0 : index
    %141 = vector.load %arg8[%c0_51, %c0_52, %c0_53] : memref<5x8x128xf32, #tpu.memory_space<vmem>>, vector<1x8x128xf32>
    %142 = vector.shape_cast %141 : vector<1x8x128xf32> to vector<8x128xf32>
    %143 = arith.mulf %137, %142 : vector<8x128xf32>
    %c0_54 = arith.constant 0 : index
    %c0_55 = arith.constant 0 : index
    %c0_56 = arith.constant 0 : index
    %144 = vector.load %arg2[%c0_54, %c0_55, %c0_56] : memref<5x8x384xbf16, #tpu.memory_space<vmem>>, vector<1x8x384xbf16>
    %145 = vector.shape_cast %144 : vector<1x8x384xbf16> to vector<8x384xbf16>
    %146 = arith.extf %145 : vector<8x384xbf16> to vector<8x384xf32>
    %147 = arith.truncf %143 : vector<8x128xf32> to vector<8x128xbf16>
    %cst_57 = arith.constant dense<0.000000e+00> : vector<8x384xf32>
    %148 = tpu.matmul %147, %1, %cst_57 {dimension_numbers = #tpu.dot_dimension_numbers<[1], [0], [0], [1], [0, 0, 1, 1], [], []>} : vector<8x128xbf16>, vector<128x384xbf16>, vector<8x384xf32> -> vector<8x384xf32>
    %149 = vector.extract_strided_slice %146 {offsets = [0, 0], sizes = [8, 256], strides = [1, 1]} : vector<8x384xf32> to vector<8x256xf32>
    %150 = vector.extract_strided_slice %148 {offsets = [0, 0], sizes = [8, 256], strides = [1, 1]} : vector<8x384xf32> to vector<8x256xf32>
    %151 = arith.addf %149, %150 : vector<8x256xf32>
    %152 = arith.negf %151 : vector<8x256xf32>
    %153 = math.exp %152 : vector<8x256xf32>
    %cst_58 = arith.constant 1.000000e+00 : f32
    %154 = vector.broadcast %cst_58 : f32 to vector<8x256xf32>
    %155 = arith.addf %154, %153 : vector<8x256xf32>
    %156 = arith.divf %154, %155 : vector<8x256xf32>
    %157 = vector.extract_strided_slice %146 {offsets = [0, 256], sizes = [8, 128], strides = [1, 1]} : vector<8x384xf32> to vector<8x128xf32>
    %158 = vector.extract_strided_slice %156 {offsets = [0, 0], sizes = [8, 128], strides = [1, 1]} : vector<8x256xf32> to vector<8x128xf32>
    %159 = vector.extract_strided_slice %148 {offsets = [0, 256], sizes = [8, 128], strides = [1, 1]} : vector<8x384xf32> to vector<8x128xf32>
    %160 = arith.addf %159, %7 : vector<8x128xf32>
    %161 = arith.mulf %158, %160 : vector<8x128xf32>
    %162 = arith.addf %157, %161 : vector<8x128xf32>
    %163 = math.tanh %162 : vector<8x128xf32>
    %164 = vector.extract_strided_slice %156 {offsets = [0, 128], sizes = [8, 128], strides = [1, 1]} : vector<8x256xf32> to vector<8x128xf32>
    %cst_59 = arith.constant 1.000000e+00 : f32
    %165 = vector.broadcast %cst_59 : f32 to vector<8x128xf32>
    %166 = arith.subf %165, %164 : vector<8x128xf32>
    %167 = arith.mulf %166, %163 : vector<8x128xf32>
    %168 = vector.extract_strided_slice %156 {offsets = [0, 128], sizes = [8, 128], strides = [1, 1]} : vector<8x256xf32> to vector<8x128xf32>
    %169 = arith.mulf %168, %143 : vector<8x128xf32>
    %170 = arith.addf %167, %169 : vector<8x128xf32>
    %c0_60 = arith.constant 0 : index
    %c0_61 = arith.constant 0 : index
    %c0_62 = arith.constant 0 : index
    %171 = vector.load %arg10[%c0_60, %c0_61, %c0_62] : memref<5x8x128xf32, #tpu.memory_space<vmem>>, vector<1x8x128xf32>
    %172 = vector.shape_cast %171 : vector<1x8x128xf32> to vector<8x128xf32>
    %173 = vector.shape_cast %170 : vector<8x128xf32> to vector<1x8x128xf32>
    tpu.vector_store %arg10[%c0_60, %c0_61, %c0_62], %173 {strides = array<i32>} : memref<5x8x128xf32, #tpu.memory_space<vmem>>, vector<1x8x128xf32>,
    %cst_63 = arith.constant 0.000000e+00 : f32
    %174 = vector.broadcast %cst_63 : f32 to vector<8x128xf32>
    %c0_64 = arith.constant 0 : index
    %c0_65 = arith.constant 0 : index
    %c0_66 = arith.constant 0 : index
    %175 = vector.load %arg7[%c0_64, %c0_65, %c0_66] : memref<5x8x128xf32, #tpu.memory_space<vmem>>, vector<1x8x128xf32>
    %176 = vector.shape_cast %175 : vector<1x8x128xf32> to vector<8x128xf32>
    %177 = arith.mulf %174, %176 : vector<8x128xf32>
    %c0_67 = arith.constant 0 : index
    %c0_68 = arith.constant 0 : index
    %c0_69 = arith.constant 0 : index
    %178 = vector.load %arg1[%c0_67, %c0_68, %c0_69] : memref<5x8x384xbf16, #tpu.memory_space<vmem>>, vector<1x8x384xbf16>
    %179 = vector.shape_cast %178 : vector<1x8x384xbf16> to vector<8x384xbf16>
    %180 = arith.extf %179 : vector<8x384xbf16> to vector<8x384xf32>
    %181 = arith.truncf %177 : vector<8x128xf32> to vector<8x128xbf16>
    %cst_70 = arith.constant dense<0.000000e+00> : vector<8x384xf32>
    %182 = tpu.matmul %181, %0, %cst_70 {dimension_numbers = #tpu.dot_dimension_numbers<[1], [0], [0], [1], [0, 0, 1, 1], [], []>} : vector<8x128xbf16>, vector<128x384xbf16>, vector<8x384xf32> -> vector<8x384xf32>
    %183 = vector.extract_strided_slice %180 {offsets = [0, 0], sizes = [8, 256], strides = [1, 1]} : vector<8x384xf32> to vector<8x256xf32>
    %184 = vector.extract_strided_slice %182 {offsets = [0, 0], sizes = [8, 256], strides = [1, 1]} : vector<8x384xf32> to vector<8x256xf32>
    %185 = arith.addf %183, %184 : vector<8x256xf32>
    %186 = arith.negf %185 : vector<8x256xf32>
    %187 = math.exp %186 : vector<8x256xf32>
    %cst_71 = arith.constant 1.000000e+00 : f32
    %188 = vector.broadcast %cst_71 : f32 to vector<8x256xf32>
    %189 = arith.addf %188, %187 : vector<8x256xf32>
    %190 = arith.divf %188, %189 : vector<8x256xf32>
    %191 = vector.extract_strided_slice %180 {offsets = [0, 256], sizes = [8, 128], strides = [1, 1]} : vector<8x384xf32> to vector<8x128xf32>
    %192 = vector.extract_strided_slice %190 {offsets = [0, 0], sizes = [8, 128], strides = [1, 1]} : vector<8x256xf32> to vector<8x128xf32>
    %193 = vector.extract_strided_slice %182 {offsets = [0, 256], sizes = [8, 128], strides = [1, 1]} : vector<8x384xf32> to vector<8x128xf32>
    %194 = arith.addf %193, %4 : vector<8x128xf32>
    %195 = arith.mulf %192, %194 : vector<8x128xf32>
    %196 = arith.addf %191, %195 : vector<8x128xf32>
    %197 = math.tanh %196 : vector<8x128xf32>
    %198 = vector.extract_strided_slice %190 {offsets = [0, 128], sizes = [8, 128], strides = [1, 1]} : vector<8x256xf32> to vector<8x128xf32>
    %cst_72 = arith.constant 1.000000e+00 : f32
    %199 = vector.broadcast %cst_72 : f32 to vector<8x128xf32>
    %200 = arith.subf %199, %198 : vector<8x128xf32>
    %201 = arith.mulf %200, %197 : vector<8x128xf32>
    %202 = vector.extract_strided_slice %190 {offsets = [0, 128], sizes = [8, 128], strides = [1, 1]} : vector<8x256xf32> to vector<8x128xf32>
    %203 = arith.mulf %202, %177 : vector<8x128xf32>
    %204 = arith.addf %201, %203 : vector<8x128xf32>
    %c0_73 = arith.constant 0 : index
    %c0_74 = arith.constant 0 : index
    %c0_75 = arith.constant 0 : index
    %205 = vector.load %arg10[%c0_73, %c0_74, %c0_75] : memref<5x8x128xf32, #tpu.memory_space<vmem>>, vector<1x8x128xf32>
    %206 = vector.shape_cast %205 : vector<1x8x128xf32> to vector<8x128xf32>
    %207 = tpu.concatenate %204, %206 in 1 : vector<8x128xf32>, vector<8x128xf32> -> vector<8x256xf32>
    %c0_76 = arith.constant 0 : index
    %c0_77 = arith.constant 0 : index
    %c0_78 = arith.constant 0 : index
    %208 = vector.load %arg9[%c0_76, %c0_77, %c0_78] : memref<5x8x256xf32, #tpu.memory_space<vmem>>, vector<1x8x256xf32>
    %209 = vector.shape_cast %208 : vector<1x8x256xf32> to vector<8x256xf32>
    %210 = vector.shape_cast %207 : vector<8x256xf32> to vector<1x8x256xf32>
    tpu.vector_store %arg9[%c0_76, %c0_77, %c0_78], %210 {strides = array<i32>} : memref<5x8x256xf32, #tpu.memory_space<vmem>>, vector<1x8x256xf32>,
    %c1_79 = arith.constant 1 : index
    %c0_80 = arith.constant 0 : index
    %c0_81 = arith.constant 0 : index
    %211 = vector.load %arg7[%c1_79, %c0_80, %c0_81] : memref<5x8x128xf32, #tpu.memory_space<vmem>>, vector<1x8x128xf32>
    %212 = vector.shape_cast %211 : vector<1x8x128xf32> to vector<8x128xf32>
    %213 = arith.mulf %204, %212 : vector<8x128xf32>
    %c1_82 = arith.constant 1 : index
    %c0_83 = arith.constant 0 : index
    %c0_84 = arith.constant 0 : index
    %214 = vector.load %arg1[%c1_82, %c0_83, %c0_84] : memref<5x8x384xbf16, #tpu.memory_space<vmem>>, vector<1x8x384xbf16>
    %215 = vector.shape_cast %214 : vector<1x8x384xbf16> to vector<8x384xbf16>
    %216 = arith.extf %215 : vector<8x384xbf16> to vector<8x384xf32>
    %217 = arith.truncf %213 : vector<8x128xf32> to vector<8x128xbf16>
    %cst_85 = arith.constant dense<0.000000e+00> : vector<8x384xf32>
    %218 = tpu.matmul %217, %0, %cst_85 {dimension_numbers = #tpu.dot_dimension_numbers<[1], [0], [0], [1], [0, 0, 1, 1], [], []>} : vector<8x128xbf16>, vector<128x384xbf16>, vector<8x384xf32> -> vector<8x384xf32>
    %219 = vector.extract_strided_slice %216 {offsets = [0, 0], sizes = [8, 256], strides = [1, 1]} : vector<8x384xf32> to vector<8x256xf32>
    %220 = vector.extract_strided_slice %218 {offsets = [0, 0], sizes = [8, 256], strides = [1, 1]} : vector<8x384xf32> to vector<8x256xf32>
    %221 = arith.addf %219, %220 : vector<8x256xf32>
    %222 = arith.negf %221 : vector<8x256xf32>
    %223 = math.exp %222 : vector<8x256xf32>
    %cst_86 = arith.constant 1.000000e+00 : f32
    %224 = vector.broadcast %cst_86 : f32 to vector<8x256xf32>
    %225 = arith.addf %224, %223 : vector<8x256xf32>
    %226 = arith.divf %224, %225 : vector<8x256xf32>
    %227 = vector.extract_strided_slice %216 {offsets = [0, 256], sizes = [8, 128], strides = [1, 1]} : vector<8x384xf32> to vector<8x128xf32>
    %228 = vector.extract_strided_slice %226 {offsets = [0, 0], sizes = [8, 128], strides = [1, 1]} : vector<8x256xf32> to vector<8x128xf32>
    %229 = vector.extract_strided_slice %218 {offsets = [0, 256], sizes = [8, 128], strides = [1, 1]} : vector<8x384xf32> to vector<8x128xf32>
    %230 = arith.addf %229, %4 : vector<8x128xf32>
    %231 = arith.mulf %228, %230 : vector<8x128xf32>
    %232 = arith.addf %227, %231 : vector<8x128xf32>
    %233 = math.tanh %232 : vector<8x128xf32>
    %234 = vector.extract_strided_slice %226 {offsets = [0, 128], sizes = [8, 128], strides = [1, 1]} : vector<8x256xf32> to vector<8x128xf32>
    %cst_87 = arith.constant 1.000000e+00 : f32
    %235 = vector.broadcast %cst_87 : f32 to vector<8x128xf32>
    %236 = arith.subf %235, %234 : vector<8x128xf32>
    %237 = arith.mulf %236, %233 : vector<8x128xf32>
    %238 = vector.extract_strided_slice %226 {offsets = [0, 128], sizes = [8, 128], strides = [1, 1]} : vector<8x256xf32> to vector<8x128xf32>
    %239 = arith.mulf %238, %213 : vector<8x128xf32>
    %240 = arith.addf %237, %239 : vector<8x128xf32>
    %c1_88 = arith.constant 1 : index
    %c0_89 = arith.constant 0 : index
    %c0_90 = arith.constant 0 : index
    %241 = vector.load %arg10[%c1_88, %c0_89, %c0_90] : memref<5x8x128xf32, #tpu.memory_space<vmem>>, vector<1x8x128xf32>
    %242 = vector.shape_cast %241 : vector<1x8x128xf32> to vector<8x128xf32>
    %243 = tpu.concatenate %240, %242 in 1 : vector<8x128xf32>, vector<8x128xf32> -> vector<8x256xf32>
    %c1_91 = arith.constant 1 : index
    %c0_92 = arith.constant 0 : index
    %c0_93 = arith.constant 0 : index
    %244 = vector.load %arg9[%c1_91, %c0_92, %c0_93] : memref<5x8x256xf32, #tpu.memory_space<vmem>>, vector<1x8x256xf32>
    %245 = vector.shape_cast %244 : vector<1x8x256xf32> to vector<8x256xf32>
    %246 = vector.shape_cast %243 : vector<8x256xf32> to vector<1x8x256xf32>
    tpu.vector_store %arg9[%c1_91, %c0_92, %c0_93], %246 {strides = array<i32>} : memref<5x8x256xf32, #tpu.memory_space<vmem>>, vector<1x8x256xf32>,
    %c2_94 = arith.constant 2 : index
    %c0_95 = arith.constant 0 : index
    %c0_96 = arith.constant 0 : index
    %247 = vector.load %arg7[%c2_94, %c0_95, %c0_96] : memref<5x8x128xf32, #tpu.memory_space<vmem>>, vector<1x8x128xf32>
    %248 = vector.shape_cast %247 : vector<1x8x128xf32> to vector<8x128xf32>
    %249 = arith.mulf %240, %248 : vector<8x128xf32>
    %c2_97 = arith.constant 2 : index
    %c0_98 = arith.constant 0 : index
    %c0_99 = arith.constant 0 : index
    %250 = vector.load %arg1[%c2_97, %c0_98, %c0_99] : memref<5x8x384xbf16, #tpu.memory_space<vmem>>, vector<1x8x384xbf16>
    %251 = vector.shape_cast %250 : vector<1x8x384xbf16> to vector<8x384xbf16>
    %252 = arith.extf %251 : vector<8x384xbf16> to vector<8x384xf32>
    %253 = arith.truncf %249 : vector<8x128xf32> to vector<8x128xbf16>
    %cst_100 = arith.constant dense<0.000000e+00> : vector<8x384xf32>
    %254 = tpu.matmul %253, %0, %cst_100 {dimension_numbers = #tpu.dot_dimension_numbers<[1], [0], [0], [1], [0, 0, 1, 1], [], []>} : vector<8x128xbf16>, vector<128x384xbf16>, vector<8x384xf32> -> vector<8x384xf32>
    %255 = vector.extract_strided_slice %252 {offsets = [0, 0], sizes = [8, 256], strides = [1, 1]} : vector<8x384xf32> to vector<8x256xf32>
    %256 = vector.extract_strided_slice %254 {offsets = [0, 0], sizes = [8, 256], strides = [1, 1]} : vector<8x384xf32> to vector<8x256xf32>
    %257 = arith.addf %255, %256 : vector<8x256xf32>
    %258 = arith.negf %257 : vector<8x256xf32>
    %259 = math.exp %258 : vector<8x256xf32>
    %cst_101 = arith.constant 1.000000e+00 : f32
    %260 = vector.broadcast %cst_101 : f32 to vector<8x256xf32>
    %261 = arith.addf %260, %259 : vector<8x256xf32>
    %262 = arith.divf %260, %261 : vector<8x256xf32>
    %263 = vector.extract_strided_slice %252 {offsets = [0, 256], sizes = [8, 128], strides = [1, 1]} : vector<8x384xf32> to vector<8x128xf32>
    %264 = vector.extract_strided_slice %262 {offsets = [0, 0], sizes = [8, 128], strides = [1, 1]} : vector<8x256xf32> to vector<8x128xf32>
    %265 = vector.extract_strided_slice %254 {offsets = [0, 256], sizes = [8, 128], strides = [1, 1]} : vector<8x384xf32> to vector<8x128xf32>
    %266 = arith.addf %265, %4 : vector<8x128xf32>
    %267 = arith.mulf %264, %266 : vector<8x128xf32>
    %268 = arith.addf %263, %267 : vector<8x128xf32>
    %269 = math.tanh %268 : vector<8x128xf32>
    %270 = vector.extract_strided_slice %262 {offsets = [0, 128], sizes = [8, 128], strides = [1, 1]} : vector<8x256xf32> to vector<8x128xf32>
    %cst_102 = arith.constant 1.000000e+00 : f32
    %271 = vector.broadcast %cst_102 : f32 to vector<8x128xf32>
    %272 = arith.subf %271, %270 : vector<8x128xf32>
    %273 = arith.mulf %272, %269 : vector<8x128xf32>
    %274 = vector.extract_strided_slice %262 {offsets = [0, 128], sizes = [8, 128], strides = [1, 1]} : vector<8x256xf32> to vector<8x128xf32>
    %275 = arith.mulf %274, %249 : vector<8x128xf32>
    %276 = arith.addf %273, %275 : vector<8x128xf32>
    %c2_103 = arith.constant 2 : index
    %c0_104 = arith.constant 0 : index
    %c0_105 = arith.constant 0 : index
    %277 = vector.load %arg10[%c2_103, %c0_104, %c0_105] : memref<5x8x128xf32, #tpu.memory_space<vmem>>, vector<1x8x128xf32>
    %278 = vector.shape_cast %277 : vector<1x8x128xf32> to vector<8x128xf32>
    %279 = tpu.concatenate %276, %278 in 1 : vector<8x128xf32>, vector<8x128xf32> -> vector<8x256xf32>
    %c2_106 = arith.constant 2 : index
    %c0_107 = arith.constant 0 : index
    %c0_108 = arith.constant 0 : index
    %280 = vector.load %arg9[%c2_106, %c0_107, %c0_108] : memref<5x8x256xf32, #tpu.memory_space<vmem>>, vector<1x8x256xf32>
    %281 = vector.shape_cast %280 : vector<1x8x256xf32> to vector<8x256xf32>
    %282 = vector.shape_cast %279 : vector<8x256xf32> to vector<1x8x256xf32>
    tpu.vector_store %arg9[%c2_106, %c0_107, %c0_108], %282 {strides = array<i32>} : memref<5x8x256xf32, #tpu.memory_space<vmem>>, vector<1x8x256xf32>,
    %c3_109 = arith.constant 3 : index
    %c0_110 = arith.constant 0 : index
    %c0_111 = arith.constant 0 : index
    %283 = vector.load %arg7[%c3_109, %c0_110, %c0_111] : memref<5x8x128xf32, #tpu.memory_space<vmem>>, vector<1x8x128xf32>
    %284 = vector.shape_cast %283 : vector<1x8x128xf32> to vector<8x128xf32>
    %285 = arith.mulf %276, %284 : vector<8x128xf32>
    %c3_112 = arith.constant 3 : index
    %c0_113 = arith.constant 0 : index
    %c0_114 = arith.constant 0 : index
    %286 = vector.load %arg1[%c3_112, %c0_113, %c0_114] : memref<5x8x384xbf16, #tpu.memory_space<vmem>>, vector<1x8x384xbf16>
    %287 = vector.shape_cast %286 : vector<1x8x384xbf16> to vector<8x384xbf16>
    %288 = arith.extf %287 : vector<8x384xbf16> to vector<8x384xf32>
    %289 = arith.truncf %285 : vector<8x128xf32> to vector<8x128xbf16>
    %cst_115 = arith.constant dense<0.000000e+00> : vector<8x384xf32>
    %290 = tpu.matmul %289, %0, %cst_115 {dimension_numbers = #tpu.dot_dimension_numbers<[1], [0], [0], [1], [0, 0, 1, 1], [], []>} : vector<8x128xbf16>, vector<128x384xbf16>, vector<8x384xf32> -> vector<8x384xf32>
    %291 = vector.extract_strided_slice %288 {offsets = [0, 0], sizes = [8, 256], strides = [1, 1]} : vector<8x384xf32> to vector<8x256xf32>
    %292 = vector.extract_strided_slice %290 {offsets = [0, 0], sizes = [8, 256], strides = [1, 1]} : vector<8x384xf32> to vector<8x256xf32>
    %293 = arith.addf %291, %292 : vector<8x256xf32>
    %294 = arith.negf %293 : vector<8x256xf32>
    %295 = math.exp %294 : vector<8x256xf32>
    %cst_116 = arith.constant 1.000000e+00 : f32
    %296 = vector.broadcast %cst_116 : f32 to vector<8x256xf32>
    %297 = arith.addf %296, %295 : vector<8x256xf32>
    %298 = arith.divf %296, %297 : vector<8x256xf32>
    %299 = vector.extract_strided_slice %288 {offsets = [0, 256], sizes = [8, 128], strides = [1, 1]} : vector<8x384xf32> to vector<8x128xf32>
    %300 = vector.extract_strided_slice %298 {offsets = [0, 0], sizes = [8, 128], strides = [1, 1]} : vector<8x256xf32> to vector<8x128xf32>
    %301 = vector.extract_strided_slice %290 {offsets = [0, 256], sizes = [8, 128], strides = [1, 1]} : vector<8x384xf32> to vector<8x128xf32>
    %302 = arith.addf %301, %4 : vector<8x128xf32>
    %303 = arith.mulf %300, %302 : vector<8x128xf32>
    %304 = arith.addf %299, %303 : vector<8x128xf32>
    %305 = math.tanh %304 : vector<8x128xf32>
    %306 = vector.extract_strided_slice %298 {offsets = [0, 128], sizes = [8, 128], strides = [1, 1]} : vector<8x256xf32> to vector<8x128xf32>
    %cst_117 = arith.constant 1.000000e+00 : f32
    %307 = vector.broadcast %cst_117 : f32 to vector<8x128xf32>
    %308 = arith.subf %307, %306 : vector<8x128xf32>
    %309 = arith.mulf %308, %305 : vector<8x128xf32>
    %310 = vector.extract_strided_slice %298 {offsets = [0, 128], sizes = [8, 128], strides = [1, 1]} : vector<8x256xf32> to vector<8x128xf32>
    %311 = arith.mulf %310, %285 : vector<8x128xf32>
    %312 = arith.addf %309, %311 : vector<8x128xf32>
    %c3_118 = arith.constant 3 : index
    %c0_119 = arith.constant 0 : index
    %c0_120 = arith.constant 0 : index
    %313 = vector.load %arg10[%c3_118, %c0_119, %c0_120] : memref<5x8x128xf32, #tpu.memory_space<vmem>>, vector<1x8x128xf32>
    %314 = vector.shape_cast %313 : vector<1x8x128xf32> to vector<8x128xf32>
    %315 = tpu.concatenate %312, %314 in 1 : vector<8x128xf32>, vector<8x128xf32> -> vector<8x256xf32>
    %c3_121 = arith.constant 3 : index
    %c0_122 = arith.constant 0 : index
    %c0_123 = arith.constant 0 : index
    %316 = vector.load %arg9[%c3_121, %c0_122, %c0_123] : memref<5x8x256xf32, #tpu.memory_space<vmem>>, vector<1x8x256xf32>
    %317 = vector.shape_cast %316 : vector<1x8x256xf32> to vector<8x256xf32>
    %318 = vector.shape_cast %315 : vector<8x256xf32> to vector<1x8x256xf32>
    tpu.vector_store %arg9[%c3_121, %c0_122, %c0_123], %318 {strides = array<i32>} : memref<5x8x256xf32, #tpu.memory_space<vmem>>, vector<1x8x256xf32>,
    %c4_124 = arith.constant 4 : index
    %c0_125 = arith.constant 0 : index
    %c0_126 = arith.constant 0 : index
    %319 = vector.load %arg7[%c4_124, %c0_125, %c0_126] : memref<5x8x128xf32, #tpu.memory_space<vmem>>, vector<1x8x128xf32>
    %320 = vector.shape_cast %319 : vector<1x8x128xf32> to vector<8x128xf32>
    %321 = arith.mulf %312, %320 : vector<8x128xf32>
    %c4_127 = arith.constant 4 : index
    %c0_128 = arith.constant 0 : index
    %c0_129 = arith.constant 0 : index
    %322 = vector.load %arg1[%c4_127, %c0_128, %c0_129] : memref<5x8x384xbf16, #tpu.memory_space<vmem>>, vector<1x8x384xbf16>
    %323 = vector.shape_cast %322 : vector<1x8x384xbf16> to vector<8x384xbf16>
    %324 = arith.extf %323 : vector<8x384xbf16> to vector<8x384xf32>
    %325 = arith.truncf %321 : vector<8x128xf32> to vector<8x128xbf16>
    %cst_130 = arith.constant dense<0.000000e+00> : vector<8x384xf32>
    %326 = tpu.matmul %325, %0, %cst_130 {dimension_numbers = #tpu.dot_dimension_numbers<[1], [0], [0], [1], [0, 0, 1, 1], [], []>} : vector<8x128xbf16>, vector<128x384xbf16>, vector<8x384xf32> -> vector<8x384xf32>
    %327 = vector.extract_strided_slice %324 {offsets = [0, 0], sizes = [8, 256], strides = [1, 1]} : vector<8x384xf32> to vector<8x256xf32>
    %328 = vector.extract_strided_slice %326 {offsets = [0, 0], sizes = [8, 256], strides = [1, 1]} : vector<8x384xf32> to vector<8x256xf32>
    %329 = arith.addf %327, %328 : vector<8x256xf32>
    %330 = arith.negf %329 : vector<8x256xf32>
    %331 = math.exp %330 : vector<8x256xf32>
    %cst_131 = arith.constant 1.000000e+00 : f32
    %332 = vector.broadcast %cst_131 : f32 to vector<8x256xf32>
    %333 = arith.addf %332, %331 : vector<8x256xf32>
    %334 = arith.divf %332, %333 : vector<8x256xf32>
    %335 = vector.extract_strided_slice %324 {offsets = [0, 256], sizes = [8, 128], strides = [1, 1]} : vector<8x384xf32> to vector<8x128xf32>
    %336 = vector.extract_strided_slice %334 {offsets = [0, 0], sizes = [8, 128], strides = [1, 1]} : vector<8x256xf32> to vector<8x128xf32>
    %337 = vector.extract_strided_slice %326 {offsets = [0, 256], sizes = [8, 128], strides = [1, 1]} : vector<8x384xf32> to vector<8x128xf32>
    %338 = arith.addf %337, %4 : vector<8x128xf32>
    %339 = arith.mulf %336, %338 : vector<8x128xf32>
    %340 = arith.addf %335, %339 : vector<8x128xf32>
    %341 = math.tanh %340 : vector<8x128xf32>
    %342 = vector.extract_strided_slice %334 {offsets = [0, 128], sizes = [8, 128], strides = [1, 1]} : vector<8x256xf32> to vector<8x128xf32>
    %cst_132 = arith.constant 1.000000e+00 : f32
    %343 = vector.broadcast %cst_132 : f32 to vector<8x128xf32>
    %344 = arith.subf %343, %342 : vector<8x128xf32>
    %345 = arith.mulf %344, %341 : vector<8x128xf32>
    %346 = vector.extract_strided_slice %334 {offsets = [0, 128], sizes = [8, 128], strides = [1, 1]} : vector<8x256xf32> to vector<8x128xf32>
    %347 = arith.mulf %346, %321 : vector<8x128xf32>
    %348 = arith.addf %345, %347 : vector<8x128xf32>
    %c4_133 = arith.constant 4 : index
    %c0_134 = arith.constant 0 : index
    %c0_135 = arith.constant 0 : index
    %349 = vector.load %arg10[%c4_133, %c0_134, %c0_135] : memref<5x8x128xf32, #tpu.memory_space<vmem>>, vector<1x8x128xf32>
    %350 = vector.shape_cast %349 : vector<1x8x128xf32> to vector<8x128xf32>
    %351 = tpu.concatenate %348, %350 in 1 : vector<8x128xf32>, vector<8x128xf32> -> vector<8x256xf32>
    %c4_136 = arith.constant 4 : index
    %c0_137 = arith.constant 0 : index
    %c0_138 = arith.constant 0 : index
    %352 = vector.load %arg9[%c4_136, %c0_137, %c0_138] : memref<5x8x256xf32, #tpu.memory_space<vmem>>, vector<1x8x256xf32>
    %353 = vector.shape_cast %352 : vector<1x8x256xf32> to vector<8x256xf32>
    %354 = vector.shape_cast %351 : vector<8x256xf32> to vector<1x8x256xf32>
    tpu.vector_store %arg9[%c4_136, %c0_137, %c0_138], %354 {strides = array<i32>} : memref<5x8x256xf32, #tpu.memory_space<vmem>>, vector<1x8x256xf32>,
    return
  }
  func.func @transform_0(%arg0: i32) -> (i32, i32, i32) {
    %c0_i32 = arith.constant 0 : i32
    %c0_i32_0 = arith.constant 0 : i32
    %c0_i32_1 = arith.constant 0 : i32
    return %c0_i32, %arg0, %c0_i32_0 : i32, i32, i32
  }
  func.func @transform_1(%arg0: i32) -> (i32, i32, i32) {
    %c0_i32 = arith.constant 0 : i32
    %c0_i32_0 = arith.constant 0 : i32
    %c0_i32_1 = arith.constant 0 : i32
    return %c0_i32, %arg0, %c0_i32_0 : i32, i32, i32
  }
  func.func @transform_2(%arg0: i32) -> (i32, i32) {
    %c0_i32 = arith.constant 0 : i32
    %c0_i32_0 = arith.constant 0 : i32
    %c0_i32_1 = arith.constant 0 : i32
    return %c0_i32, %c0_i32_0 : i32, i32
  }
  func.func @transform_3(%arg0: i32) -> (i32, i32) {
    %c0_i32 = arith.constant 0 : i32
    %c0_i32_0 = arith.constant 0 : i32
    %c0_i32_1 = arith.constant 0 : i32
    return %c0_i32, %c0_i32_0 : i32, i32
  }
  func.func @transform_4(%arg0: i32) -> (i32, i32) {
    %c0_i32 = arith.constant 0 : i32
    %c0_i32_0 = arith.constant 0 : i32
    %c0_i32_1 = arith.constant 0 : i32
    return %c0_i32, %c0_i32_0 : i32, i32
  }
  func.func @transform_5(%arg0: i32) -> (i32, i32) {
    %c0_i32 = arith.constant 0 : i32
    %c0_i32_0 = arith.constant 0 : i32
    %c0_i32_1 = arith.constant 0 : i32
    return %c0_i32, %c0_i32_0 : i32, i32
  }
  func.func @transform_6(%arg0: i32) -> (i32, i32, i32) {
    %c0_i32 = arith.constant 0 : i32
    %c0_i32_0 = arith.constant 0 : i32
    %c0_i32_1 = arith.constant 0 : i32
    return %c0_i32, %arg0, %c0_i32_0 : i32, i32, i32
  }
  func.func @transform_7(%arg0: i32) -> (i32, i32, i32) {
    %c0_i32 = arith.constant 0 : i32
    %c0_i32_0 = arith.constant 0 : i32
    %c0_i32_1 = arith.constant 0 : i32
    return %c0_i32, %arg0, %c0_i32_0 : i32, i32, i32
  }
  func.func @transform_8(%arg0: i32) -> (i32, i32, i32) {
    %c0_i32 = arith.constant 0 : i32
    %c0_i32_0 = arith.constant 0 : i32
    %c0_i32_1 = arith.constant 0 : i32
    return %c0_i32, %arg0, %c0_i32_0 : i32, i32, i32
  }
}

module attributes {stable_mosaic.version = 11 : i64} {
  func.func @kernel(%arg0: i32, %arg1: memref<5x8x384xbf16, #tpu.memory_space<vmem>>, %arg2: memref<5x8x384xbf16, #tpu.memory_space<vmem>>, %arg3: memref<128x384xbf16, #tpu.memory_space<vmem>>, %arg4: memref<128x384xbf16, #tpu.memory_space<vmem>>, %arg5: memref<1x128xf32, #tpu.memory_space<vmem>>, %arg6: memref<1x128xf32, #tpu.memory_space<vmem>>, %arg7: memref<5x8x256xf32, #tpu.memory_space<vmem>>, %arg8: memref<5x8x128xf32, #tpu.memory_space<vmem>>) attributes {dimension_semantics = [#tpu.dimension_semantics<parallel>], iteration_bounds = array<i64: 1>, scalar_prefetch = 0 : i64, scratch_operands = 1 : i64, tpu.core_type = #tpu.core_type<tc>, window_params = [{transform_indices = @transform_0, window_bounds = array<i64: 5, 8, 384>}, {transform_indices = @transform_1, window_bounds = array<i64: 5, 8, 384>}, {pipeline_mode = #tpu.pipeline_mode<synchronous>, transform_indices = @transform_2, window_bounds = array<i64: 128, 384>}, {pipeline_mode = #tpu.pipeline_mode<synchronous>, transform_indices = @transform_3, window_bounds = array<i64: 128, 384>}, {pipeline_mode = #tpu.pipeline_mode<synchronous>, transform_indices = @transform_4, window_bounds = array<i64: 1, 128>}, {pipeline_mode = #tpu.pipeline_mode<synchronous>, transform_indices = @transform_5, window_bounds = array<i64: 1, 128>}, {transform_indices = @transform_6, window_bounds = array<i64: 5, 8, 256>}]} {
    %c0 = arith.constant 0 : index
    %c0_0 = arith.constant 0 : index
    %0 = vector.load %arg3[%c0, %c0_0] : memref<128x384xbf16, #tpu.memory_space<vmem>>, vector<128x384xbf16>
    %c0_1 = arith.constant 0 : index
    %c0_2 = arith.constant 0 : index
    %1 = vector.load %arg4[%c0_1, %c0_2] : memref<128x384xbf16, #tpu.memory_space<vmem>>, vector<128x384xbf16>
    %c0_3 = arith.constant 0 : index
    %c0_4 = arith.constant 0 : index
    %2 = vector.load %arg5[%c0_3, %c0_4] : memref<1x128xf32, #tpu.memory_space<vmem>>, vector<1x128xf32>
    %3 = vector.shape_cast %2 : vector<1x128xf32> to vector<1x128xf32>
    %4 = vector.broadcast %3 : vector<1x128xf32> to vector<8x128xf32>
    %c0_5 = arith.constant 0 : index
    %c0_6 = arith.constant 0 : index
    %5 = vector.load %arg6[%c0_5, %c0_6] : memref<1x128xf32, #tpu.memory_space<vmem>>, vector<1x128xf32>
    %6 = vector.shape_cast %5 : vector<1x128xf32> to vector<1x128xf32>
    %7 = vector.broadcast %6 : vector<1x128xf32> to vector<8x128xf32>
    %cst = arith.constant 0.000000e+00 : f32
    %8 = vector.broadcast %cst : f32 to vector<8x128xf32>
    %c4 = arith.constant 4 : index
    %c0_7 = arith.constant 0 : index
    %c0_8 = arith.constant 0 : index
    %9 = vector.load %arg2[%c4, %c0_7, %c0_8] : memref<5x8x384xbf16, #tpu.memory_space<vmem>>, vector<1x8x384xbf16>
    %10 = vector.shape_cast %9 : vector<1x8x384xbf16> to vector<8x384xbf16>
    %11 = arith.extf %10 : vector<8x384xbf16> to vector<8x384xf32>
    %12 = arith.truncf %8 : vector<8x128xf32> to vector<8x128xbf16>
    %cst_9 = arith.constant dense<0.000000e+00> : vector<8x384xf32>
    %13 = tpu.matmul %12, %1, %cst_9 {dimension_numbers = #tpu.dot_dimension_numbers<[1], [0], [0], [1], [0, 0, 1, 1], [], []>} : vector<8x128xbf16>, vector<128x384xbf16>, vector<8x384xf32> -> vector<8x384xf32>
    %14 = vector.extract_strided_slice %11 {offsets = [0, 0], sizes = [8, 256], strides = [1, 1]} : vector<8x384xf32> to vector<8x256xf32>
    %15 = vector.extract_strided_slice %13 {offsets = [0, 0], sizes = [8, 256], strides = [1, 1]} : vector<8x384xf32> to vector<8x256xf32>
    %16 = arith.addf %14, %15 : vector<8x256xf32>
    %17 = arith.negf %16 : vector<8x256xf32>
    %18 = math.exp %17 : vector<8x256xf32>
    %cst_10 = arith.constant 1.000000e+00 : f32
    %19 = vector.broadcast %cst_10 : f32 to vector<8x256xf32>
    %20 = arith.addf %19, %18 : vector<8x256xf32>
    %21 = arith.divf %19, %20 : vector<8x256xf32>
    %22 = vector.extract_strided_slice %11 {offsets = [0, 256], sizes = [8, 128], strides = [1, 1]} : vector<8x384xf32> to vector<8x128xf32>
    %23 = vector.extract_strided_slice %21 {offsets = [0, 0], sizes = [8, 128], strides = [1, 1]} : vector<8x256xf32> to vector<8x128xf32>
    %24 = vector.extract_strided_slice %13 {offsets = [0, 256], sizes = [8, 128], strides = [1, 1]} : vector<8x384xf32> to vector<8x128xf32>
    %25 = arith.addf %24, %7 : vector<8x128xf32>
    %26 = arith.mulf %23, %25 : vector<8x128xf32>
    %27 = arith.addf %22, %26 : vector<8x128xf32>
    %28 = math.tanh %27 : vector<8x128xf32>
    %29 = vector.extract_strided_slice %21 {offsets = [0, 128], sizes = [8, 128], strides = [1, 1]} : vector<8x256xf32> to vector<8x128xf32>
    %cst_11 = arith.constant 1.000000e+00 : f32
    %30 = vector.broadcast %cst_11 : f32 to vector<8x128xf32>
    %31 = arith.subf %30, %29 : vector<8x128xf32>
    %32 = arith.mulf %31, %28 : vector<8x128xf32>
    %33 = vector.extract_strided_slice %21 {offsets = [0, 128], sizes = [8, 128], strides = [1, 1]} : vector<8x256xf32> to vector<8x128xf32>
    %34 = arith.mulf %33, %8 : vector<8x128xf32>
    %35 = arith.addf %32, %34 : vector<8x128xf32>
    %c4_12 = arith.constant 4 : index
    %c0_13 = arith.constant 0 : index
    %c0_14 = arith.constant 0 : index
    %36 = vector.load %arg8[%c4_12, %c0_13, %c0_14] : memref<5x8x128xf32, #tpu.memory_space<vmem>>, vector<1x8x128xf32>
    %37 = vector.shape_cast %36 : vector<1x8x128xf32> to vector<8x128xf32>
    %38 = vector.shape_cast %35 : vector<8x128xf32> to vector<1x8x128xf32>
    tpu.vector_store %arg8[%c4_12, %c0_13, %c0_14], %38 {strides = array<i32>} : memref<5x8x128xf32, #tpu.memory_space<vmem>>, vector<1x8x128xf32>,
    %c3 = arith.constant 3 : index
    %c0_15 = arith.constant 0 : index
    %c0_16 = arith.constant 0 : index
    %39 = vector.load %arg2[%c3, %c0_15, %c0_16] : memref<5x8x384xbf16, #tpu.memory_space<vmem>>, vector<1x8x384xbf16>
    %40 = vector.shape_cast %39 : vector<1x8x384xbf16> to vector<8x384xbf16>
    %41 = arith.extf %40 : vector<8x384xbf16> to vector<8x384xf32>
    %42 = arith.truncf %35 : vector<8x128xf32> to vector<8x128xbf16>
    %cst_17 = arith.constant dense<0.000000e+00> : vector<8x384xf32>
    %43 = tpu.matmul %42, %1, %cst_17 {dimension_numbers = #tpu.dot_dimension_numbers<[1], [0], [0], [1], [0, 0, 1, 1], [], []>} : vector<8x128xbf16>, vector<128x384xbf16>, vector<8x384xf32> -> vector<8x384xf32>
    %44 = vector.extract_strided_slice %41 {offsets = [0, 0], sizes = [8, 256], strides = [1, 1]} : vector<8x384xf32> to vector<8x256xf32>
    %45 = vector.extract_strided_slice %43 {offsets = [0, 0], sizes = [8, 256], strides = [1, 1]} : vector<8x384xf32> to vector<8x256xf32>
    %46 = arith.addf %44, %45 : vector<8x256xf32>
    %47 = arith.negf %46 : vector<8x256xf32>
    %48 = math.exp %47 : vector<8x256xf32>
    %cst_18 = arith.constant 1.000000e+00 : f32
    %49 = vector.broadcast %cst_18 : f32 to vector<8x256xf32>
    %50 = arith.addf %49, %48 : vector<8x256xf32>
    %51 = arith.divf %49, %50 : vector<8x256xf32>
    %52 = vector.extract_strided_slice %41 {offsets = [0, 256], sizes = [8, 128], strides = [1, 1]} : vector<8x384xf32> to vector<8x128xf32>
    %53 = vector.extract_strided_slice %51 {offsets = [0, 0], sizes = [8, 128], strides = [1, 1]} : vector<8x256xf32> to vector<8x128xf32>
    %54 = vector.extract_strided_slice %43 {offsets = [0, 256], sizes = [8, 128], strides = [1, 1]} : vector<8x384xf32> to vector<8x128xf32>
    %55 = arith.addf %54, %7 : vector<8x128xf32>
    %56 = arith.mulf %53, %55 : vector<8x128xf32>
    %57 = arith.addf %52, %56 : vector<8x128xf32>
    %58 = math.tanh %57 : vector<8x128xf32>
    %59 = vector.extract_strided_slice %51 {offsets = [0, 128], sizes = [8, 128], strides = [1, 1]} : vector<8x256xf32> to vector<8x128xf32>
    %cst_19 = arith.constant 1.000000e+00 : f32
    %60 = vector.broadcast %cst_19 : f32 to vector<8x128xf32>
    %61 = arith.subf %60, %59 : vector<8x128xf32>
    %62 = arith.mulf %61, %58 : vector<8x128xf32>
    %63 = vector.extract_strided_slice %51 {offsets = [0, 128], sizes = [8, 128], strides = [1, 1]} : vector<8x256xf32> to vector<8x128xf32>
    %64 = arith.mulf %63, %35 : vector<8x128xf32>
    %65 = arith.addf %62, %64 : vector<8x128xf32>
    %c3_20 = arith.constant 3 : index
    %c0_21 = arith.constant 0 : index
    %c0_22 = arith.constant 0 : index
    %66 = vector.load %arg8[%c3_20, %c0_21, %c0_22] : memref<5x8x128xf32, #tpu.memory_space<vmem>>, vector<1x8x128xf32>
    %67 = vector.shape_cast %66 : vector<1x8x128xf32> to vector<8x128xf32>
    %68 = vector.shape_cast %65 : vector<8x128xf32> to vector<1x8x128xf32>
    tpu.vector_store %arg8[%c3_20, %c0_21, %c0_22], %68 {strides = array<i32>} : memref<5x8x128xf32, #tpu.memory_space<vmem>>, vector<1x8x128xf32>,
    %c2 = arith.constant 2 : index
    %c0_23 = arith.constant 0 : index
    %c0_24 = arith.constant 0 : index
    %69 = vector.load %arg2[%c2, %c0_23, %c0_24] : memref<5x8x384xbf16, #tpu.memory_space<vmem>>, vector<1x8x384xbf16>
    %70 = vector.shape_cast %69 : vector<1x8x384xbf16> to vector<8x384xbf16>
    %71 = arith.extf %70 : vector<8x384xbf16> to vector<8x384xf32>
    %72 = arith.truncf %65 : vector<8x128xf32> to vector<8x128xbf16>
    %cst_25 = arith.constant dense<0.000000e+00> : vector<8x384xf32>
    %73 = tpu.matmul %72, %1, %cst_25 {dimension_numbers = #tpu.dot_dimension_numbers<[1], [0], [0], [1], [0, 0, 1, 1], [], []>} : vector<8x128xbf16>, vector<128x384xbf16>, vector<8x384xf32> -> vector<8x384xf32>
    %74 = vector.extract_strided_slice %71 {offsets = [0, 0], sizes = [8, 256], strides = [1, 1]} : vector<8x384xf32> to vector<8x256xf32>
    %75 = vector.extract_strided_slice %73 {offsets = [0, 0], sizes = [8, 256], strides = [1, 1]} : vector<8x384xf32> to vector<8x256xf32>
    %76 = arith.addf %74, %75 : vector<8x256xf32>
    %77 = arith.negf %76 : vector<8x256xf32>
    %78 = math.exp %77 : vector<8x256xf32>
    %cst_26 = arith.constant 1.000000e+00 : f32
    %79 = vector.broadcast %cst_26 : f32 to vector<8x256xf32>
    %80 = arith.addf %79, %78 : vector<8x256xf32>
    %81 = arith.divf %79, %80 : vector<8x256xf32>
    %82 = vector.extract_strided_slice %71 {offsets = [0, 256], sizes = [8, 128], strides = [1, 1]} : vector<8x384xf32> to vector<8x128xf32>
    %83 = vector.extract_strided_slice %81 {offsets = [0, 0], sizes = [8, 128], strides = [1, 1]} : vector<8x256xf32> to vector<8x128xf32>
    %84 = vector.extract_strided_slice %73 {offsets = [0, 256], sizes = [8, 128], strides = [1, 1]} : vector<8x384xf32> to vector<8x128xf32>
    %85 = arith.addf %84, %7 : vector<8x128xf32>
    %86 = arith.mulf %83, %85 : vector<8x128xf32>
    %87 = arith.addf %82, %86 : vector<8x128xf32>
    %88 = math.tanh %87 : vector<8x128xf32>
    %89 = vector.extract_strided_slice %81 {offsets = [0, 128], sizes = [8, 128], strides = [1, 1]} : vector<8x256xf32> to vector<8x128xf32>
    %cst_27 = arith.constant 1.000000e+00 : f32
    %90 = vector.broadcast %cst_27 : f32 to vector<8x128xf32>
    %91 = arith.subf %90, %89 : vector<8x128xf32>
    %92 = arith.mulf %91, %88 : vector<8x128xf32>
    %93 = vector.extract_strided_slice %81 {offsets = [0, 128], sizes = [8, 128], strides = [1, 1]} : vector<8x256xf32> to vector<8x128xf32>
    %94 = arith.mulf %93, %65 : vector<8x128xf32>
    %95 = arith.addf %92, %94 : vector<8x128xf32>
    %c2_28 = arith.constant 2 : index
    %c0_29 = arith.constant 0 : index
    %c0_30 = arith.constant 0 : index
    %96 = vector.load %arg8[%c2_28, %c0_29, %c0_30] : memref<5x8x128xf32, #tpu.memory_space<vmem>>, vector<1x8x128xf32>
    %97 = vector.shape_cast %96 : vector<1x8x128xf32> to vector<8x128xf32>
    %98 = vector.shape_cast %95 : vector<8x128xf32> to vector<1x8x128xf32>
    tpu.vector_store %arg8[%c2_28, %c0_29, %c0_30], %98 {strides = array<i32>} : memref<5x8x128xf32, #tpu.memory_space<vmem>>, vector<1x8x128xf32>,
    %c1 = arith.constant 1 : index
    %c0_31 = arith.constant 0 : index
    %c0_32 = arith.constant 0 : index
    %99 = vector.load %arg2[%c1, %c0_31, %c0_32] : memref<5x8x384xbf16, #tpu.memory_space<vmem>>, vector<1x8x384xbf16>
    %100 = vector.shape_cast %99 : vector<1x8x384xbf16> to vector<8x384xbf16>
    %101 = arith.extf %100 : vector<8x384xbf16> to vector<8x384xf32>
    %102 = arith.truncf %95 : vector<8x128xf32> to vector<8x128xbf16>
    %cst_33 = arith.constant dense<0.000000e+00> : vector<8x384xf32>
    %103 = tpu.matmul %102, %1, %cst_33 {dimension_numbers = #tpu.dot_dimension_numbers<[1], [0], [0], [1], [0, 0, 1, 1], [], []>} : vector<8x128xbf16>, vector<128x384xbf16>, vector<8x384xf32> -> vector<8x384xf32>
    %104 = vector.extract_strided_slice %101 {offsets = [0, 0], sizes = [8, 256], strides = [1, 1]} : vector<8x384xf32> to vector<8x256xf32>
    %105 = vector.extract_strided_slice %103 {offsets = [0, 0], sizes = [8, 256], strides = [1, 1]} : vector<8x384xf32> to vector<8x256xf32>
    %106 = arith.addf %104, %105 : vector<8x256xf32>
    %107 = arith.negf %106 : vector<8x256xf32>
    %108 = math.exp %107 : vector<8x256xf32>
    %cst_34 = arith.constant 1.000000e+00 : f32
    %109 = vector.broadcast %cst_34 : f32 to vector<8x256xf32>
    %110 = arith.addf %109, %108 : vector<8x256xf32>
    %111 = arith.divf %109, %110 : vector<8x256xf32>
    %112 = vector.extract_strided_slice %101 {offsets = [0, 256], sizes = [8, 128], strides = [1, 1]} : vector<8x384xf32> to vector<8x128xf32>
    %113 = vector.extract_strided_slice %111 {offsets = [0, 0], sizes = [8, 128], strides = [1, 1]} : vector<8x256xf32> to vector<8x128xf32>
    %114 = vector.extract_strided_slice %103 {offsets = [0, 256], sizes = [8, 128], strides = [1, 1]} : vector<8x384xf32> to vector<8x128xf32>
    %115 = arith.addf %114, %7 : vector<8x128xf32>
    %116 = arith.mulf %113, %115 : vector<8x128xf32>
    %117 = arith.addf %112, %116 : vector<8x128xf32>
    %118 = math.tanh %117 : vector<8x128xf32>
    %119 = vector.extract_strided_slice %111 {offsets = [0, 128], sizes = [8, 128], strides = [1, 1]} : vector<8x256xf32> to vector<8x128xf32>
    %cst_35 = arith.constant 1.000000e+00 : f32
    %120 = vector.broadcast %cst_35 : f32 to vector<8x128xf32>
    %121 = arith.subf %120, %119 : vector<8x128xf32>
    %122 = arith.mulf %121, %118 : vector<8x128xf32>
    %123 = vector.extract_strided_slice %111 {offsets = [0, 128], sizes = [8, 128], strides = [1, 1]} : vector<8x256xf32> to vector<8x128xf32>
    %124 = arith.mulf %123, %95 : vector<8x128xf32>
    %125 = arith.addf %122, %124 : vector<8x128xf32>
    %c1_36 = arith.constant 1 : index
    %c0_37 = arith.constant 0 : index
    %c0_38 = arith.constant 0 : index
    %126 = vector.load %arg8[%c1_36, %c0_37, %c0_38] : memref<5x8x128xf32, #tpu.memory_space<vmem>>, vector<1x8x128xf32>
    %127 = vector.shape_cast %126 : vector<1x8x128xf32> to vector<8x128xf32>
    %128 = vector.shape_cast %125 : vector<8x128xf32> to vector<1x8x128xf32>
    tpu.vector_store %arg8[%c1_36, %c0_37, %c0_38], %128 {strides = array<i32>} : memref<5x8x128xf32, #tpu.memory_space<vmem>>, vector<1x8x128xf32>,
    %c0_39 = arith.constant 0 : index
    %c0_40 = arith.constant 0 : index
    %c0_41 = arith.constant 0 : index
    %129 = vector.load %arg2[%c0_39, %c0_40, %c0_41] : memref<5x8x384xbf16, #tpu.memory_space<vmem>>, vector<1x8x384xbf16>
    %130 = vector.shape_cast %129 : vector<1x8x384xbf16> to vector<8x384xbf16>
    %131 = arith.extf %130 : vector<8x384xbf16> to vector<8x384xf32>
    %132 = arith.truncf %125 : vector<8x128xf32> to vector<8x128xbf16>
    %cst_42 = arith.constant dense<0.000000e+00> : vector<8x384xf32>
    %133 = tpu.matmul %132, %1, %cst_42 {dimension_numbers = #tpu.dot_dimension_numbers<[1], [0], [0], [1], [0, 0, 1, 1], [], []>} : vector<8x128xbf16>, vector<128x384xbf16>, vector<8x384xf32> -> vector<8x384xf32>
    %134 = vector.extract_strided_slice %131 {offsets = [0, 0], sizes = [8, 256], strides = [1, 1]} : vector<8x384xf32> to vector<8x256xf32>
    %135 = vector.extract_strided_slice %133 {offsets = [0, 0], sizes = [8, 256], strides = [1, 1]} : vector<8x384xf32> to vector<8x256xf32>
    %136 = arith.addf %134, %135 : vector<8x256xf32>
    %137 = arith.negf %136 : vector<8x256xf32>
    %138 = math.exp %137 : vector<8x256xf32>
    %cst_43 = arith.constant 1.000000e+00 : f32
    %139 = vector.broadcast %cst_43 : f32 to vector<8x256xf32>
    %140 = arith.addf %139, %138 : vector<8x256xf32>
    %141 = arith.divf %139, %140 : vector<8x256xf32>
    %142 = vector.extract_strided_slice %131 {offsets = [0, 256], sizes = [8, 128], strides = [1, 1]} : vector<8x384xf32> to vector<8x128xf32>
    %143 = vector.extract_strided_slice %141 {offsets = [0, 0], sizes = [8, 128], strides = [1, 1]} : vector<8x256xf32> to vector<8x128xf32>
    %144 = vector.extract_strided_slice %133 {offsets = [0, 256], sizes = [8, 128], strides = [1, 1]} : vector<8x384xf32> to vector<8x128xf32>
    %145 = arith.addf %144, %7 : vector<8x128xf32>
    %146 = arith.mulf %143, %145 : vector<8x128xf32>
    %147 = arith.addf %142, %146 : vector<8x128xf32>
    %148 = math.tanh %147 : vector<8x128xf32>
    %149 = vector.extract_strided_slice %141 {offsets = [0, 128], sizes = [8, 128], strides = [1, 1]} : vector<8x256xf32> to vector<8x128xf32>
    %cst_44 = arith.constant 1.000000e+00 : f32
    %150 = vector.broadcast %cst_44 : f32 to vector<8x128xf32>
    %151 = arith.subf %150, %149 : vector<8x128xf32>
    %152 = arith.mulf %151, %148 : vector<8x128xf32>
    %153 = vector.extract_strided_slice %141 {offsets = [0, 128], sizes = [8, 128], strides = [1, 1]} : vector<8x256xf32> to vector<8x128xf32>
    %154 = arith.mulf %153, %125 : vector<8x128xf32>
    %155 = arith.addf %152, %154 : vector<8x128xf32>
    %c0_45 = arith.constant 0 : index
    %c0_46 = arith.constant 0 : index
    %c0_47 = arith.constant 0 : index
    %156 = vector.load %arg8[%c0_45, %c0_46, %c0_47] : memref<5x8x128xf32, #tpu.memory_space<vmem>>, vector<1x8x128xf32>
    %157 = vector.shape_cast %156 : vector<1x8x128xf32> to vector<8x128xf32>
    %158 = vector.shape_cast %155 : vector<8x128xf32> to vector<1x8x128xf32>
    tpu.vector_store %arg8[%c0_45, %c0_46, %c0_47], %158 {strides = array<i32>} : memref<5x8x128xf32, #tpu.memory_space<vmem>>, vector<1x8x128xf32>,
    %cst_48 = arith.constant 0.000000e+00 : f32
    %159 = vector.broadcast %cst_48 : f32 to vector<8x128xf32>
    %c0_49 = arith.constant 0 : index
    %c0_50 = arith.constant 0 : index
    %c0_51 = arith.constant 0 : index
    %160 = vector.load %arg1[%c0_49, %c0_50, %c0_51] : memref<5x8x384xbf16, #tpu.memory_space<vmem>>, vector<1x8x384xbf16>
    %161 = vector.shape_cast %160 : vector<1x8x384xbf16> to vector<8x384xbf16>
    %162 = arith.extf %161 : vector<8x384xbf16> to vector<8x384xf32>
    %163 = arith.truncf %159 : vector<8x128xf32> to vector<8x128xbf16>
    %cst_52 = arith.constant dense<0.000000e+00> : vector<8x384xf32>
    %164 = tpu.matmul %163, %0, %cst_52 {dimension_numbers = #tpu.dot_dimension_numbers<[1], [0], [0], [1], [0, 0, 1, 1], [], []>} : vector<8x128xbf16>, vector<128x384xbf16>, vector<8x384xf32> -> vector<8x384xf32>
    %165 = vector.extract_strided_slice %162 {offsets = [0, 0], sizes = [8, 256], strides = [1, 1]} : vector<8x384xf32> to vector<8x256xf32>
    %166 = vector.extract_strided_slice %164 {offsets = [0, 0], sizes = [8, 256], strides = [1, 1]} : vector<8x384xf32> to vector<8x256xf32>
    %167 = arith.addf %165, %166 : vector<8x256xf32>
    %168 = arith.negf %167 : vector<8x256xf32>
    %169 = math.exp %168 : vector<8x256xf32>
    %cst_53 = arith.constant 1.000000e+00 : f32
    %170 = vector.broadcast %cst_53 : f32 to vector<8x256xf32>
    %171 = arith.addf %170, %169 : vector<8x256xf32>
    %172 = arith.divf %170, %171 : vector<8x256xf32>
    %173 = vector.extract_strided_slice %162 {offsets = [0, 256], sizes = [8, 128], strides = [1, 1]} : vector<8x384xf32> to vector<8x128xf32>
    %174 = vector.extract_strided_slice %172 {offsets = [0, 0], sizes = [8, 128], strides = [1, 1]} : vector<8x256xf32> to vector<8x128xf32>
    %175 = vector.extract_strided_slice %164 {offsets = [0, 256], sizes = [8, 128], strides = [1, 1]} : vector<8x384xf32> to vector<8x128xf32>
    %176 = arith.addf %175, %4 : vector<8x128xf32>
    %177 = arith.mulf %174, %176 : vector<8x128xf32>
    %178 = arith.addf %173, %177 : vector<8x128xf32>
    %179 = math.tanh %178 : vector<8x128xf32>
    %180 = vector.extract_strided_slice %172 {offsets = [0, 128], sizes = [8, 128], strides = [1, 1]} : vector<8x256xf32> to vector<8x128xf32>
    %cst_54 = arith.constant 1.000000e+00 : f32
    %181 = vector.broadcast %cst_54 : f32 to vector<8x128xf32>
    %182 = arith.subf %181, %180 : vector<8x128xf32>
    %183 = arith.mulf %182, %179 : vector<8x128xf32>
    %184 = vector.extract_strided_slice %172 {offsets = [0, 128], sizes = [8, 128], strides = [1, 1]} : vector<8x256xf32> to vector<8x128xf32>
    %185 = arith.mulf %184, %159 : vector<8x128xf32>
    %186 = arith.addf %183, %185 : vector<8x128xf32>
    %c0_55 = arith.constant 0 : index
    %c0_56 = arith.constant 0 : index
    %c0_57 = arith.constant 0 : index
    %187 = vector.load %arg8[%c0_55, %c0_56, %c0_57] : memref<5x8x128xf32, #tpu.memory_space<vmem>>, vector<1x8x128xf32>
    %188 = vector.shape_cast %187 : vector<1x8x128xf32> to vector<8x128xf32>
    %189 = tpu.concatenate %186, %188 in 1 : vector<8x128xf32>, vector<8x128xf32> -> vector<8x256xf32>
    %c0_58 = arith.constant 0 : index
    %c0_59 = arith.constant 0 : index
    %c0_60 = arith.constant 0 : index
    %190 = vector.load %arg7[%c0_58, %c0_59, %c0_60] : memref<5x8x256xf32, #tpu.memory_space<vmem>>, vector<1x8x256xf32>
    %191 = vector.shape_cast %190 : vector<1x8x256xf32> to vector<8x256xf32>
    %192 = vector.shape_cast %189 : vector<8x256xf32> to vector<1x8x256xf32>
    tpu.vector_store %arg7[%c0_58, %c0_59, %c0_60], %192 {strides = array<i32>} : memref<5x8x256xf32, #tpu.memory_space<vmem>>, vector<1x8x256xf32>,
    %c1_61 = arith.constant 1 : index
    %c0_62 = arith.constant 0 : index
    %c0_63 = arith.constant 0 : index
    %193 = vector.load %arg1[%c1_61, %c0_62, %c0_63] : memref<5x8x384xbf16, #tpu.memory_space<vmem>>, vector<1x8x384xbf16>
    %194 = vector.shape_cast %193 : vector<1x8x384xbf16> to vector<8x384xbf16>
    %195 = arith.extf %194 : vector<8x384xbf16> to vector<8x384xf32>
    %196 = arith.truncf %186 : vector<8x128xf32> to vector<8x128xbf16>
    %cst_64 = arith.constant dense<0.000000e+00> : vector<8x384xf32>
    %197 = tpu.matmul %196, %0, %cst_64 {dimension_numbers = #tpu.dot_dimension_numbers<[1], [0], [0], [1], [0, 0, 1, 1], [], []>} : vector<8x128xbf16>, vector<128x384xbf16>, vector<8x384xf32> -> vector<8x384xf32>
    %198 = vector.extract_strided_slice %195 {offsets = [0, 0], sizes = [8, 256], strides = [1, 1]} : vector<8x384xf32> to vector<8x256xf32>
    %199 = vector.extract_strided_slice %197 {offsets = [0, 0], sizes = [8, 256], strides = [1, 1]} : vector<8x384xf32> to vector<8x256xf32>
    %200 = arith.addf %198, %199 : vector<8x256xf32>
    %201 = arith.negf %200 : vector<8x256xf32>
    %202 = math.exp %201 : vector<8x256xf32>
    %cst_65 = arith.constant 1.000000e+00 : f32
    %203 = vector.broadcast %cst_65 : f32 to vector<8x256xf32>
    %204 = arith.addf %203, %202 : vector<8x256xf32>
    %205 = arith.divf %203, %204 : vector<8x256xf32>
    %206 = vector.extract_strided_slice %195 {offsets = [0, 256], sizes = [8, 128], strides = [1, 1]} : vector<8x384xf32> to vector<8x128xf32>
    %207 = vector.extract_strided_slice %205 {offsets = [0, 0], sizes = [8, 128], strides = [1, 1]} : vector<8x256xf32> to vector<8x128xf32>
    %208 = vector.extract_strided_slice %197 {offsets = [0, 256], sizes = [8, 128], strides = [1, 1]} : vector<8x384xf32> to vector<8x128xf32>
    %209 = arith.addf %208, %4 : vector<8x128xf32>
    %210 = arith.mulf %207, %209 : vector<8x128xf32>
    %211 = arith.addf %206, %210 : vector<8x128xf32>
    %212 = math.tanh %211 : vector<8x128xf32>
    %213 = vector.extract_strided_slice %205 {offsets = [0, 128], sizes = [8, 128], strides = [1, 1]} : vector<8x256xf32> to vector<8x128xf32>
    %cst_66 = arith.constant 1.000000e+00 : f32
    %214 = vector.broadcast %cst_66 : f32 to vector<8x128xf32>
    %215 = arith.subf %214, %213 : vector<8x128xf32>
    %216 = arith.mulf %215, %212 : vector<8x128xf32>
    %217 = vector.extract_strided_slice %205 {offsets = [0, 128], sizes = [8, 128], strides = [1, 1]} : vector<8x256xf32> to vector<8x128xf32>
    %218 = arith.mulf %217, %186 : vector<8x128xf32>
    %219 = arith.addf %216, %218 : vector<8x128xf32>
    %c1_67 = arith.constant 1 : index
    %c0_68 = arith.constant 0 : index
    %c0_69 = arith.constant 0 : index
    %220 = vector.load %arg8[%c1_67, %c0_68, %c0_69] : memref<5x8x128xf32, #tpu.memory_space<vmem>>, vector<1x8x128xf32>
    %221 = vector.shape_cast %220 : vector<1x8x128xf32> to vector<8x128xf32>
    %222 = tpu.concatenate %219, %221 in 1 : vector<8x128xf32>, vector<8x128xf32> -> vector<8x256xf32>
    %c1_70 = arith.constant 1 : index
    %c0_71 = arith.constant 0 : index
    %c0_72 = arith.constant 0 : index
    %223 = vector.load %arg7[%c1_70, %c0_71, %c0_72] : memref<5x8x256xf32, #tpu.memory_space<vmem>>, vector<1x8x256xf32>
    %224 = vector.shape_cast %223 : vector<1x8x256xf32> to vector<8x256xf32>
    %225 = vector.shape_cast %222 : vector<8x256xf32> to vector<1x8x256xf32>
    tpu.vector_store %arg7[%c1_70, %c0_71, %c0_72], %225 {strides = array<i32>} : memref<5x8x256xf32, #tpu.memory_space<vmem>>, vector<1x8x256xf32>,
    %c2_73 = arith.constant 2 : index
    %c0_74 = arith.constant 0 : index
    %c0_75 = arith.constant 0 : index
    %226 = vector.load %arg1[%c2_73, %c0_74, %c0_75] : memref<5x8x384xbf16, #tpu.memory_space<vmem>>, vector<1x8x384xbf16>
    %227 = vector.shape_cast %226 : vector<1x8x384xbf16> to vector<8x384xbf16>
    %228 = arith.extf %227 : vector<8x384xbf16> to vector<8x384xf32>
    %229 = arith.truncf %219 : vector<8x128xf32> to vector<8x128xbf16>
    %cst_76 = arith.constant dense<0.000000e+00> : vector<8x384xf32>
    %230 = tpu.matmul %229, %0, %cst_76 {dimension_numbers = #tpu.dot_dimension_numbers<[1], [0], [0], [1], [0, 0, 1, 1], [], []>} : vector<8x128xbf16>, vector<128x384xbf16>, vector<8x384xf32> -> vector<8x384xf32>
    %231 = vector.extract_strided_slice %228 {offsets = [0, 0], sizes = [8, 256], strides = [1, 1]} : vector<8x384xf32> to vector<8x256xf32>
    %232 = vector.extract_strided_slice %230 {offsets = [0, 0], sizes = [8, 256], strides = [1, 1]} : vector<8x384xf32> to vector<8x256xf32>
    %233 = arith.addf %231, %232 : vector<8x256xf32>
    %234 = arith.negf %233 : vector<8x256xf32>
    %235 = math.exp %234 : vector<8x256xf32>
    %cst_77 = arith.constant 1.000000e+00 : f32
    %236 = vector.broadcast %cst_77 : f32 to vector<8x256xf32>
    %237 = arith.addf %236, %235 : vector<8x256xf32>
    %238 = arith.divf %236, %237 : vector<8x256xf32>
    %239 = vector.extract_strided_slice %228 {offsets = [0, 256], sizes = [8, 128], strides = [1, 1]} : vector<8x384xf32> to vector<8x128xf32>
    %240 = vector.extract_strided_slice %238 {offsets = [0, 0], sizes = [8, 128], strides = [1, 1]} : vector<8x256xf32> to vector<8x128xf32>
    %241 = vector.extract_strided_slice %230 {offsets = [0, 256], sizes = [8, 128], strides = [1, 1]} : vector<8x384xf32> to vector<8x128xf32>
    %242 = arith.addf %241, %4 : vector<8x128xf32>
    %243 = arith.mulf %240, %242 : vector<8x128xf32>
    %244 = arith.addf %239, %243 : vector<8x128xf32>
    %245 = math.tanh %244 : vector<8x128xf32>
    %246 = vector.extract_strided_slice %238 {offsets = [0, 128], sizes = [8, 128], strides = [1, 1]} : vector<8x256xf32> to vector<8x128xf32>
    %cst_78 = arith.constant 1.000000e+00 : f32
    %247 = vector.broadcast %cst_78 : f32 to vector<8x128xf32>
    %248 = arith.subf %247, %246 : vector<8x128xf32>
    %249 = arith.mulf %248, %245 : vector<8x128xf32>
    %250 = vector.extract_strided_slice %238 {offsets = [0, 128], sizes = [8, 128], strides = [1, 1]} : vector<8x256xf32> to vector<8x128xf32>
    %251 = arith.mulf %250, %219 : vector<8x128xf32>
    %252 = arith.addf %249, %251 : vector<8x128xf32>
    %c2_79 = arith.constant 2 : index
    %c0_80 = arith.constant 0 : index
    %c0_81 = arith.constant 0 : index
    %253 = vector.load %arg8[%c2_79, %c0_80, %c0_81] : memref<5x8x128xf32, #tpu.memory_space<vmem>>, vector<1x8x128xf32>
    %254 = vector.shape_cast %253 : vector<1x8x128xf32> to vector<8x128xf32>
    %255 = tpu.concatenate %252, %254 in 1 : vector<8x128xf32>, vector<8x128xf32> -> vector<8x256xf32>
    %c2_82 = arith.constant 2 : index
    %c0_83 = arith.constant 0 : index
    %c0_84 = arith.constant 0 : index
    %256 = vector.load %arg7[%c2_82, %c0_83, %c0_84] : memref<5x8x256xf32, #tpu.memory_space<vmem>>, vector<1x8x256xf32>
    %257 = vector.shape_cast %256 : vector<1x8x256xf32> to vector<8x256xf32>
    %258 = vector.shape_cast %255 : vector<8x256xf32> to vector<1x8x256xf32>
    tpu.vector_store %arg7[%c2_82, %c0_83, %c0_84], %258 {strides = array<i32>} : memref<5x8x256xf32, #tpu.memory_space<vmem>>, vector<1x8x256xf32>,
    %c3_85 = arith.constant 3 : index
    %c0_86 = arith.constant 0 : index
    %c0_87 = arith.constant 0 : index
    %259 = vector.load %arg1[%c3_85, %c0_86, %c0_87] : memref<5x8x384xbf16, #tpu.memory_space<vmem>>, vector<1x8x384xbf16>
    %260 = vector.shape_cast %259 : vector<1x8x384xbf16> to vector<8x384xbf16>
    %261 = arith.extf %260 : vector<8x384xbf16> to vector<8x384xf32>
    %262 = arith.truncf %252 : vector<8x128xf32> to vector<8x128xbf16>
    %cst_88 = arith.constant dense<0.000000e+00> : vector<8x384xf32>
    %263 = tpu.matmul %262, %0, %cst_88 {dimension_numbers = #tpu.dot_dimension_numbers<[1], [0], [0], [1], [0, 0, 1, 1], [], []>} : vector<8x128xbf16>, vector<128x384xbf16>, vector<8x384xf32> -> vector<8x384xf32>
    %264 = vector.extract_strided_slice %261 {offsets = [0, 0], sizes = [8, 256], strides = [1, 1]} : vector<8x384xf32> to vector<8x256xf32>
    %265 = vector.extract_strided_slice %263 {offsets = [0, 0], sizes = [8, 256], strides = [1, 1]} : vector<8x384xf32> to vector<8x256xf32>
    %266 = arith.addf %264, %265 : vector<8x256xf32>
    %267 = arith.negf %266 : vector<8x256xf32>
    %268 = math.exp %267 : vector<8x256xf32>
    %cst_89 = arith.constant 1.000000e+00 : f32
    %269 = vector.broadcast %cst_89 : f32 to vector<8x256xf32>
    %270 = arith.addf %269, %268 : vector<8x256xf32>
    %271 = arith.divf %269, %270 : vector<8x256xf32>
    %272 = vector.extract_strided_slice %261 {offsets = [0, 256], sizes = [8, 128], strides = [1, 1]} : vector<8x384xf32> to vector<8x128xf32>
    %273 = vector.extract_strided_slice %271 {offsets = [0, 0], sizes = [8, 128], strides = [1, 1]} : vector<8x256xf32> to vector<8x128xf32>
    %274 = vector.extract_strided_slice %263 {offsets = [0, 256], sizes = [8, 128], strides = [1, 1]} : vector<8x384xf32> to vector<8x128xf32>
    %275 = arith.addf %274, %4 : vector<8x128xf32>
    %276 = arith.mulf %273, %275 : vector<8x128xf32>
    %277 = arith.addf %272, %276 : vector<8x128xf32>
    %278 = math.tanh %277 : vector<8x128xf32>
    %279 = vector.extract_strided_slice %271 {offsets = [0, 128], sizes = [8, 128], strides = [1, 1]} : vector<8x256xf32> to vector<8x128xf32>
    %cst_90 = arith.constant 1.000000e+00 : f32
    %280 = vector.broadcast %cst_90 : f32 to vector<8x128xf32>
    %281 = arith.subf %280, %279 : vector<8x128xf32>
    %282 = arith.mulf %281, %278 : vector<8x128xf32>
    %283 = vector.extract_strided_slice %271 {offsets = [0, 128], sizes = [8, 128], strides = [1, 1]} : vector<8x256xf32> to vector<8x128xf32>
    %284 = arith.mulf %283, %252 : vector<8x128xf32>
    %285 = arith.addf %282, %284 : vector<8x128xf32>
    %c3_91 = arith.constant 3 : index
    %c0_92 = arith.constant 0 : index
    %c0_93 = arith.constant 0 : index
    %286 = vector.load %arg8[%c3_91, %c0_92, %c0_93] : memref<5x8x128xf32, #tpu.memory_space<vmem>>, vector<1x8x128xf32>
    %287 = vector.shape_cast %286 : vector<1x8x128xf32> to vector<8x128xf32>
    %288 = tpu.concatenate %285, %287 in 1 : vector<8x128xf32>, vector<8x128xf32> -> vector<8x256xf32>
    %c3_94 = arith.constant 3 : index
    %c0_95 = arith.constant 0 : index
    %c0_96 = arith.constant 0 : index
    %289 = vector.load %arg7[%c3_94, %c0_95, %c0_96] : memref<5x8x256xf32, #tpu.memory_space<vmem>>, vector<1x8x256xf32>
    %290 = vector.shape_cast %289 : vector<1x8x256xf32> to vector<8x256xf32>
    %291 = vector.shape_cast %288 : vector<8x256xf32> to vector<1x8x256xf32>
    tpu.vector_store %arg7[%c3_94, %c0_95, %c0_96], %291 {strides = array<i32>} : memref<5x8x256xf32, #tpu.memory_space<vmem>>, vector<1x8x256xf32>,
    %c4_97 = arith.constant 4 : index
    %c0_98 = arith.constant 0 : index
    %c0_99 = arith.constant 0 : index
    %292 = vector.load %arg1[%c4_97, %c0_98, %c0_99] : memref<5x8x384xbf16, #tpu.memory_space<vmem>>, vector<1x8x384xbf16>
    %293 = vector.shape_cast %292 : vector<1x8x384xbf16> to vector<8x384xbf16>
    %294 = arith.extf %293 : vector<8x384xbf16> to vector<8x384xf32>
    %295 = arith.truncf %285 : vector<8x128xf32> to vector<8x128xbf16>
    %cst_100 = arith.constant dense<0.000000e+00> : vector<8x384xf32>
    %296 = tpu.matmul %295, %0, %cst_100 {dimension_numbers = #tpu.dot_dimension_numbers<[1], [0], [0], [1], [0, 0, 1, 1], [], []>} : vector<8x128xbf16>, vector<128x384xbf16>, vector<8x384xf32> -> vector<8x384xf32>
    %297 = vector.extract_strided_slice %294 {offsets = [0, 0], sizes = [8, 256], strides = [1, 1]} : vector<8x384xf32> to vector<8x256xf32>
    %298 = vector.extract_strided_slice %296 {offsets = [0, 0], sizes = [8, 256], strides = [1, 1]} : vector<8x384xf32> to vector<8x256xf32>
    %299 = arith.addf %297, %298 : vector<8x256xf32>
    %300 = arith.negf %299 : vector<8x256xf32>
    %301 = math.exp %300 : vector<8x256xf32>
    %cst_101 = arith.constant 1.000000e+00 : f32
    %302 = vector.broadcast %cst_101 : f32 to vector<8x256xf32>
    %303 = arith.addf %302, %301 : vector<8x256xf32>
    %304 = arith.divf %302, %303 : vector<8x256xf32>
    %305 = vector.extract_strided_slice %294 {offsets = [0, 256], sizes = [8, 128], strides = [1, 1]} : vector<8x384xf32> to vector<8x128xf32>
    %306 = vector.extract_strided_slice %304 {offsets = [0, 0], sizes = [8, 128], strides = [1, 1]} : vector<8x256xf32> to vector<8x128xf32>
    %307 = vector.extract_strided_slice %296 {offsets = [0, 256], sizes = [8, 128], strides = [1, 1]} : vector<8x384xf32> to vector<8x128xf32>
    %308 = arith.addf %307, %4 : vector<8x128xf32>
    %309 = arith.mulf %306, %308 : vector<8x128xf32>
    %310 = arith.addf %305, %309 : vector<8x128xf32>
    %311 = math.tanh %310 : vector<8x128xf32>
    %312 = vector.extract_strided_slice %304 {offsets = [0, 128], sizes = [8, 128], strides = [1, 1]} : vector<8x256xf32> to vector<8x128xf32>
    %cst_102 = arith.constant 1.000000e+00 : f32
    %313 = vector.broadcast %cst_102 : f32 to vector<8x128xf32>
    %314 = arith.subf %313, %312 : vector<8x128xf32>
    %315 = arith.mulf %314, %311 : vector<8x128xf32>
    %316 = vector.extract_strided_slice %304 {offsets = [0, 128], sizes = [8, 128], strides = [1, 1]} : vector<8x256xf32> to vector<8x128xf32>
    %317 = arith.mulf %316, %285 : vector<8x128xf32>
    %318 = arith.addf %315, %317 : vector<8x128xf32>
    %c4_103 = arith.constant 4 : index
    %c0_104 = arith.constant 0 : index
    %c0_105 = arith.constant 0 : index
    %319 = vector.load %arg8[%c4_103, %c0_104, %c0_105] : memref<5x8x128xf32, #tpu.memory_space<vmem>>, vector<1x8x128xf32>
    %320 = vector.shape_cast %319 : vector<1x8x128xf32> to vector<8x128xf32>
    %321 = tpu.concatenate %318, %320 in 1 : vector<8x128xf32>, vector<8x128xf32> -> vector<8x256xf32>
    %c4_106 = arith.constant 4 : index
    %c0_107 = arith.constant 0 : index
    %c0_108 = arith.constant 0 : index
    %322 = vector.load %arg7[%c4_106, %c0_107, %c0_108] : memref<5x8x256xf32, #tpu.memory_space<vmem>>, vector<1x8x256xf32>
    %323 = vector.shape_cast %322 : vector<1x8x256xf32> to vector<8x256xf32>
    %324 = vector.shape_cast %321 : vector<8x256xf32> to vector<1x8x256xf32>
    tpu.vector_store %arg7[%c4_106, %c0_107, %c0_108], %324 {strides = array<i32>} : memref<5x8x256xf32, #tpu.memory_space<vmem>>, vector<1x8x256xf32>,
    return
  }
  func.func @transform_0(%arg0: i32) -> (i32, i32, i32) {
    %c0_i32 = arith.constant 0 : i32
    %c0_i32_0 = arith.constant 0 : i32
    %c0_i32_1 = arith.constant 0 : i32
    return %c0_i32, %arg0, %c0_i32_0 : i32, i32, i32
  }
  func.func @transform_1(%arg0: i32) -> (i32, i32, i32) {
    %c0_i32 = arith.constant 0 : i32
    %c0_i32_0 = arith.constant 0 : i32
    %c0_i32_1 = arith.constant 0 : i32
    return %c0_i32, %arg0, %c0_i32_0 : i32, i32, i32
  }
  func.func @transform_2(%arg0: i32) -> (i32, i32) {
    %c0_i32 = arith.constant 0 : i32
    %c0_i32_0 = arith.constant 0 : i32
    %c0_i32_1 = arith.constant 0 : i32
    return %c0_i32, %c0_i32_0 : i32, i32
  }
  func.func @transform_3(%arg0: i32) -> (i32, i32) {
    %c0_i32 = arith.constant 0 : i32
    %c0_i32_0 = arith.constant 0 : i32
    %c0_i32_1 = arith.constant 0 : i32
    return %c0_i32, %c0_i32_0 : i32, i32
  }
  func.func @transform_4(%arg0: i32) -> (i32, i32) {
    %c0_i32 = arith.constant 0 : i32
    %c0_i32_0 = arith.constant 0 : i32
    %c0_i32_1 = arith.constant 0 : i32
    return %c0_i32, %c0_i32_0 : i32, i32
  }
  func.func @transform_5(%arg0: i32) -> (i32, i32) {
    %c0_i32 = arith.constant 0 : i32
    %c0_i32_0 = arith.constant 0 : i32
    %c0_i32_1 = arith.constant 0 : i32
    return %c0_i32, %c0_i32_0 : i32, i32
  }
  func.func @transform_6(%arg0: i32) -> (i32, i32, i32) {
    %c0_i32 = arith.constant 0 : i32
    %c0_i32_0 = arith.constant 0 : i32
    %c0_i32_1 = arith.constant 0 : i32
    return %c0_i32, %arg0, %c0_i32_0 : i32, i32, i32
  }
}

</mosaic_0001>

<llo_original>
// kernel: hierarchical_encoder.3
$region0: #{hierarchical_encoder.3}
  #allocation0 [shape = 'u32[]', space=smem, size = 0x4, offset = 0x4, fixed_abs, tag = 'smem constant byte address 0x4 - core index']
  #allocation1 [shape = 'u32[144,128]{1,0:T(1,128)}', space=vmem, size = 0x12000, scoped, tag = 'internal scratch']
  %s0 = inlined_call_operand.vmem [shape: bf16[6,16,384], index: 0, kind: input, shape index: {}]
  %s1 = inlined_call_operand.vmem [shape: bf16[16,384], index: 1, kind: input, shape index: {}]
  %s2 = inlined_call_operand.vmem [shape: bf16[128,384], index: 2, kind: input, shape index: {}]
  %s3 = inlined_call_operand.vmem [shape: f32[1,128], index: 3, kind: input, shape index: {}]
  %s4 = inlined_call_operand.vmem [shape: f32[1,128], index: 4, kind: input, shape index: {}]
  %s5 = inlined_call_operand.vmem [shape: f32[16,256], index: 5, kind: output, shape index: {}]
  %s6 = sld [smem:[#allocation0]]
  $region79: #{hierarchical_encoder.3} parent=0
    _
  %s8 = ssub.s32 1, %s6
  %s9 = scalar_select 0, %s8, %s6
  $region1: #{hierarchical_encoder.3} parent=0
    #allocation2 [shape = 'u8[73728]{0}', space=vmem, size = 0x12000, scoped, tag = 'input window, operand 0']
    loop: start=0, step=1, limit=4
    $region2: #{hierarchical_encoder.3} parent=1 // loop_pre_header
      _
    $region3: #{hierarchical_encoder.3} parent=1 // loop_header
      %s11 = sphi 0, %s15
      %p12 = scmp.ge.s32.totalorder %s11, 4
      %s21 = sphi 0, %s23
      %s24 = sphi 0, %s21
      %s25 = sphi 0, %s24
      %s41 = sphi 0, %s25
      %s47 = sphi 0, %s49
      %s50 = sphi 0, %s47
      %s51 = sphi 0, %s50
      %s67 = sphi 0, %s51
      %s71 = sphi 0, %s71
      %s73 = sphi 0, %s71
      %s74 = sphi 0, %s73
      %s88 = sphi 0, %s74
      %s92 = sphi 0, %s92
      %s94 = sphi 0, %s92
      %s95 = sphi 0, %s94
      %s109 = sphi 0, %s95
      %s113 = sphi 0, %s113
      %s115 = sphi 0, %s113
      %s116 = sphi 0, %s115
      %s130 = sphi 0, %s116
      %s136 = sphi 0, %s138
      %s139 = sphi 0, %s136
      %s140 = sphi 0, %s139
      %s156 = sphi 0, %s140
    $region4: #{hierarchical_encoder.3} parent=1 // loop_header_branch
      %14 = sbr.rel (%p12) target = $region8
    $region5: #{hierarchical_encoder.3} parent=1 // loop_body
      %s16 = ssub.s32 %s11, 1
      %s17 = ssub.s32 %s11, 2
      %s18 = sadd.s32 %s11, 1
      %s19 = ssub.s32 %s11, %s18
      %p20 = scmp.eq.s32.totalorder %s19, 0
      %s22 = sadd.s32 %s21, 1
      %s23 = scalar_select %p20, %s21, %s22
      %p26 = pneg %p20
      %p27 = scmp.eq.s32.totalorder %s11, 1
      %p28 = por %p26, %p27
      %p29 = scmp.ne.s32.totalorder %s21, %s24
      %p30 = scmp.eq.s32.totalorder %s11, 0
      %p31 = por %p29, %p30
      %p32 = scmp.ne.s32.totalorder %s21, %s24
      %p33 = scmp.eq.s32.totalorder %s16, 1
      %p34 = por %p32, %p33
      %p35 = scmp.ne.s32.totalorder %s24, %s25
      %p36 = scmp.eq.s32.totalorder %s16, 0
      %p37 = por %p35, %p36
      %p38 = scmp.ne.s32.totalorder %s24, %s25
      %p39 = scmp.eq.s32.totalorder %s17, 1
      %p40 = por %p38, %p39
      %p42 = scmp.ne.s32.totalorder %s25, %s41
      %p43 = scmp.eq.s32.totalorder %s17, 0
      %p44 = por %p42, %p43
      %s45 = ssub.s32 %s11, %s18
      %p46 = scmp.eq.s32.totalorder %s45, 0
      %s48 = sadd.s32 %s47, 1
      %s49 = scalar_select %p46, %s47, %s48
      %p52 = pneg %p46
      %p53 = scmp.eq.s32.totalorder %s11, 1
      %p54 = por %p52, %p53
      %p55 = scmp.ne.s32.totalorder %s47, %s50
      %p56 = scmp.eq.s32.totalorder %s11, 0
      %p57 = por %p55, %p56
      %p58 = scmp.ne.s32.totalorder %s47, %s50
      %p59 = scmp.eq.s32.totalorder %s16, 1
      %p60 = por %p58, %p59
      %p61 = scmp.ne.s32.totalorder %s50, %s51
      %p62 = scmp.eq.s32.totalorder %s16, 0
      %p63 = por %p61, %p62
      %p64 = scmp.ne.s32.totalorder %s50, %s51
      %p65 = scmp.eq.s32.totalorder %s17, 1
      %p66 = por %p64, %p65
      %p68 = scmp.ne.s32.totalorder %s51, %s67
      %p69 = scmp.eq.s32.totalorder %s17, 0
      %p70 = por %p68, %p69
      %s72 = sadd.s32 %s71, 1
      %p75 = scmp.eq.s32.totalorder %s11, 1
      %p76 = scmp.ne.s32.totalorder %s71, %s73
      %p77 = scmp.eq.s32.totalorder %s11, 0
      %p78 = por %p76, %p77
      %p79 = scmp.ne.s32.totalorder %s71, %s73
      %p80 = scmp.eq.s32.totalorder %s16, 1
      %p81 = por %p79, %p80
      %p82 = scmp.ne.s32.totalorder %s73, %s74
      %p83 = scmp.eq.s32.totalorder %s16, 0
      %p84 = por %p82, %p83
      %p85 = scmp.ne.s32.totalorder %s73, %s74
      %p86 = scmp.eq.s32.totalorder %s17, 1
      %p87 = por %p85, %p86
      %p89 = scmp.ne.s32.totalorder %s74, %s88
      %p90 = scmp.eq.s32.totalorder %s17, 0
      %p91 = por %p89, %p90
      %s93 = sadd.s32 %s92, 1
      %p96 = scmp.eq.s32.totalorder %s11, 1
      %p97 = scmp.ne.s32.totalorder %s92, %s94
      %p98 = scmp.eq.s32.totalorder %s11, 0
      %p99 = por %p97, %p98
      %p100 = scmp.ne.s32.totalorder %s92, %s94
      %p101 = scmp.eq.s32.totalorder %s16, 1
      %p102 = por %p100, %p101
      %p103 = scmp.ne.s32.totalorder %s94, %s95
      %p104 = scmp.eq.s32.totalorder %s16, 0
      %p105 = por %p103, %p104
      %p106 = scmp.ne.s32.totalorder %s94, %s95
      %p107 = scmp.eq.s32.totalorder %s17, 1
      %p108 = por %p106, %p107
      %p110 = scmp.ne.s32.totalorder %s95, %s109
      %p111 = scmp.eq.s32.totalorder %s17, 0
      %p112 = por %p110, %p111
      %s114 = sadd.s32 %s113, 1
      %p117 = scmp.eq.s32.totalorder %s11, 1
      %p118 = scmp.ne.s32.totalorder %s113, %s115
      %p119 = scmp.eq.s32.totalorder %s11, 0
      %p120 = por %p118, %p119
      %p121 = scmp.ne.s32.totalorder %s113, %s115
      %p122 = scmp.eq.s32.totalorder %s16, 1
      %p123 = por %p121, %p122
      %p124 = scmp.ne.s32.totalorder %s115, %s116
      %p125 = scmp.eq.s32.totalorder %s16, 0
      %p126 = por %p124, %p125
      %p127 = scmp.ne.s32.totalorder %s115, %s116
      %p128 = scmp.eq.s32.totalorder %s17, 1
      %p129 = por %p127, %p128
      %p131 = scmp.ne.s32.totalorder %s116, %s130
      %p132 = scmp.eq.s32.totalorder %s17, 0
      %p133 = por %p131, %p132
      %s134 = ssub.s32 %s11, %s18
      %p135 = scmp.eq.s32.totalorder %s134, 0
      %s137 = sadd.s32 %s136, 1
      %s138 = scalar_select %p135, %s136, %s137
      %p141 = pneg %p135
      %p142 = scmp.eq.s32.totalorder %s11, 1
      %p143 = por %p141, %p142
      %p144 = scmp.ne.s32.totalorder %s136, %s139
      %p145 = scmp.eq.s32.totalorder %s11, 0
      %p146 = por %p144, %p145
      %p147 = scmp.ne.s32.totalorder %s136, %s139
      %p148 = scmp.eq.s32.totalorder %s16, 1
      %p149 = por %p147, %p148
      %p150 = scmp.ne.s32.totalorder %s139, %s140
      %p151 = scmp.eq.s32.totalorder %s16, 0
      %p152 = por %p150, %p151
      %p153 = scmp.ne.s32.totalorder %s139, %s140
      %p154 = scmp.eq.s32.totalorder %s17, 1
      %p155 = por %p153, %p154
      %p157 = scmp.ne.s32.totalorder %s140, %s156
      %p158 = scmp.eq.s32.totalorder %s17, 0
      %p159 = por %p157, %p158
      %p160 = scmp.le.s32.totalorder 1, %s11
      %p161 = scmp.lt.s32.totalorder %s11, 3
      %p162 = pnand %p160, %p161
      %p163 = pneg %p162
      // Predicated region
      $region9: #{hierarchical_encoder.3} parent=5 // pred_check
        _
      $region10: #{hierarchical_encoder.3} parent=5 // pred_check_branch
        %165 = sbr.rel (%p162) target = $region12
      $region11: #{hierarchical_encoder.3} parent=5 // pred_region
        %s166 = ssub.s32 %s11, 1
        // Predicated region
        $region13: #{hierarchical_encoder.3} parent=11 // pred_check
          %p167 = pneg %p84
        $region14: #{hierarchical_encoder.3} parent=11 // pred_check_branch
          %169 = sbr.rel (%p167) target = $region16
        $region15: #{hierarchical_encoder.3} parent=11 // pred_region
          _
        $region16: #{hierarchical_encoder.3} parent=11 // pred_fallthru
          _
        // Predicated region
        $region17: #{hierarchical_encoder.3} parent=11 // pred_check
          %p170 = pneg %p105
        $region18: #{hierarchical_encoder.3} parent=11 // pred_check_branch
          %172 = sbr.rel (%p170) target = $region20
        $region19: #{hierarchical_encoder.3} parent=11 // pred_region
          _
        $region20: #{hierarchical_encoder.3} parent=11 // pred_fallthru
          _
        // Predicated region
        $region21: #{hierarchical_encoder.3} parent=11 // pred_check
          %p173 = pneg %p126
        $region22: #{hierarchical_encoder.3} parent=11 // pred_check_branch
          %175 = sbr.rel (%p173) target = $region24
        $region23: #{hierarchical_encoder.3} parent=11 // pred_region
          _
        $region24: #{hierarchical_encoder.3} parent=11 // pred_fallthru
          _
      $region12: #{hierarchical_encoder.3} parent=5 // pred_fallthru
        _
      %p176 = scmp.lt.s32.totalorder %s11, 2
      // Predicated region
      $region25: #{hierarchical_encoder.3} parent=5 // pred_check
        %p177 = pneg %p176
      $region26: #{hierarchical_encoder.3} parent=5 // pred_check_branch
        %179 = sbr.rel (%p177) target = $region28
      $region27: #{hierarchical_encoder.3} parent=5 // pred_region
        // Predicated region
        $region29: #{hierarchical_encoder.3} parent=27 // pred_check
          %p180 = pneg %p31
        $region30: #{hierarchical_encoder.3} parent=27 // pred_check_branch
          %182 = sbr.rel (%p180) target = $region32
        $region31: #{hierarchical_encoder.3} parent=27 // pred_region
          %s183 = sand.u32 %s21, 1
          %s184 = sand.u32 %s21, 1
          %s185 = smul.addr %s184, 72
          %s186 = scalar_lea.vmem [#allocation2], %s185
          %s187 = smul.addr %s11, 3
          %s188 = smul.addr %s187, 4
          %s189 = scalar_lea.vmem %s0, %s188
          // Predicated region
          $region33: #{hierarchical_encoder.3} parent=31 // pred_check
            _
          $region34: #{hierarchical_encoder.3} parent=31 // pred_check_branch
            %191 = sbr.rel (0) target = $region36
          $region35: #{hierarchical_encoder.3} parent=31 // pred_region
            // Predicated region
            $region37: #{hierarchical_encoder.3} parent=35 // pred_check
              _
            $region38: #{hierarchical_encoder.3} parent=35 // pred_check_branch
              %193 = sbr.rel (0) target = $region40
            $region39: #{hierarchical_encoder.3} parent=35 // pred_region
              %s194 = scalar_lea.vmem %s189, 8
              %s195 = scalar_lea.vmem %s186, 8 [#allocation2]
              loop: start=0, step=1, limit=1
              $region41: #{hierarchical_encoder.3} parent=39 // loop_pre_header
                _
              $region42: #{hierarchical_encoder.3} parent=39 // loop_header
                %s197 = sphi 0, %s201
                %p198 = scmp.ge.s32.totalorder %s197, 1
                %s202 = sphi %s189, %s189
                %s203 = sphi %s186, %s186
              $region43: #{hierarchical_encoder.3} parent=39 // loop_header_branch
                %200 = sbr.rel (%p198) target = $region47
              $region44: #{hierarchical_encoder.3} parent=39 // loop_body
                %v204 = vld [vmem:[%s202] sm:$0xff]
                %205 = vst [vmem:[%s203] sm:$0xff] %v204
                %v206 = vld [vmem:[%s202 + $0x18] sm:$0xff]
                %207 = vst [vmem:[%s203 + $0xc] sm:$0xff] %v206
                %v208 = vld [vmem:[%s202 + $0x30] sm:$0xff]
                %209 = vst [vmem:[%s203 + $0x18] sm:$0xff] %v208
                %v210 = vld [vmem:[%s202 + $0x48] sm:$0xff]
                %211 = vst [vmem:[%s203 + $0x24] sm:$0xff] %v210
                %v212 = vld [vmem:[%s202 + $0x60] sm:$0xff]
                %213 = vst [vmem:[%s203 + $0x30] sm:$0xff] %v212
                %v214 = vld [vmem:[%s202 + $0x78] sm:$0xff]
                %215 = vst [vmem:[%s203 + $0x3c] sm:$0xff] %v214
              $region45: #{hierarchical_encoder.3} parent=39 // loop_footer
                %s201 = sadd.s32 1, %s197
              $region46: #{hierarchical_encoder.3} parent=39 // loop_footer_branch
                %196 = sbr.rel target = $region42
              $region47: #{hierarchical_encoder.3} parent=39 // loop_exit
                _
              loop: start=0, step=1, limit=1
              $region48: #{hierarchical_encoder.3} parent=39 // loop_pre_header
                _
              $region49: #{hierarchical_encoder.3} parent=39 // loop_header
                %s218 = sphi 0, %s222
                %p219 = scmp.ge.s32.totalorder %s218, 1
                %s223 = sphi %s194, %s194
                %s224 = sphi %s195, %s195
              $region50: #{hierarchical_encoder.3} parent=39 // loop_header_branch
                %221 = sbr.rel (%p219) target = $region54
              $region51: #{hierarchical_encoder.3} parent=39 // loop_body
                %v225 = vld [vmem:[%s223] sm:$0xf]
                %226 = vst [vmem:[%s224] sm:$0xf] %v225
                %v227 = vld [vmem:[%s223 + $0x18] sm:$0xf]
                %228 = vst [vmem:[%s224 + $0xc] sm:$0xf] %v227
                %v229 = vld [vmem:[%s223 + $0x30] sm:$0xf]
                %230 = vst [vmem:[%s224 + $0x18] sm:$0xf] %v229
                %v231 = vld [vmem:[%s223 + $0x48] sm:$0xf]
                %232 = vst [vmem:[%s224 + $0x24] sm:$0xf] %v231
                %v233 = vld [vmem:[%s223 + $0x60] sm:$0xf]
                %234 = vst [vmem:[%s224 + $0x30] sm:$0xf] %v233
                %v235 = vld [vmem:[%s223 + $0x78] sm:$0xf]
                %236 = vst [vmem:[%s224 + $0x3c] sm:$0xf] %v235
              $region52: #{hierarchical_encoder.3} parent=39 // loop_footer
                %s222 = sadd.s32 1, %s218
              $region53: #{hierarchical_encoder.3} parent=39 // loop_footer_branch
                %217 = sbr.rel target = $region49
              $region54: #{hierarchical_encoder.3} parent=39 // loop_exit
                _
            $region40: #{hierarchical_encoder.3} parent=35 // pred_fallthru
              _
          $region36: #{hierarchical_encoder.3} parent=31 // pred_fallthru
            _
          %237 = vnop
        $region32: #{hierarchical_encoder.3} parent=27 // pred_fallthru
          _
        // Predicated region
        $region55: #{hierarchical_encoder.3} parent=27 // pred_check
          %p238 = pneg %p57
        $region56: #{hierarchical_encoder.3} parent=27 // pred_check_branch
          %240 = sbr.rel (%p238) target = $region58
        $region57: #{hierarchical_encoder.3} parent=27 // pred_region
          %p241 = scmp.lt.s32.totalorder %s11, 1
          %s242 = scalar_select %p241, %s11, 1
          %s243 = smul.addr %s242, 3
          %s244 = smul.addr %s243, 4
          %s245 = scalar_lea.vmem %s1, %s244
        $region58: #{hierarchical_encoder.3} parent=27 // pred_fallthru
          _
      $region28: #{hierarchical_encoder.3} parent=5 // pred_fallthru
        _
      %p246 = scmp.le.s32.totalorder 1, %s11
      %p247 = scmp.lt.s32.totalorder %s11, 3
      %p248 = pnand %p246, %p247
      %p249 = pneg %p248
      // Predicated region
      $region59: #{hierarchical_encoder.3} parent=5 // pred_check
        _
      $region60: #{hierarchical_encoder.3} parent=5 // pred_check_branch
        %251 = sbr.rel (%p248) target = $region62
      $region61: #{hierarchical_encoder.3} parent=5 // pred_region
        %s252 = ssub.s32 %s11, 1
        %s253 = sand.u32 %s24, 1
        %s254 = sand.u32 %s24, 1
        %s255 = smul.addr %s254, 72
        %s256 = scalar_lea.vmem [#allocation2], %s255
        // Predicated region
        $region63: #{hierarchical_encoder.3} parent=61 // pred_check
          %p257 = pneg %p37
        $region64: #{hierarchical_encoder.3} parent=61 // pred_check_branch
          %259 = sbr.rel (%p257) target = $region66
        $region65: #{hierarchical_encoder.3} parent=61 // pred_region
          _
        $region66: #{hierarchical_encoder.3} parent=61 // pred_fallthru
          _
        %s260 = sand.u32 %s24, 1
        %s261 = sand.u32 %s24, 1
        %s262 = smul.addr %s261, 72
        %s263 = scalar_lea.vmem [#allocation2], %s262
        %p264 = pneg %p37
        %p265 = pneg %p34
        %p266 = scmp.lt.s32.totalorder %s16, 1
        %s267 = scalar_select %p266, %s16, 1
        %s268 = smul.addr %s267, 3
        %s269 = smul.addr %s268, 4
        %s270 = scalar_lea.vmem %s1, %s269
        %p271 = pneg %p63
        %p272 = pneg %p60
        %p273 = pneg %p84
        %p274 = pneg %p81
        %p275 = pneg %p105
        %p276 = pneg %p102
        %p277 = pneg %p126
        %p278 = pneg %p123
        %p279 = pneg %p152
        %p280 = pneg %p149
        %p281 = scmp.lt.s32.totalorder %s16, 1
        %s282 = scalar_select %p281, %s16, 1
        %s283 = smul.addr %s282, 2
        %s284 = smul.addr %s283, 8
        %s285 = scalar_lea.vmem %s5, %s284
        %p286 = scmp.lt.s32.totalorder %s16, 1
        %s287 = scalar_select %p286, %s16, 1
        %s288 = smul.addr %s287, 3
        %s289 = smul.addr %s288, 4
        %s290 = scalar_lea.vmem %s1, %s289
        %p291 = scmp.lt.s32.totalorder %s16, 1
        %s292 = scalar_select %p291, %s16, 1
        %s293 = smul.addr %s292, 2
        %s294 = smul.addr %s293, 8
        %s295 = scalar_lea.vmem %s5, %s294
        %v297 = vld [vmem:[%s2] sm:$0xff]
        %v298 = vld [vmem:[%s2 + $0x8] sm:$0xf]
        %v299 = vld [vmem:[%s2 + $0xc] sm:$0xff]
        %v300 = vld [vmem:[%s2 + $0x14] sm:$0xf]
        %v301 = vld [vmem:[%s2 + $0x18] sm:$0xff]
        %v302 = vld [vmem:[%s2 + $0x20] sm:$0xf]
        %v303 = vld [vmem:[%s2 + $0x24] sm:$0xff]
        %v304 = vld [vmem:[%s2 + $0x2c] sm:$0xf]
        %v305 = vld [vmem:[%s2 + $0x30] sm:$0xff]
        %v306 = vld [vmem:[%s2 + $0x38] sm:$0xf]
        %v307 = vld [vmem:[%s2 + $0x3c] sm:$0xff]
        %v308 = vld [vmem:[%s2 + $0x44] sm:$0xf]
        %v309 = vld [vmem:[%s2 + $0x48] sm:$0xff]
        %v310 = vld [vmem:[%s2 + $0x50] sm:$0xf]
        %v311 = vld [vmem:[%s2 + $0x54] sm:$0xff]
        %v312 = vld [vmem:[%s2 + $0x5c] sm:$0xf]
        %v313 = vld [vmem:[%s2 + $0x60] sm:$0xff]
        %v314 = vld [vmem:[%s2 + $0x68] sm:$0xf]
        %v315 = vld [vmem:[%s2 + $0x6c] sm:$0xff]
        %v316 = vld [vmem:[%s2 + $0x74] sm:$0xf]
        %v317 = vld [vmem:[%s2 + $0x78] sm:$0xff]
        %v318 = vld [vmem:[%s2 + $0x80] sm:$0xf]
        %v319 = vld [vmem:[%s2 + $0x84] sm:$0xff]
        %v320 = vld [vmem:[%s2 + $0x8c] sm:$0xf]
        %v321 = vld [vmem:[%s2 + $0x90] sm:$0xff]
        %v322 = vld [vmem:[%s2 + $0x98] sm:$0xf]
        %v323 = vld [vmem:[%s2 + $0x9c] sm:$0xff]
        %v324 = vld [vmem:[%s2 + $0xa4] sm:$0xf]
        %v325 = vld [vmem:[%s2 + $0xa8] sm:$0xff]
        %v326 = vld [vmem:[%s2 + $0xb0] sm:$0xf]
        %v327 = vld [vmem:[%s2 + $0xb4] sm:$0xff]
        %v328 = vld [vmem:[%s2 + $0xbc] sm:$0xf]
        %v329 = vld [vmem:[%s3] sm:$0x1]
        %v331 = vlaneseq
        %v332 = vshrl.u32 %v331, 7
        %v333 = vsub.s32 0, %v332
        %v334 = vrot.slane %v329, %v333
        %v336 = vld [vmem:[%s256] sm:$0xff]
        %v337 = vld [vmem:[%s256 + $0x8] sm:$0xf]
        %v338 = vunpack.c.l.bf16 %v336
        %v339 = vunpack.c.h.bf16 %v336
        %v340 = vunpack.c.l.bf16 %v337
        %v373 = vunpack.c.l.b16 %v297
        %v374 = vunpack.c.h.b16 %v297
        %v375 = vunpack.c.l.b16 %v298
        %v376 = vunpack.c.l.b16 %v299
        %v377 = vunpack.c.h.b16 %v299
        %v378 = vunpack.c.l.b16 %v300
        %v379 = vunpack.c.l.b16 %v301
        %v380 = vunpack.c.h.b16 %v301
        %v381 = vunpack.c.l.b16 %v302
        %v382 = vunpack.c.l.b16 %v303
        %v383 = vunpack.c.h.b16 %v303
        %v384 = vunpack.c.l.b16 %v304
        %v385 = vunpack.c.l.b16 %v305
        %v386 = vunpack.c.h.b16 %v305
        %v387 = vunpack.c.l.b16 %v306
        %v388 = vunpack.c.l.b16 %v307
        %v389 = vunpack.c.h.b16 %v307
        %v390 = vunpack.c.l.b16 %v308
        %v391 = vunpack.c.l.b16 %v309
        %v392 = vunpack.c.h.b16 %v309
        %v393 = vunpack.c.l.b16 %v310
        %v394 = vunpack.c.l.b16 %v311
        %v395 = vunpack.c.h.b16 %v311
        %v396 = vunpack.c.l.b16 %v312
        %v397 = vunpack.c.l.b16 %v313
        %v398 = vunpack.c.h.b16 %v313
        %v399 = vunpack.c.l.b16 %v314
        %v400 = vunpack.c.l.b16 %v315
        %v401 = vunpack.c.h.b16 %v315
        %v402 = vunpack.c.l.b16 %v316
        %v403 = vunpack.c.l.b16 %v317
        %v404 = vunpack.c.h.b16 %v317
        %v405 = vunpack.c.l.b16 %v318
        %v406 = vunpack.c.l.b16 %v319
        %v407 = vunpack.c.h.b16 %v319
        %v408 = vunpack.c.l.b16 %v320
        %v409 = vunpack.c.l.b16 %v321
        %v410 = vunpack.c.h.b16 %v321
        %v411 = vunpack.c.l.b16 %v322
        %v412 = vunpack.c.l.b16 %v323
        %v413 = vunpack.c.h.b16 %v323
        %v414 = vunpack.c.l.b16 %v324
        %v415 = vunpack.c.l.b16 %v325
        %v416 = vunpack.c.h.b16 %v325
        %v417 = vunpack.c.l.b16 %v326
        %v418 = vunpack.c.l.b16 %v327
        %v419 = vunpack.c.h.b16 %v327
        %v420 = vunpack.c.l.b16 %v328
        %v421 = vpack.c.b16 %v376, %v373
        %v422 = vpack.c.b16 %v377, %v374
        %v423 = vpack.c.b16 %v378, %v375
        %v424 = vpack.c.b16 %v382, %v379
        %v425 = vpack.c.b16 %v383, %v380
        %v426 = vpack.c.b16 %v384, %v381
        %v427 = vpack.c.b16 %v388, %v385
        %v428 = vpack.c.b16 %v389, %v386
        %v429 = vpack.c.b16 %v390, %v387
        %v430 = vpack.c.b16 %v394, %v391
        %v431 = vpack.c.b16 %v395, %v392
        %v432 = vpack.c.b16 %v396, %v393
        %v433 = vpack.c.b16 %v400, %v397
        %v434 = vpack.c.b16 %v401, %v398
        %v435 = vpack.c.b16 %v402, %v399
        %v436 = vpack.c.b16 %v406, %v403
        %v437 = vpack.c.b16 %v407, %v404
        %v438 = vpack.c.b16 %v408, %v405
        %v439 = vpack.c.b16 %v412, %v409
        %v440 = vpack.c.b16 %v413, %v410
        %v441 = vpack.c.b16 %v414, %v411
        %v442 = vpack.c.b16 %v418, %v415
        %v443 = vpack.c.b16 %v419, %v416
        %v444 = vpack.c.b16 %v420, %v417
        %469 = vmatprep.subr.bf16.mxu0 %v422
        %470 = vmatpush1.bf16.msra.mxu0 %v421
        %471 = vmatprep.subr.bf16.mxu0 %v425
        %472 = vmatpush1.bf16.msra.mxu0 %v424
        %473 = vmatprep.subr.bf16.mxu0 %v428
        %474 = vmatpush1.bf16.msra.mxu0 %v427
        %475 = vmatprep.subr.bf16.mxu0 %v431
        %476 = vmatpush1.bf16.msra.mxu0 %v430
        %477 = vmatprep.subr.bf16.mxu0 %v434
        %478 = vmatpush1.bf16.msra.mxu0 %v433
        %479 = vmatprep.subr.bf16.mxu0 %v437
        %480 = vmatpush1.bf16.msra.mxu0 %v436
        %481 = vmatprep.subr.bf16.mxu0 %v440
        %482 = vmatpush1.bf16.msra.mxu0 %v439
        %483 = vmatprep.subr.bf16.mxu0 %v443
        %484 = vmatpush1.bf16.msra.mxu0 %v442
        %485 = vmatprep.subr.bf16.mxu0 0
        %486 = vmatpush1.bf16.msra.mxu0 0
        %487 = vmatprep.subr.bf16.mxu0 0
        %488 = vmatpush1.bf16.msra.mxu0 0
        %489 = vmatprep.subr.bf16.mxu0 0
        %490 = vmatpush1.bf16.msra.mxu0 0
        %491 = vmatprep.subr.bf16.mxu0 0
        %492 = vmatpush1.bf16.msra.mxu0 0
        %493 = vmatprep.subr.bf16.mxu0 0
        %494 = vmatpush1.bf16.msra.mxu0 0
        %495 = vmatprep.subr.bf16.mxu0 0
        %496 = vmatpush1.bf16.msra.mxu0 0
        %497 = vmatprep.subr.bf16.mxu0 0
        %498 = vmatpush1.bf16.msra.mxu0 0
        %499 = vmatprep.subr.bf16.mxu0 0
        %500 = vmatpush1.bf16.msra.mxu0 0
        %501 = vmatprep.mubr.bf16.mxu0 0
        %502 = vmatmul.mubr.bf16.gmra.mrb[0].mxu0 0
        %v503 = vpop.f32.mrb[0].mxu0
        %v504 = vadd.f32 0.0, %v503
        %v505 = vpop.f32.mrb[0].mxu0
        %v506 = vadd.f32 0.0, %v505
        %v507 = vpop.f32.mrb[0].mxu0
        %v508 = vpop.f32.mrb[0].mxu0
        %509 = vdwg.mxu0
        %510 = vmatprep.subr.bf16.mxu0 0
        %511 = vmatpush1.bf16.msra.mxu0 %v423
        %512 = vmatprep.subr.bf16.mxu0 0
        %513 = vmatpush1.bf16.msra.mxu0 %v426
        %514 = vmatprep.subr.bf16.mxu0 0
        %515 = vmatpush1.bf16.msra.mxu0 %v429
        %516 = vmatprep.subr.bf16.mxu0 0
        %517 = vmatpush1.bf16.msra.mxu0 %v432
        %518 = vmatprep.subr.bf16.mxu0 0
        %519 = vmatpush1.bf16.msra.mxu0 %v435
        %520 = vmatprep.subr.bf16.mxu0 0
        %521 = vmatpush1.bf16.msra.mxu0 %v438
        %522 = vmatprep.subr.bf16.mxu0 0
        %523 = vmatpush1.bf16.msra.mxu0 %v441
        %524 = vmatprep.subr.bf16.mxu0 0
        %525 = vmatpush1.bf16.msra.mxu0 %v444
        %526 = vmatprep.subr.bf16.mxu0 0
        %527 = vmatpush1.bf16.msra.mxu0 0
        %528 = vmatprep.subr.bf16.mxu0 0
        %529 = vmatpush1.bf16.msra.mxu0 0
        %530 = vmatprep.subr.bf16.mxu0 0
        %531 = vmatpush1.bf16.msra.mxu0 0
        %532 = vmatprep.subr.bf16.mxu0 0
        %533 = vmatpush1.bf16.msra.mxu0 0
        %534 = vmatprep.subr.bf16.mxu0 0
        %535 = vmatpush1.bf16.msra.mxu0 0
        %536 = vmatprep.subr.bf16.mxu0 0
        %537 = vmatpush1.bf16.msra.mxu0 0
        %538 = vmatprep.subr.bf16.mxu0 0
        %539 = vmatpush1.bf16.msra.mxu0 0
        %540 = vmatprep.subr.bf16.mxu0 0
        %541 = vmatpush1.bf16.msra.mxu0 0
        %542 = vmatprep.mubr.bf16.mxu0 0
        %543 = vmatmul.mubr.bf16.gmra.mrb[0].mxu0 0
        %v544 = vpop.f32.mrb[0].mxu0
        %v545 = vadd.f32 0.0, %v544
        %v546 = vpop.f32.mrb[0].mxu0
        %v547 = vpop.f32.mrb[0].mxu0
        %v548 = vpop.f32.mrb[0].mxu0
        %549 = vdwg.mxu0
        %v550 = vadd.f32 %v338, %v504
        %v551 = vadd.f32 %v339, %v506
        %v552 = vxor.u32 %v550, 2147483648
        %v553 = vxor.u32 %v551, 2147483648
        %v554 = vmul.f32 %v552, 1.442695
        %v555 = vpow.pop %v554
        %v556 = vmul.f32 %v553, 1.442695
        %v557 = vpow.pop %v556
        %v558 = vadd.f32 %v555, 1.0
        %v559 = vadd.f32 %v557, 1.0
        %v560 = vrcp.pop %v558
        %v561 = vmul.f32 1.0, %v560
        %v562 = vrcp.pop %v559
        %v563 = vmul.f32 1.0, %v562
        %v564 = vadd.f32 %v545, %v334
        %v565 = vmul.f32 %v561, %v564
        %v566 = vadd.f32 %v340, %v565
        %v567 = vtanh.pop %v566
        %v568 = vsub.f32 1.0, %v563
        %v569 = vmul.f32 %v568, %v567
        %v570 = vmul.f32 %v563, 0.0
        %v571 = vadd.f32 %v569, %v570
        %s572 = scalar_lea.vmem %s256, 12 [#allocation2]
        %v573 = vld [vmem:[%s572] sm:$0xff]
        %v574 = vld [vmem:[%s572 + $0x8] sm:$0xf]
        %v575 = vunpack.c.l.bf16 %v573
        %v576 = vunpack.c.h.bf16 %v573
        %v577 = vunpack.c.l.bf16 %v574
        %v578 = vpack.c.bf16 %v571, %v571
        %579 = vmatprep.subr.bf16.mxu0 %v422
        %580 = vmatpush1.bf16.msra.mxu0 %v421
        %581 = vmatprep.subr.bf16.mxu0 %v425
        %582 = vmatpush1.bf16.msra.mxu0 %v424
        %583 = vmatprep.subr.bf16.mxu0 %v428
        %584 = vmatpush1.bf16.msra.mxu0 %v427
        %585 = vmatprep.subr.bf16.mxu0 %v431
        %586 = vmatpush1.bf16.msra.mxu0 %v430
        %587 = vmatprep.subr.bf16.mxu0 %v434
        %588 = vmatpush1.bf16.msra.mxu0 %v433
        %589 = vmatprep.subr.bf16.mxu0 %v437
        %590 = vmatpush1.bf16.msra.mxu0 %v436
        %591 = vmatprep.subr.bf16.mxu0 %v440
        %592 = vmatpush1.bf16.msra.mxu0 %v439
        %593 = vmatprep.subr.bf16.mxu0 %v443
        %594 = vmatpush1.bf16.msra.mxu0 %v442
        %595 = vmatprep.subr.bf16.mxu0 0
        %596 = vmatpush1.bf16.msra.mxu0 0
        %597 = vmatprep.subr.bf16.mxu0 0
        %598 = vmatpush1.bf16.msra.mxu0 0
        %599 = vmatprep.subr.bf16.mxu0 0
        %600 = vmatpush1.bf16.msra.mxu0 0
        %601 = vmatprep.subr.bf16.mxu0 0
        %602 = vmatpush1.bf16.msra.mxu0 0
        %603 = vmatprep.subr.bf16.mxu0 0
        %604 = vmatpush1.bf16.msra.mxu0 0
        %605 = vmatprep.subr.bf16.mxu0 0
        %606 = vmatpush1.bf16.msra.mxu0 0
        %607 = vmatprep.subr.bf16.mxu0 0
        %608 = vmatpush1.bf16.msra.mxu0 0
        %609 = vmatprep.subr.bf16.mxu0 0
        %610 = vmatpush1.bf16.msra.mxu0 0
        %611 = vmatprep.mubr.bf16.mxu0 0
        %612 = vmatmul.mubr.bf16.gmra.mrb[0].mxu0 %v578
        %v613 = vpop.f32.mrb[0].mxu0
        %v614 = vadd.f32 0.0, %v613
        %v615 = vpop.f32.mrb[0].mxu0
        %v616 = vadd.f32 0.0, %v615
        %v617 = vpop.f32.mrb[0].mxu0
        %v618 = vpop.f32.mrb[0].mxu0
        %619 = vdwg.mxu0
        %620 = vmatprep.subr.bf16.mxu0 0
        %621 = vmatpush1.bf16.msra.mxu0 %v423
        %622 = vmatprep.subr.bf16.mxu0 0
        %623 = vmatpush1.bf16.msra.mxu0 %v426
        %624 = vmatprep.subr.bf16.mxu0 0
        %625 = vmatpush1.bf16.msra.mxu0 %v429
        %626 = vmatprep.subr.bf16.mxu0 0
        %627 = vmatpush1.bf16.msra.mxu0 %v432
        %628 = vmatprep.subr.bf16.mxu0 0
        %629 = vmatpush1.bf16.msra.mxu0 %v435
        %630 = vmatprep.subr.bf16.mxu0 0
        %631 = vmatpush1.bf16.msra.mxu0 %v438
        %632 = vmatprep.subr.bf16.mxu0 0
        %633 = vmatpush1.bf16.msra.mxu0 %v441
        %634 = vmatprep.subr.bf16.mxu0 0
        %635 = vmatpush1.bf16.msra.mxu0 %v444
        %636 = vmatprep.subr.bf16.mxu0 0
        %637 = vmatpush1.bf16.msra.mxu0 0
        %638 = vmatprep.subr.bf16.mxu0 0
        %639 = vmatpush1.bf16.msra.mxu0 0
        %640 = vmatprep.subr.bf16.mxu0 0
        %641 = vmatpush1.bf16.msra.mxu0 0
        %642 = vmatprep.subr.bf16.mxu0 0
        %643 = vmatpush1.bf16.msra.mxu0 0
        %644 = vmatprep.subr.bf16.mxu0 0
        %645 = vmatpush1.bf16.msra.mxu0 0
        %646 = vmatprep.subr.bf16.mxu0 0
        %647 = vmatpush1.bf16.msra.mxu0 0
        %648 = vmatprep.subr.bf16.mxu0 0
        %649 = vmatpush1.bf16.msra.mxu0 0
        %650 = vmatprep.subr.bf16.mxu0 0
        %651 = vmatpush1.bf16.msra.mxu0 0
        %652 = vmatprep.mubr.bf16.mxu0 0
        %653 = vmatmul.mubr.bf16.gmra.mrb[0].mxu0 %v578
        %v654 = vpop.f32.mrb[0].mxu0
        %v655 = vadd.f32 0.0, %v654
        %v656 = vpop.f32.mrb[0].mxu0
        %v657 = vpop.f32.mrb[0].mxu0
        %v658 = vpop.f32.mrb[0].mxu0
        %659 = vdwg.mxu0
        %v660 = vadd.f32 %v575, %v614
        %v661 = vadd.f32 %v576, %v616
        %v662 = vxor.u32 %v660, 2147483648
        %v663 = vxor.u32 %v661, 2147483648
        %v664 = vmul.f32 %v662, 1.442695
        %v665 = vpow.pop %v664
        %v666 = vmul.f32 %v663, 1.442695
        %v667 = vpow.pop %v666
        %v668 = vadd.f32 %v665, 1.0
        %v669 = vadd.f32 %v667, 1.0
        %v670 = vrcp.pop %v668
        %v671 = vmul.f32 1.0, %v670
        %v672 = vrcp.pop %v669
        %v673 = vmul.f32 1.0, %v672
        %v674 = vadd.f32 %v655, %v334
        %v675 = vmul.f32 %v671, %v674
        %v676 = vadd.f32 %v577, %v675
        %v677 = vtanh.pop %v676
        %v678 = vsub.f32 1.0, %v673
        %v679 = vmul.f32 %v678, %v677
        %v680 = vmul.f32 %v673, %v571
        %v681 = vadd.f32 %v679, %v680
        %s682 = scalar_lea.vmem %s256, 24 [#allocation2]
        %v683 = vld [vmem:[%s682] sm:$0xff]
        %v684 = vld [vmem:[%s682 + $0x8] sm:$0xf]
        %v685 = vunpack.c.l.bf16 %v683
        %v686 = vunpack.c.h.bf16 %v683
        %v687 = vunpack.c.l.bf16 %v684
        %v688 = vpack.c.bf16 %v681, %v681
        %689 = vmatprep.subr.bf16.mxu0 %v422
        %690 = vmatpush1.bf16.msra.mxu0 %v421
        %691 = vmatprep.subr.bf16.mxu0 %v425
        %692 = vmatpush1.bf16.msra.mxu0 %v424
        %693 = vmatprep.subr.bf16.mxu0 %v428
        %694 = vmatpush1.bf16.msra.mxu0 %v427
        %695 = vmatprep.subr.bf16.mxu0 %v431
        %696 = vmatpush1.bf16.msra.mxu0 %v430
        %697 = vmatprep.subr.bf16.mxu0 %v434
        %698 = vmatpush1.bf16.msra.mxu0 %v433
        %699 = vmatprep.subr.bf16.mxu0 %v437
        %700 = vmatpush1.bf16.msra.mxu0 %v436
        %701 = vmatprep.subr.bf16.mxu0 %v440
        %702 = vmatpush1.bf16.msra.mxu0 %v439
        %703 = vmatprep.subr.bf16.mxu0 %v443
        %704 = vmatpush1.bf16.msra.mxu0 %v442
        %705 = vmatprep.subr.bf16.mxu0 0
        %706 = vmatpush1.bf16.msra.mxu0 0
        %707 = vmatprep.subr.bf16.mxu0 0
        %708 = vmatpush1.bf16.msra.mxu0 0
        %709 = vmatprep.subr.bf16.mxu0 0
        %710 = vmatpush1.bf16.msra.mxu0 0
        %711 = vmatprep.subr.bf16.mxu0 0
        %712 = vmatpush1.bf16.msra.mxu0 0
        %713 = vmatprep.subr.bf16.mxu0 0
        %714 = vmatpush1.bf16.msra.mxu0 0
        %715 = vmatprep.subr.bf16.mxu0 0
        %716 = vmatpush1.bf16.msra.mxu0 0
        %717 = vmatprep.subr.bf16.mxu0 0
        %718 = vmatpush1.bf16.msra.mxu0 0
        %719 = vmatprep.subr.bf16.mxu0 0
        %720 = vmatpush1.bf16.msra.mxu0 0
        %721 = vmatprep.mubr.bf16.mxu0 0
        %722 = vmatmul.mubr.bf16.gmra.mrb[0].mxu0 %v688
        %v723 = vpop.f32.mrb[0].mxu0
        %v724 = vadd.f32 0.0, %v723
        %v725 = vpop.f32.mrb[0].mxu0
        %v726 = vadd.f32 0.0, %v725
        %v727 = vpop.f32.mrb[0].mxu0
        %v728 = vpop.f32.mrb[0].mxu0
        %729 = vdwg.mxu0
        %730 = vmatprep.subr.bf16.mxu0 0
        %731 = vmatpush1.bf16.msra.mxu0 %v423
        %732 = vmatprep.subr.bf16.mxu0 0
        %733 = vmatpush1.bf16.msra.mxu0 %v426
        %734 = vmatprep.subr.bf16.mxu0 0
        %735 = vmatpush1.bf16.msra.mxu0 %v429
        %736 = vmatprep.subr.bf16.mxu0 0
        %737 = vmatpush1.bf16.msra.mxu0 %v432
        %738 = vmatprep.subr.bf16.mxu0 0
        %739 = vmatpush1.bf16.msra.mxu0 %v435
        %740 = vmatprep.subr.bf16.mxu0 0
        %741 = vmatpush1.bf16.msra.mxu0 %v438
        %742 = vmatprep.subr.bf16.mxu0 0
        %743 = vmatpush1.bf16.msra.mxu0 %v441
        %744 = vmatprep.subr.bf16.mxu0 0
        %745 = vmatpush1.bf16.msra.mxu0 %v444
        %746 = vmatprep.subr.bf16.mxu0 0
        %747 = vmatpush1.bf16.msra.mxu0 0
        %748 = vmatprep.subr.bf16.mxu0 0
        %749 = vmatpush1.bf16.msra.mxu0 0
        %750 = vmatprep.subr.bf16.mxu0 0
        %751 = vmatpush1.bf16.msra.mxu0 0
        %752 = vmatprep.subr.bf16.mxu0 0
        %753 = vmatpush1.bf16.msra.mxu0 0
        %754 = vmatprep.subr.bf16.mxu0 0
        %755 = vmatpush1.bf16.msra.mxu0 0
        %756 = vmatprep.subr.bf16.mxu0 0
        %757 = vmatpush1.bf16.msra.mxu0 0
        %758 = vmatprep.subr.bf16.mxu0 0
        %759 = vmatpush1.bf16.msra.mxu0 0
        %760 = vmatprep.subr.bf16.mxu0 0
        %761 = vmatpush1.bf16.msra.mxu0 0
        %762 = vmatprep.mubr.bf16.mxu0 0
        %763 = vmatmul.mubr.bf16.gmra.mrb[0].mxu0 %v688
        %v764 = vpop.f32.mrb[0].mxu0
        %v765 = vadd.f32 0.0, %v764
        %v766 = vpop.f32.mrb[0].mxu0
        %v767 = vpop.f32.mrb[0].mxu0
        %v768 = vpop.f32.mrb[0].mxu0
        %769 = vdwg.mxu0
        %v770 = vadd.f32 %v685, %v724
        %v771 = vadd.f32 %v686, %v726
        %v772 = vxor.u32 %v770, 2147483648
        %v773 = vxor.u32 %v771, 2147483648
        %v774 = vmul.f32 %v772, 1.442695
        %v775 = vpow.pop %v774
        %v776 = vmul.f32 %v773, 1.442695
        %v777 = vpow.pop %v776
        %v778 = vadd.f32 %v775, 1.0
        %v779 = vadd.f32 %v777, 1.0
        %v780 = vrcp.pop %v778
        %v781 = vmul.f32 1.0, %v780
        %v782 = vrcp.pop %v779
        %v783 = vmul.f32 1.0, %v782
        %v784 = vadd.f32 %v765, %v334
        %v785 = vmul.f32 %v781, %v784
        %v786 = vadd.f32 %v687, %v785
        %v787 = vtanh.pop %v786
        %v788 = vsub.f32 1.0, %v783
        %v789 = vmul.f32 %v788, %v787
        %v790 = vmul.f32 %v783, %v681
        %v791 = vadd.f32 %v789, %v790
        %s792 = scalar_lea.vmem %s256, 36 [#allocation2]
        %v793 = vld [vmem:[%s792] sm:$0xff]
        %v794 = vld [vmem:[%s792 + $0x8] sm:$0xf]
        %v795 = vunpack.c.l.bf16 %v793
        %v796 = vunpack.c.h.bf16 %v793
        %v797 = vunpack.c.l.bf16 %v794
        %v798 = vpack.c.bf16 %v791, %v791
        %799 = vmatprep.subr.bf16.mxu0 %v422
        %800 = vmatpush1.bf16.msra.mxu0 %v421
        %801 = vmatprep.subr.bf16.mxu0 %v425
        %802 = vmatpush1.bf16.msra.mxu0 %v424
        %803 = vmatprep.subr.bf16.mxu0 %v428
        %804 = vmatpush1.bf16.msra.mxu0 %v427
        %805 = vmatprep.subr.bf16.mxu0 %v431
        %806 = vmatpush1.bf16.msra.mxu0 %v430
        %807 = vmatprep.subr.bf16.mxu0 %v434
        %808 = vmatpush1.bf16.msra.mxu0 %v433
        %809 = vmatprep.subr.bf16.mxu0 %v437
        %810 = vmatpush1.bf16.msra.mxu0 %v436
        %811 = vmatprep.subr.bf16.mxu0 %v440
        %812 = vmatpush1.bf16.msra.mxu0 %v439
        %813 = vmatprep.subr.bf16.mxu0 %v443
        %814 = vmatpush1.bf16.msra.mxu0 %v442
        %815 = vmatprep.subr.bf16.mxu0 0
        %816 = vmatpush1.bf16.msra.mxu0 0
        %817 = vmatprep.subr.bf16.mxu0 0
        %818 = vmatpush1.bf16.msra.mxu0 0
        %819 = vmatprep.subr.bf16.mxu0 0
        %820 = vmatpush1.bf16.msra.mxu0 0
        %821 = vmatprep.subr.bf16.mxu0 0
        %822 = vmatpush1.bf16.msra.mxu0 0
        %823 = vmatprep.subr.bf16.mxu0 0
        %824 = vmatpush1.bf16.msra.mxu0 0
        %825 = vmatprep.subr.bf16.mxu0 0
        %826 = vmatpush1.bf16.msra.mxu0 0
        %827 = vmatprep.subr.bf16.mxu0 0
        %828 = vmatpush1.bf16.msra.mxu0 0
        %829 = vmatprep.subr.bf16.mxu0 0
        %830 = vmatpush1.bf16.msra.mxu0 0
        %831 = vmatprep.mubr.bf16.mxu0 0
        %832 = vmatmul.mubr.bf16.gmra.mrb[0].mxu0 %v798
        %v833 = vpop.f32.mrb[0].mxu0
        %v834 = vadd.f32 0.0, %v833
        %v835 = vpop.f32.mrb[0].mxu0
        %v836 = vadd.f32 0.0, %v835
        %v837 = vpop.f32.mrb[0].mxu0
        %v838 = vpop.f32.mrb[0].mxu0
        %839 = vdwg.mxu0
        %840 = vmatprep.subr.bf16.mxu0 0
        %841 = vmatpush1.bf16.msra.mxu0 %v423
        %842 = vmatprep.subr.bf16.mxu0 0
        %843 = vmatpush1.bf16.msra.mxu0 %v426
        %844 = vmatprep.subr.bf16.mxu0 0
        %845 = vmatpush1.bf16.msra.mxu0 %v429
        %846 = vmatprep.subr.bf16.mxu0 0
        %847 = vmatpush1.bf16.msra.mxu0 %v432
        %848 = vmatprep.subr.bf16.mxu0 0
        %849 = vmatpush1.bf16.msra.mxu0 %v435
        %850 = vmatprep.subr.bf16.mxu0 0
        %851 = vmatpush1.bf16.msra.mxu0 %v438
        %852 = vmatprep.subr.bf16.mxu0 0
        %853 = vmatpush1.bf16.msra.mxu0 %v441
        %854 = vmatprep.subr.bf16.mxu0 0
        %855 = vmatpush1.bf16.msra.mxu0 %v444
        %856 = vmatprep.subr.bf16.mxu0 0
        %857 = vmatpush1.bf16.msra.mxu0 0
        %858 = vmatprep.subr.bf16.mxu0 0
        %859 = vmatpush1.bf16.msra.mxu0 0
        %860 = vmatprep.subr.bf16.mxu0 0
        %861 = vmatpush1.bf16.msra.mxu0 0
        %862 = vmatprep.subr.bf16.mxu0 0
        %863 = vmatpush1.bf16.msra.mxu0 0
        %864 = vmatprep.subr.bf16.mxu0 0
        %865 = vmatpush1.bf16.msra.mxu0 0
        %866 = vmatprep.subr.bf16.mxu0 0
        %867 = vmatpush1.bf16.msra.mxu0 0
        %868 = vmatprep.subr.bf16.mxu0 0
        %869 = vmatpush1.bf16.msra.mxu0 0
        %870 = vmatprep.subr.bf16.mxu0 0
        %871 = vmatpush1.bf16.msra.mxu0 0
        %872 = vmatprep.mubr.bf16.mxu0 0
        %873 = vmatmul.mubr.bf16.gmra.mrb[0].mxu0 %v798
        %v874 = vpop.f32.mrb[0].mxu0
        %v875 = vadd.f32 0.0, %v874
        %v876 = vpop.f32.mrb[0].mxu0
        %v877 = vpop.f32.mrb[0].mxu0
        %v878 = vpop.f32.mrb[0].mxu0
        %879 = vdwg.mxu0
        %v880 = vadd.f32 %v795, %v834
        %v881 = vadd.f32 %v796, %v836
        %v882 = vxor.u32 %v880, 2147483648
        %v883 = vxor.u32 %v881, 2147483648
        %v884 = vmul.f32 %v882, 1.442695
        %v885 = vpow.pop %v884
        %v886 = vmul.f32 %v883, 1.442695
        %v887 = vpow.pop %v886
        %v888 = vadd.f32 %v885, 1.0
        %v889 = vadd.f32 %v887, 1.0
        %v890 = vrcp.pop %v888
        %v891 = vmul.f32 1.0, %v890
        %v892 = vrcp.pop %v889
        %v893 = vmul.f32 1.0, %v892
        %v894 = vadd.f32 %v875, %v334
        %v895 = vmul.f32 %v891, %v894
        %v896 = vadd.f32 %v797, %v895
        %v897 = vtanh.pop %v896
        %v898 = vsub.f32 1.0, %v893
        %v899 = vmul.f32 %v898, %v897
        %v900 = vmul.f32 %v893, %v791
        %v901 = vadd.f32 %v899, %v900
        %s902 = scalar_lea.vmem %s256, 48 [#allocation2]
        %v903 = vld [vmem:[%s902] sm:$0xff]
        %v904 = vld [vmem:[%s902 + $0x8] sm:$0xf]
        %v905 = vunpack.c.l.bf16 %v903
        %v906 = vunpack.c.h.bf16 %v903
        %v907 = vunpack.c.l.bf16 %v904
        %v908 = vpack.c.bf16 %v901, %v901
        %909 = vmatprep.subr.bf16.mxu0 %v422
        %910 = vmatpush1.bf16.msra.mxu0 %v421
        %911 = vmatprep.subr.bf16.mxu0 %v425
        %912 = vmatpush1.bf16.msra.mxu0 %v424
        %913 = vmatprep.subr.bf16.mxu0 %v428
        %914 = vmatpush1.bf16.msra.mxu0 %v427
        %915 = vmatprep.subr.bf16.mxu0 %v431
        %916 = vmatpush1.bf16.msra.mxu0 %v430
        %917 = vmatprep.subr.bf16.mxu0 %v434
        %918 = vmatpush1.bf16.msra.mxu0 %v433
        %919 = vmatprep.subr.bf16.mxu0 %v437
        %920 = vmatpush1.bf16.msra.mxu0 %v436
        %921 = vmatprep.subr.bf16.mxu0 %v440
        %922 = vmatpush1.bf16.msra.mxu0 %v439
        %923 = vmatprep.subr.bf16.mxu0 %v443
        %924 = vmatpush1.bf16.msra.mxu0 %v442
        %925 = vmatprep.subr.bf16.mxu0 0
        %926 = vmatpush1.bf16.msra.mxu0 0
        %927 = vmatprep.subr.bf16.mxu0 0
        %928 = vmatpush1.bf16.msra.mxu0 0
        %929 = vmatprep.subr.bf16.mxu0 0
        %930 = vmatpush1.bf16.msra.mxu0 0
        %931 = vmatprep.subr.bf16.mxu0 0
        %932 = vmatpush1.bf16.msra.mxu0 0
        %933 = vmatprep.subr.bf16.mxu0 0
        %934 = vmatpush1.bf16.msra.mxu0 0
        %935 = vmatprep.subr.bf16.mxu0 0
        %936 = vmatpush1.bf16.msra.mxu0 0
        %937 = vmatprep.subr.bf16.mxu0 0
        %938 = vmatpush1.bf16.msra.mxu0 0
        %939 = vmatprep.subr.bf16.mxu0 0
        %940 = vmatpush1.bf16.msra.mxu0 0
        %941 = vmatprep.mubr.bf16.mxu0 0
        %942 = vmatmul.mubr.bf16.gmra.mrb[0].mxu0 %v908
        %v943 = vpop.f32.mrb[0].mxu0
        %v944 = vadd.f32 0.0, %v943
        %v945 = vpop.f32.mrb[0].mxu0
        %v946 = vadd.f32 0.0, %v945
        %v947 = vpop.f32.mrb[0].mxu0
        %v948 = vpop.f32.mrb[0].mxu0
        %949 = vdwg.mxu0
        %950 = vmatprep.subr.bf16.mxu0 0
        %951 = vmatpush1.bf16.msra.mxu0 %v423
        %952 = vmatprep.subr.bf16.mxu0 0
        %953 = vmatpush1.bf16.msra.mxu0 %v426
        %954 = vmatprep.subr.bf16.mxu0 0
        %955 = vmatpush1.bf16.msra.mxu0 %v429
        %956 = vmatprep.subr.bf16.mxu0 0
        %957 = vmatpush1.bf16.msra.mxu0 %v432
        %958 = vmatprep.subr.bf16.mxu0 0
        %959 = vmatpush1.bf16.msra.mxu0 %v435
        %960 = vmatprep.subr.bf16.mxu0 0
        %961 = vmatpush1.bf16.msra.mxu0 %v438
        %962 = vmatprep.subr.bf16.mxu0 0
        %963 = vmatpush1.bf16.msra.mxu0 %v441
        %964 = vmatprep.subr.bf16.mxu0 0
        %965 = vmatpush1.bf16.msra.mxu0 %v444
        %966 = vmatprep.subr.bf16.mxu0 0
        %967 = vmatpush1.bf16.msra.mxu0 0
        %968 = vmatprep.subr.bf16.mxu0 0
        %969 = vmatpush1.bf16.msra.mxu0 0
        %970 = vmatprep.subr.bf16.mxu0 0
        %971 = vmatpush1.bf16.msra.mxu0 0
        %972 = vmatprep.subr.bf16.mxu0 0
        %973 = vmatpush1.bf16.msra.mxu0 0
        %974 = vmatprep.subr.bf16.mxu0 0
        %975 = vmatpush1.bf16.msra.mxu0 0
        %976 = vmatprep.subr.bf16.mxu0 0
        %977 = vmatpush1.bf16.msra.mxu0 0
        %978 = vmatprep.subr.bf16.mxu0 0
        %979 = vmatpush1.bf16.msra.mxu0 0
        %980 = vmatprep.subr.bf16.mxu0 0
        %981 = vmatpush1.bf16.msra.mxu0 0
        %982 = vmatprep.mubr.bf16.mxu0 0
        %983 = vmatmul.mubr.bf16.gmra.mrb[0].mxu0 %v908
        %v984 = vpop.f32.mrb[0].mxu0
        %v985 = vadd.f32 0.0, %v984
        %v986 = vpop.f32.mrb[0].mxu0
        %v987 = vpop.f32.mrb[0].mxu0
        %v988 = vpop.f32.mrb[0].mxu0
        %989 = vdwg.mxu0
        %v990 = vadd.f32 %v905, %v944
        %v991 = vadd.f32 %v906, %v946
        %v992 = vxor.u32 %v990, 2147483648
        %v993 = vxor.u32 %v991, 2147483648
        %v994 = vmul.f32 %v992, 1.442695
        %v995 = vpow.pop %v994
        %v996 = vmul.f32 %v993, 1.442695
        %v997 = vpow.pop %v996
        %v998 = vadd.f32 %v995, 1.0
        %v999 = vadd.f32 %v997, 1.0
        %v1000 = vrcp.pop %v998
        %v1001 = vmul.f32 1.0, %v1000
        %v1002 = vrcp.pop %v999
        %v1003 = vmul.f32 1.0, %v1002
        %v1004 = vadd.f32 %v985, %v334
        %v1005 = vmul.f32 %v1001, %v1004
        %v1006 = vadd.f32 %v907, %v1005
        %v1007 = vtanh.pop %v1006
        %v1008 = vsub.f32 1.0, %v1003
        %v1009 = vmul.f32 %v1008, %v1007
        %v1010 = vmul.f32 %v1003, %v901
        %v1011 = vadd.f32 %v1009, %v1010
        %s1012 = scalar_lea.vmem %s256, 60 [#allocation2]
        %v1013 = vld [vmem:[%s1012] sm:$0xff]
        %v1014 = vld [vmem:[%s1012 + $0x8] sm:$0xf]
        %v1015 = vunpack.c.l.bf16 %v1013
        %v1016 = vunpack.c.h.bf16 %v1013
        %v1017 = vunpack.c.l.bf16 %v1014
        %v1018 = vpack.c.bf16 %v1011, %v1011
        %1019 = vmatprep.subr.bf16.mxu0 %v422
        %1020 = vmatpush1.bf16.msra.mxu0 %v421
        %1021 = vmatprep.subr.bf16.mxu0 %v425
        %1022 = vmatpush1.bf16.msra.mxu0 %v424
        %1023 = vmatprep.subr.bf16.mxu0 %v428
        %1024 = vmatpush1.bf16.msra.mxu0 %v427
        %1025 = vmatprep.subr.bf16.mxu0 %v431
        %1026 = vmatpush1.bf16.msra.mxu0 %v430
        %1027 = vmatprep.subr.bf16.mxu0 %v434
        %1028 = vmatpush1.bf16.msra.mxu0 %v433
        %1029 = vmatprep.subr.bf16.mxu0 %v437
        %1030 = vmatpush1.bf16.msra.mxu0 %v436
        %1031 = vmatprep.subr.bf16.mxu0 %v440
        %1032 = vmatpush1.bf16.msra.mxu0 %v439
        %1033 = vmatprep.subr.bf16.mxu0 %v443
        %1034 = vmatpush1.bf16.msra.mxu0 %v442
        %1035 = vmatprep.subr.bf16.mxu0 0
        %1036 = vmatpush1.bf16.msra.mxu0 0
        %1037 = vmatprep.subr.bf16.mxu0 0
        %1038 = vmatpush1.bf16.msra.mxu0 0
        %1039 = vmatprep.subr.bf16.mxu0 0
        %1040 = vmatpush1.bf16.msra.mxu0 0
        %1041 = vmatprep.subr.bf16.mxu0 0
        %1042 = vmatpush1.bf16.msra.mxu0 0
        %1043 = vmatprep.subr.bf16.mxu0 0
        %1044 = vmatpush1.bf16.msra.mxu0 0
        %1045 = vmatprep.subr.bf16.mxu0 0
        %1046 = vmatpush1.bf16.msra.mxu0 0
        %1047 = vmatprep.subr.bf16.mxu0 0
        %1048 = vmatpush1.bf16.msra.mxu0 0
        %1049 = vmatprep.subr.bf16.mxu0 0
        %1050 = vmatpush1.bf16.msra.mxu0 0
        %1051 = vmatprep.mubr.bf16.mxu0 0
        %1052 = vmatmul.mubr.bf16.gmra.mrb[0].mxu0 %v1018
        %v1053 = vpop.f32.mrb[0].mxu0
        %v1054 = vadd.f32 0.0, %v1053
        %v1055 = vpop.f32.mrb[0].mxu0
        %v1056 = vadd.f32 0.0, %v1055
        %v1057 = vpop.f32.mrb[0].mxu0
        %v1058 = vpop.f32.mrb[0].mxu0
        %1059 = vdwg.mxu0
        %1060 = vmatprep.subr.bf16.mxu0 0
        %1061 = vmatpush1.bf16.msra.mxu0 %v423
        %1062 = vmatprep.subr.bf16.mxu0 0
        %1063 = vmatpush1.bf16.msra.mxu0 %v426
        %1064 = vmatprep.subr.bf16.mxu0 0
        %1065 = vmatpush1.bf16.msra.mxu0 %v429
        %1066 = vmatprep.subr.bf16.mxu0 0
        %1067 = vmatpush1.bf16.msra.mxu0 %v432
        %1068 = vmatprep.subr.bf16.mxu0 0
        %1069 = vmatpush1.bf16.msra.mxu0 %v435
        %1070 = vmatprep.subr.bf16.mxu0 0
        %1071 = vmatpush1.bf16.msra.mxu0 %v438
        %1072 = vmatprep.subr.bf16.mxu0 0
        %1073 = vmatpush1.bf16.msra.mxu0 %v441
        %1074 = vmatprep.subr.bf16.mxu0 0
        %1075 = vmatpush1.bf16.msra.mxu0 %v444
        %1076 = vmatprep.subr.bf16.mxu0 0
        %1077 = vmatpush1.bf16.msra.mxu0 0
        %1078 = vmatprep.subr.bf16.mxu0 0
        %1079 = vmatpush1.bf16.msra.mxu0 0
        %1080 = vmatprep.subr.bf16.mxu0 0
        %1081 = vmatpush1.bf16.msra.mxu0 0
        %1082 = vmatprep.subr.bf16.mxu0 0
        %1083 = vmatpush1.bf16.msra.mxu0 0
        %1084 = vmatprep.subr.bf16.mxu0 0
        %1085 = vmatpush1.bf16.msra.mxu0 0
        %1086 = vmatprep.subr.bf16.mxu0 0
        %1087 = vmatpush1.bf16.msra.mxu0 0
        %1088 = vmatprep.subr.bf16.mxu0 0
        %1089 = vmatpush1.bf16.msra.mxu0 0
        %1090 = vmatprep.subr.bf16.mxu0 0
        %1091 = vmatpush1.bf16.msra.mxu0 0
        %1092 = vmatprep.mubr.bf16.mxu0 0
        %1093 = vmatmul.mubr.bf16.gmra.mrb[0].mxu0 %v1018
        %v1094 = vpop.f32.mrb[0].mxu0
        %v1095 = vadd.f32 0.0, %v1094
        %v1096 = vpop.f32.mrb[0].mxu0
        %v1097 = vpop.f32.mrb[0].mxu0
        %v1098 = vpop.f32.mrb[0].mxu0
        %1099 = vdwg.mxu0
        %v1100 = vadd.f32 %v1015, %v1054
        %v1101 = vadd.f32 %v1016, %v1056
        %v1102 = vxor.u32 %v1100, 2147483648
        %v1103 = vxor.u32 %v1101, 2147483648
        %v1104 = vmul.f32 %v1102, 1.442695
        %v1105 = vpow.pop %v1104
        %v1106 = vmul.f32 %v1103, 1.442695
        %v1107 = vpow.pop %v1106
        %v1108 = vadd.f32 %v1105, 1.0
        %v1109 = vadd.f32 %v1107, 1.0
        %v1110 = vrcp.pop %v1108
        %v1111 = vmul.f32 1.0, %v1110
        %v1112 = vrcp.pop %v1109
        %v1113 = vmul.f32 1.0, %v1112
        %v1114 = vadd.f32 %v1095, %v334
        %v1115 = vmul.f32 %v1111, %v1114
        %v1116 = vadd.f32 %v1017, %v1115
        %v1117 = vtanh.pop %v1116
        %v1118 = vsub.f32 1.0, %v1113
        %v1119 = vmul.f32 %v1118, %v1117
        %v1120 = vmul.f32 %v1113, %v1011
        %v1121 = vadd.f32 %v1119, %v1120
        %v1122 = vld [vmem:[%s290] sm:$0xff]
        %v1123 = vld [vmem:[%s290 + $0x8] sm:$0xf]
        %v1124 = vunpack.c.l.bf16 %v1122
        %v1125 = vunpack.c.h.bf16 %v1122
        %v1126 = vunpack.c.l.bf16 %v1123
        %v1127 = vxor.u32 %v1124, 2147483648
        %v1128 = vxor.u32 %v1125, 2147483648
        %v1129 = vmul.f32 %v1127, 1.442695
        %v1130 = vpow.pop %v1129
        %v1131 = vmul.f32 %v1128, 1.442695
        %v1132 = vpow.pop %v1131
        %v1133 = vadd.f32 %v1130, 1.0
        %v1134 = vadd.f32 %v1132, 1.0
        %v1135 = vrcp.pop %v1133
        %v1136 = vmul.f32 1.0, %v1135
        %v1137 = vrcp.pop %v1134
        %v1138 = vmul.f32 1.0, %v1137
        %v1139 = vld [vmem:[%s4] sm:$0x1]
        %v1141 = vlaneseq
        %v1142 = vshrl.u32 %v1141, 7
        %v1143 = vsub.s32 0, %v1142
        %v1144 = vrot.slane %v1139, %v1143
        %v1146 = vmul.f32 %v1136, %v1144
        %v1147 = vadd.f32 %v1126, %v1146
        %v1148 = vtanh.pop %v1147
        %v1149 = vsub.f32 1.0, %v1138
        %v1150 = vmul.f32 %v1149, %v1148
        %1151 = vst [vmem:[%s295] sm:$0xff] %v1121
        %1152 = vst [vmem:[%s295 + $0x8] sm:$0xff] %v1150
        %p1153 = scmp.lt.s32.totalorder %s16, 1
        %s1154 = scalar_select %p1153, %s16, 1
        %s1155 = smul.addr %s1154, 2
        %s1156 = smul.addr %s1155, 8
        %s1157 = scalar_lea.vmem %s5, %s1156
        // Predicated region
        $region67: #{hierarchical_encoder.3} parent=61 // pred_check
          %p1158 = pneg %p149
        $region68: #{hierarchical_encoder.3} parent=61 // pred_check_branch
          %1160 = sbr.rel (%p1158) target = $region70
        $region69: #{hierarchical_encoder.3} parent=61 // pred_region
          _
        $region70: #{hierarchical_encoder.3} parent=61 // pred_fallthru
          _
      $region62: #{hierarchical_encoder.3} parent=5 // pred_fallthru
        _
      %p1161 = scmp.le.s32.totalorder 2, %s11
      // Predicated region
      $region71: #{hierarchical_encoder.3} parent=5 // pred_check
        %p1162 = pneg %p1161
      $region72: #{hierarchical_encoder.3} parent=5 // pred_check_branch
        %1164 = sbr.rel (%p1162) target = $region74
      $region73: #{hierarchical_encoder.3} parent=5 // pred_region
        %s1165 = ssub.s32 %s11, 2
        // Predicated region
        $region75: #{hierarchical_encoder.3} parent=73 // pred_check
          %p1166 = pneg %p155
        $region76: #{hierarchical_encoder.3} parent=73 // pred_check_branch
          %1168 = sbr.rel (%p1166) target = $region78
        $region77: #{hierarchical_encoder.3} parent=73 // pred_region
          %p1169 = scmp.lt.s32.totalorder %s17, 1
          %s1170 = scalar_select %p1169, %s17, 1
          %s1171 = smul.addr %s1170, 2
          %s1172 = smul.addr %s1171, 8
          %s1173 = scalar_lea.vmem %s5, %s1172
        $region78: #{hierarchical_encoder.3} parent=73 // pred_fallthru
          _
      $region74: #{hierarchical_encoder.3} parent=5 // pred_fallthru
        _
    $region6: #{hierarchical_encoder.3} parent=1 // loop_footer
      %s15 = sadd.s32 1, %s11
    $region7: #{hierarchical_encoder.3} parent=1 // loop_footer_branch
      %10 = sbr.rel target = $region3
    $region8: #{hierarchical_encoder.3} parent=1 // loop_exit
      _

// kernel: hierarchical_encoder.4
$region0: #{hierarchical_encoder.4}
  #allocation0 [shape = 'u32[]', space=smem, size = 0x4, offset = 0x4, fixed_abs, tag = 'smem constant byte address 0x4 - core index']
  #allocation1 [shape = 'u32[144,128]{1,0:T(1,128)}', space=vmem, size = 0x12000, scoped, tag = 'internal scratch']
  #allocation2 [shape = 'f32[5,8,128]{2,1,0:T(8,128)}', space=vmem, size = 0x5000, scoped, tag = 'scratch operand']
  %s0 = inlined_call_operand.vmem [shape: bf16[5,8,384], index: 0, kind: input, shape index: {}]
  %s1 = inlined_call_operand.vmem [shape: bf16[5,8,384], index: 1, kind: input, shape index: {}]
  %s2 = inlined_call_operand.vmem [shape: bf16[128,384], index: 2, kind: input, shape index: {}]
  %s3 = inlined_call_operand.vmem [shape: bf16[128,384], index: 3, kind: input, shape index: {}]
  %s4 = inlined_call_operand.vmem [shape: f32[1,128], index: 4, kind: input, shape index: {}]
  %s5 = inlined_call_operand.vmem [shape: f32[1,128], index: 5, kind: input, shape index: {}]
  %s6 = inlined_call_operand.vmem [shape: f32[5,8,128], index: 6, kind: input, shape index: {}]
  %s7 = inlined_call_operand.vmem [shape: f32[5,8,128], index: 7, kind: input, shape index: {}]
  %s8 = inlined_call_operand.vmem [shape: f32[5,8,256], index: 8, kind: output, shape index: {}]
  %s9 = sld [smem:[#allocation0]]
  $region42: #{hierarchical_encoder.4} parent=0
    _
  %s11 = ssub.s32 1, %s9
  %s12 = scalar_select 0, %s11, %s9
  // Predicated region
  $region2: #{hierarchical_encoder.4} parent=0 // pred_check
    _
  $region3: #{hierarchical_encoder.4} parent=0 // pred_check_branch
    %14 = sbr.rel (0) target = $region5
  $region4: #{hierarchical_encoder.4} parent=0 // pred_region
    _
  $region5: #{hierarchical_encoder.4} parent=0 // pred_fallthru
    _
  // Predicated region
  $region6: #{hierarchical_encoder.4} parent=0 // pred_check
    _
  $region7: #{hierarchical_encoder.4} parent=0 // pred_check_branch
    %16 = sbr.rel (0) target = $region9
  $region8: #{hierarchical_encoder.4} parent=0 // pred_region
    _
  $region9: #{hierarchical_encoder.4} parent=0 // pred_fallthru
    _
  // Predicated region
  $region10: #{hierarchical_encoder.4} parent=0 // pred_check
    _
  $region11: #{hierarchical_encoder.4} parent=0 // pred_check_branch
    %18 = sbr.rel (0) target = $region13
  $region12: #{hierarchical_encoder.4} parent=0 // pred_region
    _
  $region13: #{hierarchical_encoder.4} parent=0 // pred_fallthru
    _
  // Predicated region
  $region14: #{hierarchical_encoder.4} parent=0 // pred_check
    _
  $region15: #{hierarchical_encoder.4} parent=0 // pred_check_branch
    %20 = sbr.rel (0) target = $region17
  $region16: #{hierarchical_encoder.4} parent=0 // pred_region
    _
  $region17: #{hierarchical_encoder.4} parent=0 // pred_fallthru
    _
  // Predicated region
  $region18: #{hierarchical_encoder.4} parent=0 // pred_check
    _
  $region19: #{hierarchical_encoder.4} parent=0 // pred_check_branch
    %22 = sbr.rel (0) target = $region21
  $region20: #{hierarchical_encoder.4} parent=0 // pred_region
    _
  $region21: #{hierarchical_encoder.4} parent=0 // pred_fallthru
    _
  // Predicated region
  $region22: #{hierarchical_encoder.4} parent=0 // pred_check
    _
  $region23: #{hierarchical_encoder.4} parent=0 // pred_check_branch
    %24 = sbr.rel (0) target = $region25
  $region24: #{hierarchical_encoder.4} parent=0 // pred_region
    _
  $region25: #{hierarchical_encoder.4} parent=0 // pred_fallthru
    _
  // Predicated region
  $region26: #{hierarchical_encoder.4} parent=0 // pred_check
    _
  $region27: #{hierarchical_encoder.4} parent=0 // pred_check_branch
    %26 = sbr.rel (0) target = $region29
  $region28: #{hierarchical_encoder.4} parent=0 // pred_region
    _
  $region29: #{hierarchical_encoder.4} parent=0 // pred_fallthru
    _
  // Predicated region
  $region30: #{hierarchical_encoder.4} parent=0 // pred_check
    _
  $region31: #{hierarchical_encoder.4} parent=0 // pred_check_branch
    %28 = sbr.rel (0) target = $region33
  $region32: #{hierarchical_encoder.4} parent=0 // pred_region
    _
  $region33: #{hierarchical_encoder.4} parent=0 // pred_fallthru
    _
  %v30 = vld [vmem:[%s2] sm:$0xff]
  %v31 = vld [vmem:[%s2 + $0x8] sm:$0xf]
  %v32 = vld [vmem:[%s2 + $0xc] sm:$0xff]
  %v33 = vld [vmem:[%s2 + $0x14] sm:$0xf]
  %v34 = vld [vmem:[%s2 + $0x18] sm:$0xff]
  %v35 = vld [vmem:[%s2 + $0x20] sm:$0xf]
  %v36 = vld [vmem:[%s2 + $0x24] sm:$0xff]
  %v37 = vld [vmem:[%s2 + $0x2c] sm:$0xf]
  %v38 = vld [vmem:[%s2 + $0x30] sm:$0xff]
  %v39 = vld [vmem:[%s2 + $0x38] sm:$0xf]
  %v40 = vld [vmem:[%s2 + $0x3c] sm:$0xff]
  %v41 = vld [vmem:[%s2 + $0x44] sm:$0xf]
  %v42 = vld [vmem:[%s2 + $0x48] sm:$0xff]
  %v43 = vld [vmem:[%s2 + $0x50] sm:$0xf]
  %v44 = vld [vmem:[%s2 + $0x54] sm:$0xff]
  %v45 = vld [vmem:[%s2 + $0x5c] sm:$0xf]
  %v46 = vld [vmem:[%s2 + $0x60] sm:$0xff]
  %v47 = vld [vmem:[%s2 + $0x68] sm:$0xf]
  %v48 = vld [vmem:[%s2 + $0x6c] sm:$0xff]
  %v49 = vld [vmem:[%s2 + $0x74] sm:$0xf]
  %v50 = vld [vmem:[%s2 + $0x78] sm:$0xff]
  %v51 = vld [vmem:[%s2 + $0x80] sm:$0xf]
  %v52 = vld [vmem:[%s2 + $0x84] sm:$0xff]
  %v53 = vld [vmem:[%s2 + $0x8c] sm:$0xf]
  %v54 = vld [vmem:[%s2 + $0x90] sm:$0xff]
  %v55 = vld [vmem:[%s2 + $0x98] sm:$0xf]
  %v56 = vld [vmem:[%s2 + $0x9c] sm:$0xff]
  %v57 = vld [vmem:[%s2 + $0xa4] sm:$0xf]
  %v58 = vld [vmem:[%s2 + $0xa8] sm:$0xff]
  %v59 = vld [vmem:[%s2 + $0xb0] sm:$0xf]
  %v60 = vld [vmem:[%s2 + $0xb4] sm:$0xff]
  %v61 = vld [vmem:[%s2 + $0xbc] sm:$0xf]
  %v62 = vld [vmem:[%s3] sm:$0xff]
  %v63 = vld [vmem:[%s3 + $0x8] sm:$0xf]
  %v64 = vld [vmem:[%s3 + $0xc] sm:$0xff]
  %v65 = vld [vmem:[%s3 + $0x14] sm:$0xf]
  %v66 = vld [vmem:[%s3 + $0x18] sm:$0xff]
  %v67 = vld [vmem:[%s3 + $0x20] sm:$0xf]
  %v68 = vld [vmem:[%s3 + $0x24] sm:$0xff]
  %v69 = vld [vmem:[%s3 + $0x2c] sm:$0xf]
  %v70 = vld [vmem:[%s3 + $0x30] sm:$0xff]
  %v71 = vld [vmem:[%s3 + $0x38] sm:$0xf]
  %v72 = vld [vmem:[%s3 + $0x3c] sm:$0xff]
  %v73 = vld [vmem:[%s3 + $0x44] sm:$0xf]
  %v74 = vld [vmem:[%s3 + $0x48] sm:$0xff]
  %v75 = vld [vmem:[%s3 + $0x50] sm:$0xf]
  %v76 = vld [vmem:[%s3 + $0x54] sm:$0xff]
  %v77 = vld [vmem:[%s3 + $0x5c] sm:$0xf]
  %v78 = vld [vmem:[%s3 + $0x60] sm:$0xff]
  %v79 = vld [vmem:[%s3 + $0x68] sm:$0xf]
  %v80 = vld [vmem:[%s3 + $0x6c] sm:$0xff]
  %v81 = vld [vmem:[%s3 + $0x74] sm:$0xf]
  %v82 = vld [vmem:[%s3 + $0x78] sm:$0xff]
  %v83 = vld [vmem:[%s3 + $0x80] sm:$0xf]
  %v84 = vld [vmem:[%s3 + $0x84] sm:$0xff]
  %v85 = vld [vmem:[%s3 + $0x8c] sm:$0xf]
  %v86 = vld [vmem:[%s3 + $0x90] sm:$0xff]
  %v87 = vld [vmem:[%s3 + $0x98] sm:$0xf]
  %v88 = vld [vmem:[%s3 + $0x9c] sm:$0xff]
  %v89 = vld [vmem:[%s3 + $0xa4] sm:$0xf]
  %v90 = vld [vmem:[%s3 + $0xa8] sm:$0xff]
  %v91 = vld [vmem:[%s3 + $0xb0] sm:$0xf]
  %v92 = vld [vmem:[%s3 + $0xb4] sm:$0xff]
  %v93 = vld [vmem:[%s3 + $0xbc] sm:$0xf]
  %v94 = vld [vmem:[%s4] sm:$0x1]
  %v96 = vlaneseq
  %v97 = vshrl.u32 %v96, 7
  %v98 = vsub.s32 0, %v97
  %v99 = vrot.slane %v94, %v98
  %v101 = vld [vmem:[%s5] sm:$0x1]
  %v103 = vlaneseq
  %v104 = vshrl.u32 %v103, 7
  %v105 = vsub.s32 0, %v104
  %v106 = vrot.slane %v101, %v105
  %s108 = scalar_lea.vmem %s7, 32
  %v109 = vld [vmem:[%s108] sm:$0xff]
  %v110 = vmul.f32 %v109, 0.0
  %s111 = scalar_lea.vmem %s1, 48
  %v112 = vld [vmem:[%s111] sm:$0xff]
  %v113 = vld [vmem:[%s111 + $0x8] sm:$0xf]
  %v114 = vunpack.c.l.bf16 %v112
  %v115 = vunpack.c.h.bf16 %v112
  %v116 = vunpack.c.l.bf16 %v113
  %v117 = vpack.c.bf16 %v110, %v110
  %v150 = vunpack.c.l.b16 %v62
  %v151 = vunpack.c.h.b16 %v62
  %v152 = vunpack.c.l.b16 %v63
  %v153 = vunpack.c.l.b16 %v64
  %v154 = vunpack.c.h.b16 %v64
  %v155 = vunpack.c.l.b16 %v65
  %v156 = vunpack.c.l.b16 %v66
  %v157 = vunpack.c.h.b16 %v66
  %v158 = vunpack.c.l.b16 %v67
  %v159 = vunpack.c.l.b16 %v68
  %v160 = vunpack.c.h.b16 %v68
  %v161 = vunpack.c.l.b16 %v69
  %v162 = vunpack.c.l.b16 %v70
  %v163 = vunpack.c.h.b16 %v70
  %v164 = vunpack.c.l.b16 %v71
  %v165 = vunpack.c.l.b16 %v72
  %v166 = vunpack.c.h.b16 %v72
  %v167 = vunpack.c.l.b16 %v73
  %v168 = vunpack.c.l.b16 %v74
  %v169 = vunpack.c.h.b16 %v74
  %v170 = vunpack.c.l.b16 %v75
  %v171 = vunpack.c.l.b16 %v76
  %v172 = vunpack.c.h.b16 %v76
  %v173 = vunpack.c.l.b16 %v77
  %v174 = vunpack.c.l.b16 %v78
  %v175 = vunpack.c.h.b16 %v78
  %v176 = vunpack.c.l.b16 %v79
  %v177 = vunpack.c.l.b16 %v80
  %v178 = vunpack.c.h.b16 %v80
  %v179 = vunpack.c.l.b16 %v81
  %v180 = vunpack.c.l.b16 %v82
  %v181 = vunpack.c.h.b16 %v82
  %v182 = vunpack.c.l.b16 %v83
  %v183 = vunpack.c.l.b16 %v84
  %v184 = vunpack.c.h.b16 %v84
  %v185 = vunpack.c.l.b16 %v85
  %v186 = vunpack.c.l.b16 %v86
  %v187 = vunpack.c.h.b16 %v86
  %v188 = vunpack.c.l.b16 %v87
  %v189 = vunpack.c.l.b16 %v88
  %v190 = vunpack.c.h.b16 %v88
  %v191 = vunpack.c.l.b16 %v89
  %v192 = vunpack.c.l.b16 %v90
  %v193 = vunpack.c.h.b16 %v90
  %v194 = vunpack.c.l.b16 %v91
  %v195 = vunpack.c.l.b16 %v92
  %v196 = vunpack.c.h.b16 %v92
  %v197 = vunpack.c.l.b16 %v93
  %v198 = vpack.c.b16 %v153, %v150
  %v199 = vpack.c.b16 %v154, %v151
  %v200 = vpack.c.b16 %v155, %v152
  %v201 = vpack.c.b16 %v159, %v156
  %v202 = vpack.c.b16 %v160, %v157
  %v203 = vpack.c.b16 %v161, %v158
  %v204 = vpack.c.b16 %v165, %v162
  %v205 = vpack.c.b16 %v166, %v163
  %v206 = vpack.c.b16 %v167, %v164
  %v207 = vpack.c.b16 %v171, %v168
  %v208 = vpack.c.b16 %v172, %v169
  %v209 = vpack.c.b16 %v173, %v170
  %v210 = vpack.c.b16 %v177, %v174
  %v211 = vpack.c.b16 %v178, %v175
  %v212 = vpack.c.b16 %v179, %v176
  %v213 = vpack.c.b16 %v183, %v180
  %v214 = vpack.c.b16 %v184, %v181
  %v215 = vpack.c.b16 %v185, %v182
  %v216 = vpack.c.b16 %v189, %v186
  %v217 = vpack.c.b16 %v190, %v187
  %v218 = vpack.c.b16 %v191, %v188
  %v219 = vpack.c.b16 %v195, %v192
  %v220 = vpack.c.b16 %v196, %v193
  %v221 = vpack.c.b16 %v197, %v194
  %246 = vmatprep.subr.bf16.mxu0 %v199
  %247 = vmatpush1.bf16.msra.mxu0 %v198
  %248 = vmatprep.subr.bf16.mxu0 %v202
  %249 = vmatpush1.bf16.msra.mxu0 %v201
  %250 = vmatprep.subr.bf16.mxu0 %v205
  %251 = vmatpush1.bf16.msra.mxu0 %v204
  %252 = vmatprep.subr.bf16.mxu0 %v208
  %253 = vmatpush1.bf16.msra.mxu0 %v207
  %254 = vmatprep.subr.bf16.mxu0 %v211
  %255 = vmatpush1.bf16.msra.mxu0 %v210
  %256 = vmatprep.subr.bf16.mxu0 %v214
  %257 = vmatpush1.bf16.msra.mxu0 %v213
  %258 = vmatprep.subr.bf16.mxu0 %v217
  %259 = vmatpush1.bf16.msra.mxu0 %v216
  %260 = vmatprep.subr.bf16.mxu0 %v220
  %261 = vmatpush1.bf16.msra.mxu0 %v219
  %262 = vmatprep.subr.bf16.mxu0 0
  %263 = vmatpush1.bf16.msra.mxu0 0
  %264 = vmatprep.subr.bf16.mxu0 0
  %265 = vmatpush1.bf16.msra.mxu0 0
  %266 = vmatprep.subr.bf16.mxu0 0
  %267 = vmatpush1.bf16.msra.mxu0 0
  %268 = vmatprep.subr.bf16.mxu0 0
  %269 = vmatpush1.bf16.msra.mxu0 0
  %270 = vmatprep.subr.bf16.mxu0 0
  %271 = vmatpush1.bf16.msra.mxu0 0
  %272 = vmatprep.subr.bf16.mxu0 0
  %273 = vmatpush1.bf16.msra.mxu0 0
  %274 = vmatprep.subr.bf16.mxu0 0
  %275 = vmatpush1.bf16.msra.mxu0 0
  %276 = vmatprep.subr.bf16.mxu0 0
  %277 = vmatpush1.bf16.msra.mxu0 0
  %278 = vmatprep.mubr.bf16.mxu0 0
  %279 = vmatmul.mubr.bf16.gmra.mrb[0].mxu0 %v117
  %v280 = vpop.f32.mrb[0].mxu0
  %v281 = vadd.f32 0.0, %v280
  %v282 = vpop.f32.mrb[0].mxu0
  %v283 = vadd.f32 0.0, %v282
  %v284 = vpop.f32.mrb[0].mxu0
  %v285 = vpop.f32.mrb[0].mxu0
  %286 = vdwg.mxu0
  %287 = vmatprep.subr.bf16.mxu0 0
  %288 = vmatpush1.bf16.msra.mxu0 %v200
  %289 = vmatprep.subr.bf16.mxu0 0
  %290 = vmatpush1.bf16.msra.mxu0 %v203
  %291 = vmatprep.subr.bf16.mxu0 0
  %292 = vmatpush1.bf16.msra.mxu0 %v206
  %293 = vmatprep.subr.bf16.mxu0 0
  %294 = vmatpush1.bf16.msra.mxu0 %v209
  %295 = vmatprep.subr.bf16.mxu0 0
  %296 = vmatpush1.bf16.msra.mxu0 %v212
  %297 = vmatprep.subr.bf16.mxu0 0
  %298 = vmatpush1.bf16.msra.mxu0 %v215
  %299 = vmatprep.subr.bf16.mxu0 0
  %300 = vmatpush1.bf16.msra.mxu0 %v218
  %301 = vmatprep.subr.bf16.mxu0 0
  %302 = vmatpush1.bf16.msra.mxu0 %v221
  %303 = vmatprep.subr.bf16.mxu0 0
  %304 = vmatpush1.bf16.msra.mxu0 0
  %305 = vmatprep.subr.bf16.mxu0 0
  %306 = vmatpush1.bf16.msra.mxu0 0
  %307 = vmatprep.subr.bf16.mxu0 0
  %308 = vmatpush1.bf16.msra.mxu0 0
  %309 = vmatprep.subr.bf16.mxu0 0
  %310 = vmatpush1.bf16.msra.mxu0 0
  %311 = vmatprep.subr.bf16.mxu0 0
  %312 = vmatpush1.bf16.msra.mxu0 0
  %313 = vmatprep.subr.bf16.mxu0 0
  %314 = vmatpush1.bf16.msra.mxu0 0
  %315 = vmatprep.subr.bf16.mxu0 0
  %316 = vmatpush1.bf16.msra.mxu0 0
  %317 = vmatprep.subr.bf16.mxu0 0
  %318 = vmatpush1.bf16.msra.mxu0 0
  %319 = vmatprep.mubr.bf16.mxu0 0
  %320 = vmatmul.mubr.bf16.gmra.mrb[0].mxu0 %v117
  %v321 = vpop.f32.mrb[0].mxu0
  %v322 = vadd.f32 0.0, %v321
  %v323 = vpop.f32.mrb[0].mxu0
  %v324 = vpop.f32.mrb[0].mxu0
  %v325 = vpop.f32.mrb[0].mxu0
  %326 = vdwg.mxu0
  %v327 = vadd.f32 %v114, %v281
  %v328 = vadd.f32 %v115, %v283
  %v329 = vxor.u32 %v327, 2147483648
  %v330 = vxor.u32 %v328, 2147483648
  %v331 = vmul.f32 %v329, 1.442695
  %v332 = vpow.pop %v331
  %v333 = vmul.f32 %v330, 1.442695
  %v334 = vpow.pop %v333
  %v335 = vadd.f32 %v332, 1.0
  %v336 = vadd.f32 %v334, 1.0
  %v337 = vrcp.pop %v335
  %v338 = vmul.f32 1.0, %v337
  %v339 = vrcp.pop %v336
  %v340 = vmul.f32 1.0, %v339
  %v341 = vadd.f32 %v322, %v106
  %v342 = vmul.f32 %v338, %v341
  %v343 = vadd.f32 %v116, %v342
  %v344 = vtanh.pop %v343
  %v345 = vsub.f32 1.0, %v340
  %v346 = vmul.f32 %v345, %v344
  %v347 = vmul.f32 %v340, %v110
  %v348 = vadd.f32 %v346, %v347
  %s349 = scalar_lea.vmem [#allocation2], 32
  %350 = vst [vmem:[%s349] sm:$0xff] %v348
  %s351 = scalar_lea.vmem %s7, 24
  %v352 = vld [vmem:[%s351] sm:$0xff]
  %v353 = vmul.f32 %v348, %v352
  %s354 = scalar_lea.vmem %s1, 36
  %v355 = vld [vmem:[%s354] sm:$0xff]
  %v356 = vld [vmem:[%s354 + $0x8] sm:$0xf]
  %v357 = vunpack.c.l.bf16 %v355
  %v358 = vunpack.c.h.bf16 %v355
  %v359 = vunpack.c.l.bf16 %v356
  %v360 = vpack.c.bf16 %v353, %v353
  %361 = vmatprep.subr.bf16.mxu0 %v199
  %362 = vmatpush1.bf16.msra.mxu0 %v198
  %363 = vmatprep.subr.bf16.mxu0 %v202
  %364 = vmatpush1.bf16.msra.mxu0 %v201
  %365 = vmatprep.subr.bf16.mxu0 %v205
  %366 = vmatpush1.bf16.msra.mxu0 %v204
  %367 = vmatprep.subr.bf16.mxu0 %v208
  %368 = vmatpush1.bf16.msra.mxu0 %v207
  %369 = vmatprep.subr.bf16.mxu0 %v211
  %370 = vmatpush1.bf16.msra.mxu0 %v210
  %371 = vmatprep.subr.bf16.mxu0 %v214
  %372 = vmatpush1.bf16.msra.mxu0 %v213
  %373 = vmatprep.subr.bf16.mxu0 %v217
  %374 = vmatpush1.bf16.msra.mxu0 %v216
  %375 = vmatprep.subr.bf16.mxu0 %v220
  %376 = vmatpush1.bf16.msra.mxu0 %v219
  %377 = vmatprep.subr.bf16.mxu0 0
  %378 = vmatpush1.bf16.msra.mxu0 0
  %379 = vmatprep.subr.bf16.mxu0 0
  %380 = vmatpush1.bf16.msra.mxu0 0
  %381 = vmatprep.subr.bf16.mxu0 0
  %382 = vmatpush1.bf16.msra.mxu0 0
  %383 = vmatprep.subr.bf16.mxu0 0
  %384 = vmatpush1.bf16.msra.mxu0 0
  %385 = vmatprep.subr.bf16.mxu0 0
  %386 = vmatpush1.bf16.msra.mxu0 0
  %387 = vmatprep.subr.bf16.mxu0 0
  %388 = vmatpush1.bf16.msra.mxu0 0
  %389 = vmatprep.subr.bf16.mxu0 0
  %390 = vmatpush1.bf16.msra.mxu0 0
  %391 = vmatprep.subr.bf16.mxu0 0
  %392 = vmatpush1.bf16.msra.mxu0 0
  %393 = vmatprep.mubr.bf16.mxu0 0
  %394 = vmatmul.mubr.bf16.gmra.mrb[0].mxu0 %v360
  %v395 = vpop.f32.mrb[0].mxu0
  %v396 = vadd.f32 0.0, %v395
  %v397 = vpop.f32.mrb[0].mxu0
  %v398 = vadd.f32 0.0, %v397
  %v399 = vpop.f32.mrb[0].mxu0
  %v400 = vpop.f32.mrb[0].mxu0
  %401 = vdwg.mxu0
  %402 = vmatprep.subr.bf16.mxu0 0
  %403 = vmatpush1.bf16.msra.mxu0 %v200
  %404 = vmatprep.subr.bf16.mxu0 0
  %405 = vmatpush1.bf16.msra.mxu0 %v203
  %406 = vmatprep.subr.bf16.mxu0 0
  %407 = vmatpush1.bf16.msra.mxu0 %v206
  %408 = vmatprep.subr.bf16.mxu0 0
  %409 = vmatpush1.bf16.msra.mxu0 %v209
  %410 = vmatprep.subr.bf16.mxu0 0
  %411 = vmatpush1.bf16.msra.mxu0 %v212
  %412 = vmatprep.subr.bf16.mxu0 0
  %413 = vmatpush1.bf16.msra.mxu0 %v215
  %414 = vmatprep.subr.bf16.mxu0 0
  %415 = vmatpush1.bf16.msra.mxu0 %v218
  %416 = vmatprep.subr.bf16.mxu0 0
  %417 = vmatpush1.bf16.msra.mxu0 %v221
  %418 = vmatprep.subr.bf16.mxu0 0
  %419 = vmatpush1.bf16.msra.mxu0 0
  %420 = vmatprep.subr.bf16.mxu0 0
  %421 = vmatpush1.bf16.msra.mxu0 0
  %422 = vmatprep.subr.bf16.mxu0 0
  %423 = vmatpush1.bf16.msra.mxu0 0
  %424 = vmatprep.subr.bf16.mxu0 0
  %425 = vmatpush1.bf16.msra.mxu0 0
  %426 = vmatprep.subr.bf16.mxu0 0
  %427 = vmatpush1.bf16.msra.mxu0 0
  %428 = vmatprep.subr.bf16.mxu0 0
  %429 = vmatpush1.bf16.msra.mxu0 0
  %430 = vmatprep.subr.bf16.mxu0 0
  %431 = vmatpush1.bf16.msra.mxu0 0
  %432 = vmatprep.subr.bf16.mxu0 0
  %433 = vmatpush1.bf16.msra.mxu0 0
  %434 = vmatprep.mubr.bf16.mxu0 0
  %435 = vmatmul.mubr.bf16.gmra.mrb[0].mxu0 %v360
  %v436 = vpop.f32.mrb[0].mxu0
  %v437 = vadd.f32 0.0, %v436
  %v438 = vpop.f32.mrb[0].mxu0
  %v439 = vpop.f32.mrb[0].mxu0
  %v440 = vpop.f32.mrb[0].mxu0
  %441 = vdwg.mxu0
  %v442 = vadd.f32 %v357, %v396
  %v443 = vadd.f32 %v358, %v398
  %v444 = vxor.u32 %v442, 2147483648
  %v445 = vxor.u32 %v443, 2147483648
  %v446 = vmul.f32 %v444, 1.442695
  %v447 = vpow.pop %v446
  %v448 = vmul.f32 %v445, 1.442695
  %v449 = vpow.pop %v448
  %v450 = vadd.f32 %v447, 1.0
  %v451 = vadd.f32 %v449, 1.0
  %v452 = vrcp.pop %v450
  %v453 = vmul.f32 1.0, %v452
  %v454 = vrcp.pop %v451
  %v455 = vmul.f32 1.0, %v454
  %v456 = vadd.f32 %v437, %v106
  %v457 = vmul.f32 %v453, %v456
  %v458 = vadd.f32 %v359, %v457
  %v459 = vtanh.pop %v458
  %v460 = vsub.f32 1.0, %v455
  %v461 = vmul.f32 %v460, %v459
  %v462 = vmul.f32 %v455, %v353
  %v463 = vadd.f32 %v461, %v462
  %s464 = scalar_lea.vmem [#allocation2], 24
  %465 = vst [vmem:[%s464] sm:$0xff] %v463
  %s466 = scalar_lea.vmem %s7, 16
  %v467 = vld [vmem:[%s466] sm:$0xff]
  %v468 = vmul.f32 %v463, %v467
  %s469 = scalar_lea.vmem %s1, 24
  %v470 = vld [vmem:[%s469] sm:$0xff]
  %v471 = vld [vmem:[%s469 + $0x8] sm:$0xf]
  %v472 = vunpack.c.l.bf16 %v470
  %v473 = vunpack.c.h.bf16 %v470
  %v474 = vunpack.c.l.bf16 %v471
  %v475 = vpack.c.bf16 %v468, %v468
  %476 = vmatprep.subr.bf16.mxu0 %v199
  %477 = vmatpush1.bf16.msra.mxu0 %v198
  %478 = vmatprep.subr.bf16.mxu0 %v202
  %479 = vmatpush1.bf16.msra.mxu0 %v201
  %480 = vmatprep.subr.bf16.mxu0 %v205
  %481 = vmatpush1.bf16.msra.mxu0 %v204
  %482 = vmatprep.subr.bf16.mxu0 %v208
  %483 = vmatpush1.bf16.msra.mxu0 %v207
  %484 = vmatprep.subr.bf16.mxu0 %v211
  %485 = vmatpush1.bf16.msra.mxu0 %v210
  %486 = vmatprep.subr.bf16.mxu0 %v214
  %487 = vmatpush1.bf16.msra.mxu0 %v213
  %488 = vmatprep.subr.bf16.mxu0 %v217
  %489 = vmatpush1.bf16.msra.mxu0 %v216
  %490 = vmatprep.subr.bf16.mxu0 %v220
  %491 = vmatpush1.bf16.msra.mxu0 %v219
  %492 = vmatprep.subr.bf16.mxu0 0
  %493 = vmatpush1.bf16.msra.mxu0 0
  %494 = vmatprep.subr.bf16.mxu0 0
  %495 = vmatpush1.bf16.msra.mxu0 0
  %496 = vmatprep.subr.bf16.mxu0 0
  %497 = vmatpush1.bf16.msra.mxu0 0
  %498 = vmatprep.subr.bf16.mxu0 0
  %499 = vmatpush1.bf16.msra.mxu0 0
  %500 = vmatprep.subr.bf16.mxu0 0
  %501 = vmatpush1.bf16.msra.mxu0 0
  %502 = vmatprep.subr.bf16.mxu0 0
  %503 = vmatpush1.bf16.msra.mxu0 0
  %504 = vmatprep.subr.bf16.mxu0 0
  %505 = vmatpush1.bf16.msra.mxu0 0
  %506 = vmatprep.subr.bf16.mxu0 0
  %507 = vmatpush1.bf16.msra.mxu0 0
  %508 = vmatprep.mubr.bf16.mxu0 0
  %509 = vmatmul.mubr.bf16.gmra.mrb[0].mxu0 %v475
  %v510 = vpop.f32.mrb[0].mxu0
  %v511 = vadd.f32 0.0, %v510
  %v512 = vpop.f32.mrb[0].mxu0
  %v513 = vadd.f32 0.0, %v512
  %v514 = vpop.f32.mrb[0].mxu0
  %v515 = vpop.f32.mrb[0].mxu0
  %516 = vdwg.mxu0
  %517 = vmatprep.subr.bf16.mxu0 0
  %518 = vmatpush1.bf16.msra.mxu0 %v200
  %519 = vmatprep.subr.bf16.mxu0 0
  %520 = vmatpush1.bf16.msra.mxu0 %v203
  %521 = vmatprep.subr.bf16.mxu0 0
  %522 = vmatpush1.bf16.msra.mxu0 %v206
  %523 = vmatprep.subr.bf16.mxu0 0
  %524 = vmatpush1.bf16.msra.mxu0 %v209
  %525 = vmatprep.subr.bf16.mxu0 0
  %526 = vmatpush1.bf16.msra.mxu0 %v212
  %527 = vmatprep.subr.bf16.mxu0 0
  %528 = vmatpush1.bf16.msra.mxu0 %v215
  %529 = vmatprep.subr.bf16.mxu0 0
  %530 = vmatpush1.bf16.msra.mxu0 %v218
  %531 = vmatprep.subr.bf16.mxu0 0
  %532 = vmatpush1.bf16.msra.mxu0 %v221
  %533 = vmatprep.subr.bf16.mxu0 0
  %534 = vmatpush1.bf16.msra.mxu0 0
  %535 = vmatprep.subr.bf16.mxu0 0
  %536 = vmatpush1.bf16.msra.mxu0 0
  %537 = vmatprep.subr.bf16.mxu0 0
  %538 = vmatpush1.bf16.msra.mxu0 0
  %539 = vmatprep.subr.bf16.mxu0 0
  %540 = vmatpush1.bf16.msra.mxu0 0
  %541 = vmatprep.subr.bf16.mxu0 0
  %542 = vmatpush1.bf16.msra.mxu0 0
  %543 = vmatprep.subr.bf16.mxu0 0
  %544 = vmatpush1.bf16.msra.mxu0 0
  %545 = vmatprep.subr.bf16.mxu0 0
  %546 = vmatpush1.bf16.msra.mxu0 0
  %547 = vmatprep.subr.bf16.mxu0 0
  %548 = vmatpush1.bf16.msra.mxu0 0
  %549 = vmatprep.mubr.bf16.mxu0 0
  %550 = vmatmul.mubr.bf16.gmra.mrb[0].mxu0 %v475
  %v551 = vpop.f32.mrb[0].mxu0
  %v552 = vadd.f32 0.0, %v551
  %v553 = vpop.f32.mrb[0].mxu0
  %v554 = vpop.f32.mrb[0].mxu0
  %v555 = vpop.f32.mrb[0].mxu0
  %556 = vdwg.mxu0
  %v557 = vadd.f32 %v472, %v511
  %v558 = vadd.f32 %v473, %v513
  %v559 = vxor.u32 %v557, 2147483648
  %v560 = vxor.u32 %v558, 2147483648
  %v561 = vmul.f32 %v559, 1.442695
  %v562 = vpow.pop %v561
  %v563 = vmul.f32 %v560, 1.442695
  %v564 = vpow.pop %v563
  %v565 = vadd.f32 %v562, 1.0
  %v566 = vadd.f32 %v564, 1.0
  %v567 = vrcp.pop %v565
  %v568 = vmul.f32 1.0, %v567
  %v569 = vrcp.pop %v566
  %v570 = vmul.f32 1.0, %v569
  %v571 = vadd.f32 %v552, %v106
  %v572 = vmul.f32 %v568, %v571
  %v573 = vadd.f32 %v474, %v572
  %v574 = vtanh.pop %v573
  %v575 = vsub.f32 1.0, %v570
  %v576 = vmul.f32 %v575, %v574
  %v577 = vmul.f32 %v570, %v468
  %v578 = vadd.f32 %v576, %v577
  %s579 = scalar_lea.vmem [#allocation2], 16
  %580 = vst [vmem:[%s579] sm:$0xff] %v578
  %s581 = scalar_lea.vmem %s7, 8
  %v582 = vld [vmem:[%s581] sm:$0xff]
  %v583 = vmul.f32 %v578, %v582
  %s584 = scalar_lea.vmem %s1, 12
  %v585 = vld [vmem:[%s584] sm:$0xff]
  %v586 = vld [vmem:[%s584 + $0x8] sm:$0xf]
  %v587 = vunpack.c.l.bf16 %v585
  %v588 = vunpack.c.h.bf16 %v585
  %v589 = vunpack.c.l.bf16 %v586
  %v590 = vpack.c.bf16 %v583, %v583
  %591 = vmatprep.subr.bf16.mxu0 %v199
  %592 = vmatpush1.bf16.msra.mxu0 %v198
  %593 = vmatprep.subr.bf16.mxu0 %v202
  %594 = vmatpush1.bf16.msra.mxu0 %v201
  %595 = vmatprep.subr.bf16.mxu0 %v205
  %596 = vmatpush1.bf16.msra.mxu0 %v204
  %597 = vmatprep.subr.bf16.mxu0 %v208
  %598 = vmatpush1.bf16.msra.mxu0 %v207
  %599 = vmatprep.subr.bf16.mxu0 %v211
  %600 = vmatpush1.bf16.msra.mxu0 %v210
  %601 = vmatprep.subr.bf16.mxu0 %v214
  %602 = vmatpush1.bf16.msra.mxu0 %v213
  %603 = vmatprep.subr.bf16.mxu0 %v217
  %604 = vmatpush1.bf16.msra.mxu0 %v216
  %605 = vmatprep.subr.bf16.mxu0 %v220
  %606 = vmatpush1.bf16.msra.mxu0 %v219
  %607 = vmatprep.subr.bf16.mxu0 0
  %608 = vmatpush1.bf16.msra.mxu0 0
  %609 = vmatprep.subr.bf16.mxu0 0
  %610 = vmatpush1.bf16.msra.mxu0 0
  %611 = vmatprep.subr.bf16.mxu0 0
  %612 = vmatpush1.bf16.msra.mxu0 0
  %613 = vmatprep.subr.bf16.mxu0 0
  %614 = vmatpush1.bf16.msra.mxu0 0
  %615 = vmatprep.subr.bf16.mxu0 0
  %616 = vmatpush1.bf16.msra.mxu0 0
  %617 = vmatprep.subr.bf16.mxu0 0
  %618 = vmatpush1.bf16.msra.mxu0 0
  %619 = vmatprep.subr.bf16.mxu0 0
  %620 = vmatpush1.bf16.msra.mxu0 0
  %621 = vmatprep.subr.bf16.mxu0 0
  %622 = vmatpush1.bf16.msra.mxu0 0
  %623 = vmatprep.mubr.bf16.mxu0 0
  %624 = vmatmul.mubr.bf16.gmra.mrb[0].mxu0 %v590
  %v625 = vpop.f32.mrb[0].mxu0
  %v626 = vadd.f32 0.0, %v625
  %v627 = vpop.f32.mrb[0].mxu0
  %v628 = vadd.f32 0.0, %v627
  %v629 = vpop.f32.mrb[0].mxu0
  %v630 = vpop.f32.mrb[0].mxu0
  %631 = vdwg.mxu0
  %632 = vmatprep.subr.bf16.mxu0 0
  %633 = vmatpush1.bf16.msra.mxu0 %v200
  %634 = vmatprep.subr.bf16.mxu0 0
  %635 = vmatpush1.bf16.msra.mxu0 %v203
  %636 = vmatprep.subr.bf16.mxu0 0
  %637 = vmatpush1.bf16.msra.mxu0 %v206
  %638 = vmatprep.subr.bf16.mxu0 0
  %639 = vmatpush1.bf16.msra.mxu0 %v209
  %640 = vmatprep.subr.bf16.mxu0 0
  %641 = vmatpush1.bf16.msra.mxu0 %v212
  %642 = vmatprep.subr.bf16.mxu0 0
  %643 = vmatpush1.bf16.msra.mxu0 %v215
  %644 = vmatprep.subr.bf16.mxu0 0
  %645 = vmatpush1.bf16.msra.mxu0 %v218
  %646 = vmatprep.subr.bf16.mxu0 0
  %647 = vmatpush1.bf16.msra.mxu0 %v221
  %648 = vmatprep.subr.bf16.mxu0 0
  %649 = vmatpush1.bf16.msra.mxu0 0
  %650 = vmatprep.subr.bf16.mxu0 0
  %651 = vmatpush1.bf16.msra.mxu0 0
  %652 = vmatprep.subr.bf16.mxu0 0
  %653 = vmatpush1.bf16.msra.mxu0 0
  %654 = vmatprep.subr.bf16.mxu0 0
  %655 = vmatpush1.bf16.msra.mxu0 0
  %656 = vmatprep.subr.bf16.mxu0 0
  %657 = vmatpush1.bf16.msra.mxu0 0
  %658 = vmatprep.subr.bf16.mxu0 0
  %659 = vmatpush1.bf16.msra.mxu0 0
  %660 = vmatprep.subr.bf16.mxu0 0
  %661 = vmatpush1.bf16.msra.mxu0 0
  %662 = vmatprep.subr.bf16.mxu0 0
  %663 = vmatpush1.bf16.msra.mxu0 0
  %664 = vmatprep.mubr.bf16.mxu0 0
  %665 = vmatmul.mubr.bf16.gmra.mrb[0].mxu0 %v590
  %v666 = vpop.f32.mrb[0].mxu0
  %v667 = vadd.f32 0.0, %v666
  %v668 = vpop.f32.mrb[0].mxu0
  %v669 = vpop.f32.mrb[0].mxu0
  %v670 = vpop.f32.mrb[0].mxu0
  %671 = vdwg.mxu0
  %v672 = vadd.f32 %v587, %v626
  %v673 = vadd.f32 %v588, %v628
  %v674 = vxor.u32 %v672, 2147483648
  %v675 = vxor.u32 %v673, 2147483648
  %v676 = vmul.f32 %v674, 1.442695
  %v677 = vpow.pop %v676
  %v678 = vmul.f32 %v675, 1.442695
  %v679 = vpow.pop %v678
  %v680 = vadd.f32 %v677, 1.0
  %v681 = vadd.f32 %v679, 1.0
  %v682 = vrcp.pop %v680
  %v683 = vmul.f32 1.0, %v682
  %v684 = vrcp.pop %v681
  %v685 = vmul.f32 1.0, %v684
  %v686 = vadd.f32 %v667, %v106
  %v687 = vmul.f32 %v683, %v686
  %v688 = vadd.f32 %v589, %v687
  %v689 = vtanh.pop %v688
  %v690 = vsub.f32 1.0, %v685
  %v691 = vmul.f32 %v690, %v689
  %v692 = vmul.f32 %v685, %v583
  %v693 = vadd.f32 %v691, %v692
  %s694 = scalar_lea.vmem [#allocation2], 8
  %695 = vst [vmem:[%s694] sm:$0xff] %v693
  %v696 = vld [vmem:[%s7] sm:$0xff]
  %v697 = vmul.f32 %v693, %v696
  %v698 = vld [vmem:[%s1] sm:$0xff]
  %v699 = vld [vmem:[%s1 + $0x8] sm:$0xf]
  %v700 = vunpack.c.l.bf16 %v698
  %v701 = vunpack.c.h.bf16 %v698
  %v702 = vunpack.c.l.bf16 %v699
  %v703 = vpack.c.bf16 %v697, %v697
  %704 = vmatprep.subr.bf16.mxu0 %v199
  %705 = vmatpush1.bf16.msra.mxu0 %v198
  %706 = vmatprep.subr.bf16.mxu0 %v202
  %707 = vmatpush1.bf16.msra.mxu0 %v201
  %708 = vmatprep.subr.bf16.mxu0 %v205
  %709 = vmatpush1.bf16.msra.mxu0 %v204
  %710 = vmatprep.subr.bf16.mxu0 %v208
  %711 = vmatpush1.bf16.msra.mxu0 %v207
  %712 = vmatprep.subr.bf16.mxu0 %v211
  %713 = vmatpush1.bf16.msra.mxu0 %v210
  %714 = vmatprep.subr.bf16.mxu0 %v214
  %715 = vmatpush1.bf16.msra.mxu0 %v213
  %716 = vmatprep.subr.bf16.mxu0 %v217
  %717 = vmatpush1.bf16.msra.mxu0 %v216
  %718 = vmatprep.subr.bf16.mxu0 %v220
  %719 = vmatpush1.bf16.msra.mxu0 %v219
  %720 = vmatprep.subr.bf16.mxu0 0
  %721 = vmatpush1.bf16.msra.mxu0 0
  %722 = vmatprep.subr.bf16.mxu0 0
  %723 = vmatpush1.bf16.msra.mxu0 0
  %724 = vmatprep.subr.bf16.mxu0 0
  %725 = vmatpush1.bf16.msra.mxu0 0
  %726 = vmatprep.subr.bf16.mxu0 0
  %727 = vmatpush1.bf16.msra.mxu0 0
  %728 = vmatprep.subr.bf16.mxu0 0
  %729 = vmatpush1.bf16.msra.mxu0 0
  %730 = vmatprep.subr.bf16.mxu0 0
  %731 = vmatpush1.bf16.msra.mxu0 0
  %732 = vmatprep.subr.bf16.mxu0 0
  %733 = vmatpush1.bf16.msra.mxu0 0
  %734 = vmatprep.subr.bf16.mxu0 0
  %735 = vmatpush1.bf16.msra.mxu0 0
  %736 = vmatprep.mubr.bf16.mxu0 0
  %737 = vmatmul.mubr.bf16.gmra.mrb[0].mxu0 %v703
  %v738 = vpop.f32.mrb[0].mxu0
  %v739 = vadd.f32 0.0, %v738
  %v740 = vpop.f32.mrb[0].mxu0
  %v741 = vadd.f32 0.0, %v740
  %v742 = vpop.f32.mrb[0].mxu0
  %v743 = vpop.f32.mrb[0].mxu0
  %744 = vdwg.mxu0
  %745 = vmatprep.subr.bf16.mxu0 0
  %746 = vmatpush1.bf16.msra.mxu0 %v200
  %747 = vmatprep.subr.bf16.mxu0 0
  %748 = vmatpush1.bf16.msra.mxu0 %v203
  %749 = vmatprep.subr.bf16.mxu0 0
  %750 = vmatpush1.bf16.msra.mxu0 %v206
  %751 = vmatprep.subr.bf16.mxu0 0
  %752 = vmatpush1.bf16.msra.mxu0 %v209
  %753 = vmatprep.subr.bf16.mxu0 0
  %754 = vmatpush1.bf16.msra.mxu0 %v212
  %755 = vmatprep.subr.bf16.mxu0 0
  %756 = vmatpush1.bf16.msra.mxu0 %v215
  %757 = vmatprep.subr.bf16.mxu0 0
  %758 = vmatpush1.bf16.msra.mxu0 %v218
  %759 = vmatprep.subr.bf16.mxu0 0
  %760 = vmatpush1.bf16.msra.mxu0 %v221
  %761 = vmatprep.subr.bf16.mxu0 0
  %762 = vmatpush1.bf16.msra.mxu0 0
  %763 = vmatprep.subr.bf16.mxu0 0
  %764 = vmatpush1.bf16.msra.mxu0 0
  %765 = vmatprep.subr.bf16.mxu0 0
  %766 = vmatpush1.bf16.msra.mxu0 0
  %767 = vmatprep.subr.bf16.mxu0 0
  %768 = vmatpush1.bf16.msra.mxu0 0
  %769 = vmatprep.subr.bf16.mxu0 0
  %770 = vmatpush1.bf16.msra.mxu0 0
  %771 = vmatprep.subr.bf16.mxu0 0
  %772 = vmatpush1.bf16.msra.mxu0 0
  %773 = vmatprep.subr.bf16.mxu0 0
  %774 = vmatpush1.bf16.msra.mxu0 0
  %775 = vmatprep.subr.bf16.mxu0 0
  %776 = vmatpush1.bf16.msra.mxu0 0
  %777 = vmatprep.mubr.bf16.mxu0 0
  %778 = vmatmul.mubr.bf16.gmra.mrb[0].mxu0 %v703
  %v779 = vpop.f32.mrb[0].mxu0
  %v780 = vadd.f32 0.0, %v779
  %v781 = vpop.f32.mrb[0].mxu0
  %v782 = vpop.f32.mrb[0].mxu0
  %v783 = vpop.f32.mrb[0].mxu0
  %784 = vdwg.mxu0
  %v785 = vadd.f32 %v700, %v739
  %v786 = vadd.f32 %v701, %v741
  %v787 = vxor.u32 %v785, 2147483648
  %v788 = vxor.u32 %v786, 2147483648
  %v789 = vmul.f32 %v787, 1.442695
  %v790 = vpow.pop %v789
  %v791 = vmul.f32 %v788, 1.442695
  %v792 = vpow.pop %v791
  %v793 = vadd.f32 %v790, 1.0
  %v794 = vadd.f32 %v792, 1.0
  %v795 = vrcp.pop %v793
  %v796 = vmul.f32 1.0, %v795
  %v797 = vrcp.pop %v794
  %v798 = vmul.f32 1.0, %v797
  %v799 = vadd.f32 %v780, %v106
  %v800 = vmul.f32 %v796, %v799
  %v801 = vadd.f32 %v702, %v800
  %v802 = vtanh.pop %v801
  %v803 = vsub.f32 1.0, %v798
  %v804 = vmul.f32 %v803, %v802
  %v805 = vmul.f32 %v798, %v697
  %v806 = vadd.f32 %v804, %v805
  %807 = vst [vmem:[#allocation2] sm:$0xff] %v806
  %v808 = vld [vmem:[%s6] sm:$0xff]
  %v809 = vmul.f32 %v808, 0.0
  %v810 = vld [vmem:[%s0] sm:$0xff]
  %v811 = vld [vmem:[%s0 + $0x8] sm:$0xf]
  %v812 = vunpack.c.l.bf16 %v810
  %v813 = vunpack.c.h.bf16 %v810
  %v814 = vunpack.c.l.bf16 %v811
  %v815 = vpack.c.bf16 %v809, %v809
  %v848 = vunpack.c.l.b16 %v30
  %v849 = vunpack.c.h.b16 %v30
  %v850 = vunpack.c.l.b16 %v31
  %v851 = vunpack.c.l.b16 %v32
  %v852 = vunpack.c.h.b16 %v32
  %v853 = vunpack.c.l.b16 %v33
  %v854 = vunpack.c.l.b16 %v34
  %v855 = vunpack.c.h.b16 %v34
  %v856 = vunpack.c.l.b16 %v35
  %v857 = vunpack.c.l.b16 %v36
  %v858 = vunpack.c.h.b16 %v36
  %v859 = vunpack.c.l.b16 %v37
  %v860 = vunpack.c.l.b16 %v38
  %v861 = vunpack.c.h.b16 %v38
  %v862 = vunpack.c.l.b16 %v39
  %v863 = vunpack.c.l.b16 %v40
  %v864 = vunpack.c.h.b16 %v40
  %v865 = vunpack.c.l.b16 %v41
  %v866 = vunpack.c.l.b16 %v42
  %v867 = vunpack.c.h.b16 %v42
  %v868 = vunpack.c.l.b16 %v43
  %v869 = vunpack.c.l.b16 %v44
  %v870 = vunpack.c.h.b16 %v44
  %v871 = vunpack.c.l.b16 %v45
  %v872 = vunpack.c.l.b16 %v46
  %v873 = vunpack.c.h.b16 %v46
  %v874 = vunpack.c.l.b16 %v47
  %v875 = vunpack.c.l.b16 %v48
  %v876 = vunpack.c.h.b16 %v48
  %v877 = vunpack.c.l.b16 %v49
  %v878 = vunpack.c.l.b16 %v50
  %v879 = vunpack.c.h.b16 %v50
  %v880 = vunpack.c.l.b16 %v51
  %v881 = vunpack.c.l.b16 %v52
  %v882 = vunpack.c.h.b16 %v52
  %v883 = vunpack.c.l.b16 %v53
  %v884 = vunpack.c.l.b16 %v54
  %v885 = vunpack.c.h.b16 %v54
  %v886 = vunpack.c.l.b16 %v55
  %v887 = vunpack.c.l.b16 %v56
  %v888 = vunpack.c.h.b16 %v56
  %v889 = vunpack.c.l.b16 %v57
  %v890 = vunpack.c.l.b16 %v58
  %v891 = vunpack.c.h.b16 %v58
  %v892 = vunpack.c.l.b16 %v59
  %v893 = vunpack.c.l.b16 %v60
  %v894 = vunpack.c.h.b16 %v60
  %v895 = vunpack.c.l.b16 %v61
  %v896 = vpack.c.b16 %v851, %v848
  %v897 = vpack.c.b16 %v852, %v849
  %v898 = vpack.c.b16 %v853, %v850
  %v899 = vpack.c.b16 %v857, %v854
  %v900 = vpack.c.b16 %v858, %v855
  %v901 = vpack.c.b16 %v859, %v856
  %v902 = vpack.c.b16 %v863, %v860
  %v903 = vpack.c.b16 %v864, %v861
  %v904 = vpack.c.b16 %v865, %v862
  %v905 = vpack.c.b16 %v869, %v866
  %v906 = vpack.c.b16 %v870, %v867
  %v907 = vpack.c.b16 %v871, %v868
  %v908 = vpack.c.b16 %v875, %v872
  %v909 = vpack.c.b16 %v876, %v873
  %v910 = vpack.c.b16 %v877, %v874
  %v911 = vpack.c.b16 %v881, %v878
  %v912 = vpack.c.b16 %v882, %v879
  %v913 = vpack.c.b16 %v883, %v880
  %v914 = vpack.c.b16 %v887, %v884
  %v915 = vpack.c.b16 %v888, %v885
  %v916 = vpack.c.b16 %v889, %v886
  %v917 = vpack.c.b16 %v893, %v890
  %v918 = vpack.c.b16 %v894, %v891
  %v919 = vpack.c.b16 %v895, %v892
  %944 = vmatprep.subr.bf16.mxu0 %v897
  %945 = vmatpush1.bf16.msra.mxu0 %v896
  %946 = vmatprep.subr.bf16.mxu0 %v900
  %947 = vmatpush1.bf16.msra.mxu0 %v899
  %948 = vmatprep.subr.bf16.mxu0 %v903
  %949 = vmatpush1.bf16.msra.mxu0 %v902
  %950 = vmatprep.subr.bf16.mxu0 %v906
  %951 = vmatpush1.bf16.msra.mxu0 %v905
  %952 = vmatprep.subr.bf16.mxu0 %v909
  %953 = vmatpush1.bf16.msra.mxu0 %v908
  %954 = vmatprep.subr.bf16.mxu0 %v912
  %955 = vmatpush1.bf16.msra.mxu0 %v911
  %956 = vmatprep.subr.bf16.mxu0 %v915
  %957 = vmatpush1.bf16.msra.mxu0 %v914
  %958 = vmatprep.subr.bf16.mxu0 %v918
  %959 = vmatpush1.bf16.msra.mxu0 %v917
  %960 = vmatprep.subr.bf16.mxu0 0
  %961 = vmatpush1.bf16.msra.mxu0 0
  %962 = vmatprep.subr.bf16.mxu0 0
  %963 = vmatpush1.bf16.msra.mxu0 0
  %964 = vmatprep.subr.bf16.mxu0 0
  %965 = vmatpush1.bf16.msra.mxu0 0
  %966 = vmatprep.subr.bf16.mxu0 0
  %967 = vmatpush1.bf16.msra.mxu0 0
  %968 = vmatprep.subr.bf16.mxu0 0
  %969 = vmatpush1.bf16.msra.mxu0 0
  %970 = vmatprep.subr.bf16.mxu0 0
  %971 = vmatpush1.bf16.msra.mxu0 0
  %972 = vmatprep.subr.bf16.mxu0 0
  %973 = vmatpush1.bf16.msra.mxu0 0
  %974 = vmatprep.subr.bf16.mxu0 0
  %975 = vmatpush1.bf16.msra.mxu0 0
  %976 = vmatprep.mubr.bf16.mxu0 0
  %977 = vmatmul.mubr.bf16.gmra.mrb[0].mxu0 %v815
  %v978 = vpop.f32.mrb[0].mxu0
  %v979 = vadd.f32 0.0, %v978
  %v980 = vpop.f32.mrb[0].mxu0
  %v981 = vadd.f32 0.0, %v980
  %v982 = vpop.f32.mrb[0].mxu0
  %v983 = vpop.f32.mrb[0].mxu0
  %984 = vdwg.mxu0
  %985 = vmatprep.subr.bf16.mxu0 0
  %986 = vmatpush1.bf16.msra.mxu0 %v898
  %987 = vmatprep.subr.bf16.mxu0 0
  %988 = vmatpush1.bf16.msra.mxu0 %v901
  %989 = vmatprep.subr.bf16.mxu0 0
  %990 = vmatpush1.bf16.msra.mxu0 %v904
  %991 = vmatprep.subr.bf16.mxu0 0
  %992 = vmatpush1.bf16.msra.mxu0 %v907
  %993 = vmatprep.subr.bf16.mxu0 0
  %994 = vmatpush1.bf16.msra.mxu0 %v910
  %995 = vmatprep.subr.bf16.mxu0 0
  %996 = vmatpush1.bf16.msra.mxu0 %v913
  %997 = vmatprep.subr.bf16.mxu0 0
  %998 = vmatpush1.bf16.msra.mxu0 %v916
  %999 = vmatprep.subr.bf16.mxu0 0
  %1000 = vmatpush1.bf16.msra.mxu0 %v919
  %1001 = vmatprep.subr.bf16.mxu0 0
  %1002 = vmatpush1.bf16.msra.mxu0 0
  %1003 = vmatprep.subr.bf16.mxu0 0
  %1004 = vmatpush1.bf16.msra.mxu0 0
  %1005 = vmatprep.subr.bf16.mxu0 0
  %1006 = vmatpush1.bf16.msra.mxu0 0
  %1007 = vmatprep.subr.bf16.mxu0 0
  %1008 = vmatpush1.bf16.msra.mxu0 0
  %1009 = vmatprep.subr.bf16.mxu0 0
  %1010 = vmatpush1.bf16.msra.mxu0 0
  %1011 = vmatprep.subr.bf16.mxu0 0
  %1012 = vmatpush1.bf16.msra.mxu0 0
  %1013 = vmatprep.subr.bf16.mxu0 0
  %1014 = vmatpush1.bf16.msra.mxu0 0
  %1015 = vmatprep.subr.bf16.mxu0 0
  %1016 = vmatpush1.bf16.msra.mxu0 0
  %1017 = vmatprep.mubr.bf16.mxu0 0
  %1018 = vmatmul.mubr.bf16.gmra.mrb[0].mxu0 %v815
  %v1019 = vpop.f32.mrb[0].mxu0
  %v1020 = vadd.f32 0.0, %v1019
  %v1021 = vpop.f32.mrb[0].mxu0
  %v1022 = vpop.f32.mrb[0].mxu0
  %v1023 = vpop.f32.mrb[0].mxu0
  %1024 = vdwg.mxu0
  %v1025 = vadd.f32 %v812, %v979
  %v1026 = vadd.f32 %v813, %v981
  %v1027 = vxor.u32 %v1025, 2147483648
  %v1028 = vxor.u32 %v1026, 2147483648
  %v1029 = vmul.f32 %v1027, 1.442695
  %v1030 = vpow.pop %v1029
  %v1031 = vmul.f32 %v1028, 1.442695
  %v1032 = vpow.pop %v1031
  %v1033 = vadd.f32 %v1030, 1.0
  %v1034 = vadd.f32 %v1032, 1.0
  %v1035 = vrcp.pop %v1033
  %v1036 = vmul.f32 1.0, %v1035
  %v1037 = vrcp.pop %v1034
  %v1038 = vmul.f32 1.0, %v1037
  %v1039 = vadd.f32 %v1020, %v99
  %v1040 = vmul.f32 %v1036, %v1039
  %v1041 = vadd.f32 %v814, %v1040
  %v1042 = vtanh.pop %v1041
  %v1043 = vsub.f32 1.0, %v1038
  %v1044 = vmul.f32 %v1043, %v1042
  %v1045 = vmul.f32 %v1038, %v809
  %v1046 = vadd.f32 %v1044, %v1045
  %v1047 = vld [vmem:[#allocation2] sm:$0xff]
  %1048 = vst [vmem:[%s8] sm:$0xff] %v1046
  %1049 = vst [vmem:[%s8 + $0x8] sm:$0xff] %v1047
  %s1050 = scalar_lea.vmem %s6, 8
  %v1051 = vld [vmem:[%s1050] sm:$0xff]
  %v1052 = vmul.f32 %v1046, %v1051
  %s1053 = scalar_lea.vmem %s0, 12
  %v1054 = vld [vmem:[%s1053] sm:$0xff]
  %v1055 = vld [vmem:[%s1053 + $0x8] sm:$0xf]
  %v1056 = vunpack.c.l.bf16 %v1054
  %v1057 = vunpack.c.h.bf16 %v1054
  %v1058 = vunpack.c.l.bf16 %v1055
  %v1059 = vpack.c.bf16 %v1052, %v1052
  %1060 = vmatprep.subr.bf16.mxu0 %v897
  %1061 = vmatpush1.bf16.msra.mxu0 %v896
  %1062 = vmatprep.subr.bf16.mxu0 %v900
  %1063 = vmatpush1.bf16.msra.mxu0 %v899
  %1064 = vmatprep.subr.bf16.mxu0 %v903
  %1065 = vmatpush1.bf16.msra.mxu0 %v902
  %1066 = vmatprep.subr.bf16.mxu0 %v906
  %1067 = vmatpush1.bf16.msra.mxu0 %v905
  %1068 = vmatprep.subr.bf16.mxu0 %v909
  %1069 = vmatpush1.bf16.msra.mxu0 %v908
  %1070 = vmatprep.subr.bf16.mxu0 %v912
  %1071 = vmatpush1.bf16.msra.mxu0 %v911
  %1072 = vmatprep.subr.bf16.mxu0 %v915
  %1073 = vmatpush1.bf16.msra.mxu0 %v914
  %1074 = vmatprep.subr.bf16.mxu0 %v918
  %1075 = vmatpush1.bf16.msra.mxu0 %v917
  %1076 = vmatprep.subr.bf16.mxu0 0
  %1077 = vmatpush1.bf16.msra.mxu0 0
  %1078 = vmatprep.subr.bf16.mxu0 0
  %1079 = vmatpush1.bf16.msra.mxu0 0
  %1080 = vmatprep.subr.bf16.mxu0 0
  %1081 = vmatpush1.bf16.msra.mxu0 0
  %1082 = vmatprep.subr.bf16.mxu0 0
  %1083 = vmatpush1.bf16.msra.mxu0 0
  %1084 = vmatprep.subr.bf16.mxu0 0
  %1085 = vmatpush1.bf16.msra.mxu0 0
  %1086 = vmatprep.subr.bf16.mxu0 0
  %1087 = vmatpush1.bf16.msra.mxu0 0
  %1088 = vmatprep.subr.bf16.mxu0 0
  %1089 = vmatpush1.bf16.msra.mxu0 0
  %1090 = vmatprep.subr.bf16.mxu0 0
  %1091 = vmatpush1.bf16.msra.mxu0 0
  %1092 = vmatprep.mubr.bf16.mxu0 0
  %1093 = vmatmul.mubr.bf16.gmra.mrb[0].mxu0 %v1059
  %v1094 = vpop.f32.mrb[0].mxu0
  %v1095 = vadd.f32 0.0, %v1094
  %v1096 = vpop.f32.mrb[0].mxu0
  %v1097 = vadd.f32 0.0, %v1096
  %v1098 = vpop.f32.mrb[0].mxu0
  %v1099 = vpop.f32.mrb[0].mxu0
  %1100 = vdwg.mxu0
  %1101 = vmatprep.subr.bf16.mxu0 0
  %1102 = vmatpush1.bf16.msra.mxu0 %v898
  %1103 = vmatprep.subr.bf16.mxu0 0
  %1104 = vmatpush1.bf16.msra.mxu0 %v901
  %1105 = vmatprep.subr.bf16.mxu0 0
  %1106 = vmatpush1.bf16.msra.mxu0 %v904
  %1107 = vmatprep.subr.bf16.mxu0 0
  %1108 = vmatpush1.bf16.msra.mxu0 %v907
  %1109 = vmatprep.subr.bf16.mxu0 0
  %1110 = vmatpush1.bf16.msra.mxu0 %v910
  %1111 = vmatprep.subr.bf16.mxu0 0
  %1112 = vmatpush1.bf16.msra.mxu0 %v913
  %1113 = vmatprep.subr.bf16.mxu0 0
  %1114 = vmatpush1.bf16.msra.mxu0 %v916
  %1115 = vmatprep.subr.bf16.mxu0 0
  %1116 = vmatpush1.bf16.msra.mxu0 %v919
  %1117 = vmatprep.subr.bf16.mxu0 0
  %1118 = vmatpush1.bf16.msra.mxu0 0
  %1119 = vmatprep.subr.bf16.mxu0 0
  %1120 = vmatpush1.bf16.msra.mxu0 0
  %1121 = vmatprep.subr.bf16.mxu0 0
  %1122 = vmatpush1.bf16.msra.mxu0 0
  %1123 = vmatprep.subr.bf16.mxu0 0
  %1124 = vmatpush1.bf16.msra.mxu0 0
  %1125 = vmatprep.subr.bf16.mxu0 0
  %1126 = vmatpush1.bf16.msra.mxu0 0
  %1127 = vmatprep.subr.bf16.mxu0 0
  %1128 = vmatpush1.bf16.msra.mxu0 0
  %1129 = vmatprep.subr.bf16.mxu0 0
  %1130 = vmatpush1.bf16.msra.mxu0 0
  %1131 = vmatprep.subr.bf16.mxu0 0
  %1132 = vmatpush1.bf16.msra.mxu0 0
  %1133 = vmatprep.mubr.bf16.mxu0 0
  %1134 = vmatmul.mubr.bf16.gmra.mrb[0].mxu0 %v1059
  %v1135 = vpop.f32.mrb[0].mxu0
  %v1136 = vadd.f32 0.0, %v1135
  %v1137 = vpop.f32.mrb[0].mxu0
  %v1138 = vpop.f32.mrb[0].mxu0
  %v1139 = vpop.f32.mrb[0].mxu0
  %1140 = vdwg.mxu0
  %v1141 = vadd.f32 %v1056, %v1095
  %v1142 = vadd.f32 %v1057, %v1097
  %v1143 = vxor.u32 %v1141, 2147483648
  %v1144 = vxor.u32 %v1142, 2147483648
  %v1145 = vmul.f32 %v1143, 1.442695
  %v1146 = vpow.pop %v1145
  %v1147 = vmul.f32 %v1144, 1.442695
  %v1148 = vpow.pop %v1147
  %v1149 = vadd.f32 %v1146, 1.0
  %v1150 = vadd.f32 %v1148, 1.0
  %v1151 = vrcp.pop %v1149
  %v1152 = vmul.f32 1.0, %v1151
  %v1153 = vrcp.pop %v1150
  %v1154 = vmul.f32 1.0, %v1153
  %v1155 = vadd.f32 %v1136, %v99
  %v1156 = vmul.f32 %v1152, %v1155
  %v1157 = vadd.f32 %v1058, %v1156
  %v1158 = vtanh.pop %v1157
  %v1159 = vsub.f32 1.0, %v1154
  %v1160 = vmul.f32 %v1159, %v1158
  %v1161 = vmul.f32 %v1154, %v1052
  %v1162 = vadd.f32 %v1160, %v1161
  %v1163 = vld [vmem:[%s694] sm:$0xff]
  %s1164 = scalar_lea.vmem %s8, 16
  %1165 = vst [vmem:[%s1164] sm:$0xff] %v1162
  %1166 = vst [vmem:[%s1164 + $0x8] sm:$0xff] %v1163
  %s1167 = scalar_lea.vmem %s6, 16
  %v1168 = vld [vmem:[%s1167] sm:$0xff]
  %v1169 = vmul.f32 %v1162, %v1168
  %s1170 = scalar_lea.vmem %s0, 24
  %v1171 = vld [vmem:[%s1170] sm:$0xff]
  %v1172 = vld [vmem:[%s1170 + $0x8] sm:$0xf]
  %v1173 = vunpack.c.l.bf16 %v1171
  %v1174 = vunpack.c.h.bf16 %v1171
  %v1175 = vunpack.c.l.bf16 %v1172
  %v1176 = vpack.c.bf16 %v1169, %v1169
  %1177 = vmatprep.subr.bf16.mxu0 %v897
  %1178 = vmatpush1.bf16.msra.mxu0 %v896
  %1179 = vmatprep.subr.bf16.mxu0 %v900
  %1180 = vmatpush1.bf16.msra.mxu0 %v899
  %1181 = vmatprep.subr.bf16.mxu0 %v903
  %1182 = vmatpush1.bf16.msra.mxu0 %v902
  %1183 = vmatprep.subr.bf16.mxu0 %v906
  %1184 = vmatpush1.bf16.msra.mxu0 %v905
  %1185 = vmatprep.subr.bf16.mxu0 %v909
  %1186 = vmatpush1.bf16.msra.mxu0 %v908
  %1187 = vmatprep.subr.bf16.mxu0 %v912
  %1188 = vmatpush1.bf16.msra.mxu0 %v911
  %1189 = vmatprep.subr.bf16.mxu0 %v915
  %1190 = vmatpush1.bf16.msra.mxu0 %v914
  %1191 = vmatprep.subr.bf16.mxu0 %v918
  %1192 = vmatpush1.bf16.msra.mxu0 %v917
  %1193 = vmatprep.subr.bf16.mxu0 0
  %1194 = vmatpush1.bf16.msra.mxu0 0
  %1195 = vmatprep.subr.bf16.mxu0 0
  %1196 = vmatpush1.bf16.msra.mxu0 0
  %1197 = vmatprep.subr.bf16.mxu0 0
  %1198 = vmatpush1.bf16.msra.mxu0 0
  %1199 = vmatprep.subr.bf16.mxu0 0
  %1200 = vmatpush1.bf16.msra.mxu0 0
  %1201 = vmatprep.subr.bf16.mxu0 0
  %1202 = vmatpush1.bf16.msra.mxu0 0
  %1203 = vmatprep.subr.bf16.mxu0 0
  %1204 = vmatpush1.bf16.msra.mxu0 0
  %1205 = vmatprep.subr.bf16.mxu0 0
  %1206 = vmatpush1.bf16.msra.mxu0 0
  %1207 = vmatprep.subr.bf16.mxu0 0
  %1208 = vmatpush1.bf16.msra.mxu0 0
  %1209 = vmatprep.mubr.bf16.mxu0 0
  %1210 = vmatmul.mubr.bf16.gmra.mrb[0].mxu0 %v1176
  %v1211 = vpop.f32.mrb[0].mxu0
  %v1212 = vadd.f32 0.0, %v1211
  %v1213 = vpop.f32.mrb[0].mxu0
  %v1214 = vadd.f32 0.0, %v1213
  %v1215 = vpop.f32.mrb[0].mxu0
  %v1216 = vpop.f32.mrb[0].mxu0
  %1217 = vdwg.mxu0
  %1218 = vmatprep.subr.bf16.mxu0 0
  %1219 = vmatpush1.bf16.msra.mxu0 %v898
  %1220 = vmatprep.subr.bf16.mxu0 0
  %1221 = vmatpush1.bf16.msra.mxu0 %v901
  %1222 = vmatprep.subr.bf16.mxu0 0
  %1223 = vmatpush1.bf16.msra.mxu0 %v904
  %1224 = vmatprep.subr.bf16.mxu0 0
  %1225 = vmatpush1.bf16.msra.mxu0 %v907
  %1226 = vmatprep.subr.bf16.mxu0 0
  %1227 = vmatpush1.bf16.msra.mxu0 %v910
  %1228 = vmatprep.subr.bf16.mxu0 0
  %1229 = vmatpush1.bf16.msra.mxu0 %v913
  %1230 = vmatprep.subr.bf16.mxu0 0
  %1231 = vmatpush1.bf16.msra.mxu0 %v916
  %1232 = vmatprep.subr.bf16.mxu0 0
  %1233 = vmatpush1.bf16.msra.mxu0 %v919
  %1234 = vmatprep.subr.bf16.mxu0 0
  %1235 = vmatpush1.bf16.msra.mxu0 0
  %1236 = vmatprep.subr.bf16.mxu0 0
  %1237 = vmatpush1.bf16.msra.mxu0 0
  %1238 = vmatprep.subr.bf16.mxu0 0
  %1239 = vmatpush1.bf16.msra.mxu0 0
  %1240 = vmatprep.subr.bf16.mxu0 0
  %1241 = vmatpush1.bf16.msra.mxu0 0
  %1242 = vmatprep.subr.bf16.mxu0 0
  %1243 = vmatpush1.bf16.msra.mxu0 0
  %1244 = vmatprep.subr.bf16.mxu0 0
  %1245 = vmatpush1.bf16.msra.mxu0 0
  %1246 = vmatprep.subr.bf16.mxu0 0
  %1247 = vmatpush1.bf16.msra.mxu0 0
  %1248 = vmatprep.subr.bf16.mxu0 0
  %1249 = vmatpush1.bf16.msra.mxu0 0
  %1250 = vmatprep.mubr.bf16.mxu0 0
  %1251 = vmatmul.mubr.bf16.gmra.mrb[0].mxu0 %v1176
  %v1252 = vpop.f32.mrb[0].mxu0
  %v1253 = vadd.f32 0.0, %v1252
  %v1254 = vpop.f32.mrb[0].mxu0
  %v1255 = vpop.f32.mrb[0].mxu0
  %v1256 = vpop.f32.mrb[0].mxu0
  %1257 = vdwg.mxu0
  %v1258 = vadd.f32 %v1173, %v1212
  %v1259 = vadd.f32 %v1174, %v1214
  %v1260 = vxor.u32 %v1258, 2147483648
  %v1261 = vxor.u32 %v1259, 2147483648
  %v1262 = vmul.f32 %v1260, 1.442695
  %v1263 = vpow.pop %v1262
  %v1264 = vmul.f32 %v1261, 1.442695
  %v1265 = vpow.pop %v1264
  %v1266 = vadd.f32 %v1263, 1.0
  %v1267 = vadd.f32 %v1265, 1.0
  %v1268 = vrcp.pop %v1266
  %v1269 = vmul.f32 1.0, %v1268
  %v1270 = vrcp.pop %v1267
  %v1271 = vmul.f32 1.0, %v1270
  %v1272 = vadd.f32 %v1253, %v99
  %v1273 = vmul.f32 %v1269, %v1272
  %v1274 = vadd.f32 %v1175, %v1273
  %v1275 = vtanh.pop %v1274
  %v1276 = vsub.f32 1.0, %v1271
  %v1277 = vmul.f32 %v1276, %v1275
  %v1278 = vmul.f32 %v1271, %v1169
  %v1279 = vadd.f32 %v1277, %v1278
  %v1280 = vld [vmem:[%s579] sm:$0xff]
  %s1281 = scalar_lea.vmem %s8, 32
  %1282 = vst [vmem:[%s1281] sm:$0xff] %v1279
  %1283 = vst [vmem:[%s1281 + $0x8] sm:$0xff] %v1280
  %s1284 = scalar_lea.vmem %s6, 24
  %v1285 = vld [vmem:[%s1284] sm:$0xff]
  %v1286 = vmul.f32 %v1279, %v1285
  %s1287 = scalar_lea.vmem %s0, 36
  %v1288 = vld [vmem:[%s1287] sm:$0xff]
  %v1289 = vld [vmem:[%s1287 + $0x8] sm:$0xf]
  %v1290 = vunpack.c.l.bf16 %v1288
  %v1291 = vunpack.c.h.bf16 %v1288
  %v1292 = vunpack.c.l.bf16 %v1289
  %v1293 = vpack.c.bf16 %v1286, %v1286
  %1294 = vmatprep.subr.bf16.mxu0 %v897
  %1295 = vmatpush1.bf16.msra.mxu0 %v896
  %1296 = vmatprep.subr.bf16.mxu0 %v900
  %1297 = vmatpush1.bf16.msra.mxu0 %v899
  %1298 = vmatprep.subr.bf16.mxu0 %v903
  %1299 = vmatpush1.bf16.msra.mxu0 %v902
  %1300 = vmatprep.subr.bf16.mxu0 %v906
  %1301 = vmatpush1.bf16.msra.mxu0 %v905
  %1302 = vmatprep.subr.bf16.mxu0 %v909
  %1303 = vmatpush1.bf16.msra.mxu0 %v908
  %1304 = vmatprep.subr.bf16.mxu0 %v912
  %1305 = vmatpush1.bf16.msra.mxu0 %v911
  %1306 = vmatprep.subr.bf16.mxu0 %v915
  %1307 = vmatpush1.bf16.msra.mxu0 %v914
  %1308 = vmatprep.subr.bf16.mxu0 %v918
  %1309 = vmatpush1.bf16.msra.mxu0 %v917
  %1310 = vmatprep.subr.bf16.mxu0 0
  %1311 = vmatpush1.bf16.msra.mxu0 0
  %1312 = vmatprep.subr.bf16.mxu0 0
  %1313 = vmatpush1.bf16.msra.mxu0 0
  %1314 = vmatprep.subr.bf16.mxu0 0
  %1315 = vmatpush1.bf16.msra.mxu0 0
  %1316 = vmatprep.subr.bf16.mxu0 0
  %1317 = vmatpush1.bf16.msra.mxu0 0
  %1318 = vmatprep.subr.bf16.mxu0 0
  %1319 = vmatpush1.bf16.msra.mxu0 0
  %1320 = vmatprep.subr.bf16.mxu0 0
  %1321 = vmatpush1.bf16.msra.mxu0 0
  %1322 = vmatprep.subr.bf16.mxu0 0
  %1323 = vmatpush1.bf16.msra.mxu0 0
  %1324 = vmatprep.subr.bf16.mxu0 0
  %1325 = vmatpush1.bf16.msra.mxu0 0
  %1326 = vmatprep.mubr.bf16.mxu0 0
  %1327 = vmatmul.mubr.bf16.gmra.mrb[0].mxu0 %v1293
  %v1328 = vpop.f32.mrb[0].mxu0
  %v1329 = vadd.f32 0.0, %v1328
  %v1330 = vpop.f32.mrb[0].mxu0
  %v1331 = vadd.f32 0.0, %v1330
  %v1332 = vpop.f32.mrb[0].mxu0
  %v1333 = vpop.f32.mrb[0].mxu0
  %1334 = vdwg.mxu0
  %1335 = vmatprep.subr.bf16.mxu0 0
  %1336 = vmatpush1.bf16.msra.mxu0 %v898
  %1337 = vmatprep.subr.bf16.mxu0 0
  %1338 = vmatpush1.bf16.msra.mxu0 %v901
  %1339 = vmatprep.subr.bf16.mxu0 0
  %1340 = vmatpush1.bf16.msra.mxu0 %v904
  %1341 = vmatprep.subr.bf16.mxu0 0
  %1342 = vmatpush1.bf16.msra.mxu0 %v907
  %1343 = vmatprep.subr.bf16.mxu0 0
  %1344 = vmatpush1.bf16.msra.mxu0 %v910
  %1345 = vmatprep.subr.bf16.mxu0 0
  %1346 = vmatpush1.bf16.msra.mxu0 %v913
  %1347 = vmatprep.subr.bf16.mxu0 0
  %1348 = vmatpush1.bf16.msra.mxu0 %v916
  %1349 = vmatprep.subr.bf16.mxu0 0
  %1350 = vmatpush1.bf16.msra.mxu0 %v919
  %1351 = vmatprep.subr.bf16.mxu0 0
  %1352 = vmatpush1.bf16.msra.mxu0 0
  %1353 = vmatprep.subr.bf16.mxu0 0
  %1354 = vmatpush1.bf16.msra.mxu0 0
  %1355 = vmatprep.subr.bf16.mxu0 0
  %1356 = vmatpush1.bf16.msra.mxu0 0
  %1357 = vmatprep.subr.bf16.mxu0 0
  %1358 = vmatpush1.bf16.msra.mxu0 0
  %1359 = vmatprep.subr.bf16.mxu0 0
  %1360 = vmatpush1.bf16.msra.mxu0 0
  %1361 = vmatprep.subr.bf16.mxu0 0
  %1362 = vmatpush1.bf16.msra.mxu0 0
  %1363 = vmatprep.subr.bf16.mxu0 0
  %1364 = vmatpush1.bf16.msra.mxu0 0
  %1365 = vmatprep.subr.bf16.mxu0 0
  %1366 = vmatpush1.bf16.msra.mxu0 0
  %1367 = vmatprep.mubr.bf16.mxu0 0
  %1368 = vmatmul.mubr.bf16.gmra.mrb[0].mxu0 %v1293
  %v1369 = vpop.f32.mrb[0].mxu0
  %v1370 = vadd.f32 0.0, %v1369
  %v1371 = vpop.f32.mrb[0].mxu0
  %v1372 = vpop.f32.mrb[0].mxu0
  %v1373 = vpop.f32.mrb[0].mxu0
  %1374 = vdwg.mxu0
  %v1375 = vadd.f32 %v1290, %v1329
  %v1376 = vadd.f32 %v1291, %v1331
  %v1377 = vxor.u32 %v1375, 2147483648
  %v1378 = vxor.u32 %v1376, 2147483648
  %v1379 = vmul.f32 %v1377, 1.442695
  %v1380 = vpow.pop %v1379
  %v1381 = vmul.f32 %v1378, 1.442695
  %v1382 = vpow.pop %v1381
  %v1383 = vadd.f32 %v1380, 1.0
  %v1384 = vadd.f32 %v1382, 1.0
  %v1385 = vrcp.pop %v1383
  %v1386 = vmul.f32 1.0, %v1385
  %v1387 = vrcp.pop %v1384
  %v1388 = vmul.f32 1.0, %v1387
  %v1389 = vadd.f32 %v1370, %v99
  %v1390 = vmul.f32 %v1386, %v1389
  %v1391 = vadd.f32 %v1292, %v1390
  %v1392 = vtanh.pop %v1391
  %v1393 = vsub.f32 1.0, %v1388
  %v1394 = vmul.f32 %v1393, %v1392
  %v1395 = vmul.f32 %v1388, %v1286
  %v1396 = vadd.f32 %v1394, %v1395
  %v1397 = vld [vmem:[%s464] sm:$0xff]
  %s1398 = scalar_lea.vmem %s8, 48
  %1399 = vst [vmem:[%s1398] sm:$0xff] %v1396
  %1400 = vst [vmem:[%s1398 + $0x8] sm:$0xff] %v1397
  %s1401 = scalar_lea.vmem %s6, 32
  %v1402 = vld [vmem:[%s1401] sm:$0xff]
  %v1403 = vmul.f32 %v1396, %v1402
  %s1404 = scalar_lea.vmem %s0, 48
  %v1405 = vld [vmem:[%s1404] sm:$0xff]
  %v1406 = vld [vmem:[%s1404 + $0x8] sm:$0xf]
  %v1407 = vunpack.c.l.bf16 %v1405
  %v1408 = vunpack.c.h.bf16 %v1405
  %v1409 = vunpack.c.l.bf16 %v1406
  %v1410 = vpack.c.bf16 %v1403, %v1403
  %1411 = vmatprep.subr.bf16.mxu0 %v897
  %1412 = vmatpush1.bf16.msra.mxu0 %v896
  %1413 = vmatprep.subr.bf16.mxu0 %v900
  %1414 = vmatpush1.bf16.msra.mxu0 %v899
  %1415 = vmatprep.subr.bf16.mxu0 %v903
  %1416 = vmatpush1.bf16.msra.mxu0 %v902
  %1417 = vmatprep.subr.bf16.mxu0 %v906
  %1418 = vmatpush1.bf16.msra.mxu0 %v905
  %1419 = vmatprep.subr.bf16.mxu0 %v909
  %1420 = vmatpush1.bf16.msra.mxu0 %v908
  %1421 = vmatprep.subr.bf16.mxu0 %v912
  %1422 = vmatpush1.bf16.msra.mxu0 %v911
  %1423 = vmatprep.subr.bf16.mxu0 %v915
  %1424 = vmatpush1.bf16.msra.mxu0 %v914
  %1425 = vmatprep.subr.bf16.mxu0 %v918
  %1426 = vmatpush1.bf16.msra.mxu0 %v917
  %1427 = vmatprep.subr.bf16.mxu0 0
  %1428 = vmatpush1.bf16.msra.mxu0 0
  %1429 = vmatprep.subr.bf16.mxu0 0
  %1430 = vmatpush1.bf16.msra.mxu0 0
  %1431 = vmatprep.subr.bf16.mxu0 0
  %1432 = vmatpush1.bf16.msra.mxu0 0
  %1433 = vmatprep.subr.bf16.mxu0 0
  %1434 = vmatpush1.bf16.msra.mxu0 0
  %1435 = vmatprep.subr.bf16.mxu0 0
  %1436 = vmatpush1.bf16.msra.mxu0 0
  %1437 = vmatprep.subr.bf16.mxu0 0
  %1438 = vmatpush1.bf16.msra.mxu0 0
  %1439 = vmatprep.subr.bf16.mxu0 0
  %1440 = vmatpush1.bf16.msra.mxu0 0
  %1441 = vmatprep.subr.bf16.mxu0 0
  %1442 = vmatpush1.bf16.msra.mxu0 0
  %1443 = vmatprep.mubr.bf16.mxu0 0
  %1444 = vmatmul.mubr.bf16.gmra.mrb[0].mxu0 %v1410
  %v1445 = vpop.f32.mrb[0].mxu0
  %v1446 = vadd.f32 0.0, %v1445
  %v1447 = vpop.f32.mrb[0].mxu0
  %v1448 = vadd.f32 0.0, %v1447
  %v1449 = vpop.f32.mrb[0].mxu0
  %v1450 = vpop.f32.mrb[0].mxu0
  %1451 = vdwg.mxu0
  %1452 = vmatprep.subr.bf16.mxu0 0
  %1453 = vmatpush1.bf16.msra.mxu0 %v898
  %1454 = vmatprep.subr.bf16.mxu0 0
  %1455 = vmatpush1.bf16.msra.mxu0 %v901
  %1456 = vmatprep.subr.bf16.mxu0 0
  %1457 = vmatpush1.bf16.msra.mxu0 %v904
  %1458 = vmatprep.subr.bf16.mxu0 0
  %1459 = vmatpush1.bf16.msra.mxu0 %v907
  %1460 = vmatprep.subr.bf16.mxu0 0
  %1461 = vmatpush1.bf16.msra.mxu0 %v910
  %1462 = vmatprep.subr.bf16.mxu0 0
  %1463 = vmatpush1.bf16.msra.mxu0 %v913
  %1464 = vmatprep.subr.bf16.mxu0 0
  %1465 = vmatpush1.bf16.msra.mxu0 %v916
  %1466 = vmatprep.subr.bf16.mxu0 0
  %1467 = vmatpush1.bf16.msra.mxu0 %v919
  %1468 = vmatprep.subr.bf16.mxu0 0
  %1469 = vmatpush1.bf16.msra.mxu0 0
  %1470 = vmatprep.subr.bf16.mxu0 0
  %1471 = vmatpush1.bf16.msra.mxu0 0
  %1472 = vmatprep.subr.bf16.mxu0 0
  %1473 = vmatpush1.bf16.msra.mxu0 0
  %1474 = vmatprep.subr.bf16.mxu0 0
  %1475 = vmatpush1.bf16.msra.mxu0 0
  %1476 = vmatprep.subr.bf16.mxu0 0
  %1477 = vmatpush1.bf16.msra.mxu0 0
  %1478 = vmatprep.subr.bf16.mxu0 0
  %1479 = vmatpush1.bf16.msra.mxu0 0
  %1480 = vmatprep.subr.bf16.mxu0 0
  %1481 = vmatpush1.bf16.msra.mxu0 0
  %1482 = vmatprep.subr.bf16.mxu0 0
  %1483 = vmatpush1.bf16.msra.mxu0 0
  %1484 = vmatprep.mubr.bf16.mxu0 0
  %1485 = vmatmul.mubr.bf16.gmra.mrb[0].mxu0 %v1410
  %v1486 = vpop.f32.mrb[0].mxu0
  %v1487 = vadd.f32 0.0, %v1486
  %v1488 = vpop.f32.mrb[0].mxu0
  %v1489 = vpop.f32.mrb[0].mxu0
  %v1490 = vpop.f32.mrb[0].mxu0
  %1491 = vdwg.mxu0
  %v1492 = vadd.f32 %v1407, %v1446
  %v1493 = vadd.f32 %v1408, %v1448
  %v1494 = vxor.u32 %v1492, 2147483648
  %v1495 = vxor.u32 %v1493, 2147483648
  %v1496 = vmul.f32 %v1494, 1.442695
  %v1497 = vpow.pop %v1496
  %v1498 = vmul.f32 %v1495, 1.442695
  %v1499 = vpow.pop %v1498
  %v1500 = vadd.f32 %v1497, 1.0
  %v1501 = vadd.f32 %v1499, 1.0
  %v1502 = vrcp.pop %v1500
  %v1503 = vmul.f32 1.0, %v1502
  %v1504 = vrcp.pop %v1501
  %v1505 = vmul.f32 1.0, %v1504
  %v1506 = vadd.f32 %v1487, %v99
  %v1507 = vmul.f32 %v1503, %v1506
  %v1508 = vadd.f32 %v1409, %v1507
  %v1509 = vtanh.pop %v1508
  %v1510 = vsub.f32 1.0, %v1505
  %v1511 = vmul.f32 %v1510, %v1509
  %v1512 = vmul.f32 %v1505, %v1403
  %v1513 = vadd.f32 %v1511, %v1512
  %v1514 = vld [vmem:[%s349] sm:$0xff]
  %s1515 = scalar_lea.vmem %s8, 64
  %1516 = vst [vmem:[%s1515] sm:$0xff] %v1513
  %1517 = vst [vmem:[%s1515 + $0x8] sm:$0xff] %v1514
  // Predicated region
  $region34: #{hierarchical_encoder.4} parent=0 // pred_check
    _
  $region35: #{hierarchical_encoder.4} parent=0 // pred_check_branch
    %1519 = sbr.rel (0) target = $region37
  $region36: #{hierarchical_encoder.4} parent=0 // pred_region
    _
  $region37: #{hierarchical_encoder.4} parent=0 // pred_fallthru
    _
  // Predicated region
  $region38: #{hierarchical_encoder.4} parent=0 // pred_check
    _
  $region39: #{hierarchical_encoder.4} parent=0 // pred_check_branch
    %1521 = sbr.rel (0) target = $region41
  $region40: #{hierarchical_encoder.4} parent=0 // pred_region
    _
  $region41: #{hierarchical_encoder.4} parent=0 // pred_fallthru
    _

// kernel: hierarchical_encoder.5
$region0: #{hierarchical_encoder.5}
  #allocation0 [shape = 'u32[]', space=smem, size = 0x4, offset = 0x4, fixed_abs, tag = 'smem constant byte address 0x4 - core index']
  #allocation1 [shape = 'u32[144,128]{1,0:T(1,128)}', space=vmem, size = 0x12000, scoped, tag = 'internal scratch']
  #allocation2 [shape = 'f32[5,8,128]{2,1,0:T(8,128)}', space=vmem, size = 0x5000, scoped, tag = 'scratch operand']
  %s0 = inlined_call_operand.vmem [shape: bf16[5,8,384], index: 0, kind: input, shape index: {}]
  %s1 = inlined_call_operand.vmem [shape: bf16[5,8,384], index: 1, kind: input, shape index: {}]
  %s2 = inlined_call_operand.vmem [shape: bf16[128,384], index: 2, kind: input, shape index: {}]
  %s3 = inlined_call_operand.vmem [shape: bf16[128,384], index: 3, kind: input, shape index: {}]
  %s4 = inlined_call_operand.vmem [shape: f32[1,128], index: 4, kind: input, shape index: {}]
  %s5 = inlined_call_operand.vmem [shape: f32[1,128], index: 5, kind: input, shape index: {}]
  %s6 = inlined_call_operand.vmem [shape: f32[5,8,256], index: 6, kind: output, shape index: {}]
  %s7 = sld [smem:[#allocation0]]
  $region34: #{hierarchical_encoder.5} parent=0
    _
  %s9 = ssub.s32 1, %s7
  %s10 = scalar_select 0, %s9, %s7
  // Predicated region
  $region2: #{hierarchical_encoder.5} parent=0 // pred_check
    _
  $region3: #{hierarchical_encoder.5} parent=0 // pred_check_branch
    %12 = sbr.rel (0) target = $region5
  $region4: #{hierarchical_encoder.5} parent=0 // pred_region
    _
  $region5: #{hierarchical_encoder.5} parent=0 // pred_fallthru
    _
  // Predicated region
  $region6: #{hierarchical_encoder.5} parent=0 // pred_check
    _
  $region7: #{hierarchical_encoder.5} parent=0 // pred_check_branch
    %14 = sbr.rel (0) target = $region9
  $region8: #{hierarchical_encoder.5} parent=0 // pred_region
    _
  $region9: #{hierarchical_encoder.5} parent=0 // pred_fallthru
    _
  // Predicated region
  $region10: #{hierarchical_encoder.5} parent=0 // pred_check
    _
  $region11: #{hierarchical_encoder.5} parent=0 // pred_check_branch
    %16 = sbr.rel (0) target = $region13
  $region12: #{hierarchical_encoder.5} parent=0 // pred_region
    _
  $region13: #{hierarchical_encoder.5} parent=0 // pred_fallthru
    _
  // Predicated region
  $region14: #{hierarchical_encoder.5} parent=0 // pred_check
    _
  $region15: #{hierarchical_encoder.5} parent=0 // pred_check_branch
    %18 = sbr.rel (0) target = $region17
  $region16: #{hierarchical_encoder.5} parent=0 // pred_region
    _
  $region17: #{hierarchical_encoder.5} parent=0 // pred_fallthru
    _
  // Predicated region
  $region18: #{hierarchical_encoder.5} parent=0 // pred_check
    _
  $region19: #{hierarchical_encoder.5} parent=0 // pred_check_branch
    %20 = sbr.rel (0) target = $region21
  $region20: #{hierarchical_encoder.5} parent=0 // pred_region
    _
  $region21: #{hierarchical_encoder.5} parent=0 // pred_fallthru
    _
  // Predicated region
  $region22: #{hierarchical_encoder.5} parent=0 // pred_check
    _
  $region23: #{hierarchical_encoder.5} parent=0 // pred_check_branch
    %22 = sbr.rel (0) target = $region25
  $region24: #{hierarchical_encoder.5} parent=0 // pred_region
    _
  $region25: #{hierarchical_encoder.5} parent=0 // pred_fallthru
    _
  %v24 = vld [vmem:[%s2] sm:$0xff]
  %v25 = vld [vmem:[%s2 + $0x8] sm:$0xf]
  %v26 = vld [vmem:[%s2 + $0xc] sm:$0xff]
  %v27 = vld [vmem:[%s2 + $0x14] sm:$0xf]
  %v28 = vld [vmem:[%s2 + $0x18] sm:$0xff]
  %v29 = vld [vmem:[%s2 + $0x20] sm:$0xf]
  %v30 = vld [vmem:[%s2 + $0x24] sm:$0xff]
  %v31 = vld [vmem:[%s2 + $0x2c] sm:$0xf]
  %v32 = vld [vmem:[%s2 + $0x30] sm:$0xff]
  %v33 = vld [vmem:[%s2 + $0x38] sm:$0xf]
  %v34 = vld [vmem:[%s2 + $0x3c] sm:$0xff]
  %v35 = vld [vmem:[%s2 + $0x44] sm:$0xf]
  %v36 = vld [vmem:[%s2 + $0x48] sm:$0xff]
  %v37 = vld [vmem:[%s2 + $0x50] sm:$0xf]
  %v38 = vld [vmem:[%s2 + $0x54] sm:$0xff]
  %v39 = vld [vmem:[%s2 + $0x5c] sm:$0xf]
  %v40 = vld [vmem:[%s2 + $0x60] sm:$0xff]
  %v41 = vld [vmem:[%s2 + $0x68] sm:$0xf]
  %v42 = vld [vmem:[%s2 + $0x6c] sm:$0xff]
  %v43 = vld [vmem:[%s2 + $0x74] sm:$0xf]
  %v44 = vld [vmem:[%s2 + $0x78] sm:$0xff]
  %v45 = vld [vmem:[%s2 + $0x80] sm:$0xf]
  %v46 = vld [vmem:[%s2 + $0x84] sm:$0xff]
  %v47 = vld [vmem:[%s2 + $0x8c] sm:$0xf]
  %v48 = vld [vmem:[%s2 + $0x90] sm:$0xff]
  %v49 = vld [vmem:[%s2 + $0x98] sm:$0xf]
  %v50 = vld [vmem:[%s2 + $0x9c] sm:$0xff]
  %v51 = vld [vmem:[%s2 + $0xa4] sm:$0xf]
  %v52 = vld [vmem:[%s2 + $0xa8] sm:$0xff]
  %v53 = vld [vmem:[%s2 + $0xb0] sm:$0xf]
  %v54 = vld [vmem:[%s2 + $0xb4] sm:$0xff]
  %v55 = vld [vmem:[%s2 + $0xbc] sm:$0xf]
  %v56 = vld [vmem:[%s3] sm:$0xff]
  %v57 = vld [vmem:[%s3 + $0x8] sm:$0xf]
  %v58 = vld [vmem:[%s3 + $0xc] sm:$0xff]
  %v59 = vld [vmem:[%s3 + $0x14] sm:$0xf]
  %v60 = vld [vmem:[%s3 + $0x18] sm:$0xff]
  %v61 = vld [vmem:[%s3 + $0x20] sm:$0xf]
  %v62 = vld [vmem:[%s3 + $0x24] sm:$0xff]
  %v63 = vld [vmem:[%s3 + $0x2c] sm:$0xf]
  %v64 = vld [vmem:[%s3 + $0x30] sm:$0xff]
  %v65 = vld [vmem:[%s3 + $0x38] sm:$0xf]
  %v66 = vld [vmem:[%s3 + $0x3c] sm:$0xff]
  %v67 = vld [vmem:[%s3 + $0x44] sm:$0xf]
  %v68 = vld [vmem:[%s3 + $0x48] sm:$0xff]
  %v69 = vld [vmem:[%s3 + $0x50] sm:$0xf]
  %v70 = vld [vmem:[%s3 + $0x54] sm:$0xff]
  %v71 = vld [vmem:[%s3 + $0x5c] sm:$0xf]
  %v72 = vld [vmem:[%s3 + $0x60] sm:$0xff]
  %v73 = vld [vmem:[%s3 + $0x68] sm:$0xf]
  %v74 = vld [vmem:[%s3 + $0x6c] sm:$0xff]
  %v75 = vld [vmem:[%s3 + $0x74] sm:$0xf]
  %v76 = vld [vmem:[%s3 + $0x78] sm:$0xff]
  %v77 = vld [vmem:[%s3 + $0x80] sm:$0xf]
  %v78 = vld [vmem:[%s3 + $0x84] sm:$0xff]
  %v79 = vld [vmem:[%s3 + $0x8c] sm:$0xf]
  %v80 = vld [vmem:[%s3 + $0x90] sm:$0xff]
  %v81 = vld [vmem:[%s3 + $0x98] sm:$0xf]
  %v82 = vld [vmem:[%s3 + $0x9c] sm:$0xff]
  %v83 = vld [vmem:[%s3 + $0xa4] sm:$0xf]
  %v84 = vld [vmem:[%s3 + $0xa8] sm:$0xff]
  %v85 = vld [vmem:[%s3 + $0xb0] sm:$0xf]
  %v86 = vld [vmem:[%s3 + $0xb4] sm:$0xff]
  %v87 = vld [vmem:[%s3 + $0xbc] sm:$0xf]
  %v88 = vld [vmem:[%s4] sm:$0x1]
  %v90 = vlaneseq
  %v91 = vshrl.u32 %v90, 7
  %v92 = vsub.s32 0, %v91
  %v93 = vrot.slane %v88, %v92
  %v95 = vld [vmem:[%s5] sm:$0x1]
  %v97 = vlaneseq
  %v98 = vshrl.u32 %v97, 7
  %v99 = vsub.s32 0, %v98
  %v100 = vrot.slane %v95, %v99
  %s102 = scalar_lea.vmem %s1, 48
  %v103 = vld [vmem:[%s102] sm:$0xff]
  %v104 = vld [vmem:[%s102 + $0x8] sm:$0xf]
  %v105 = vunpack.c.l.bf16 %v103
  %v106 = vunpack.c.h.bf16 %v103
  %v107 = vunpack.c.l.bf16 %v104
  %v140 = vunpack.c.l.b16 %v56
  %v141 = vunpack.c.h.b16 %v56
  %v142 = vunpack.c.l.b16 %v57
  %v143 = vunpack.c.l.b16 %v58
  %v144 = vunpack.c.h.b16 %v58
  %v145 = vunpack.c.l.b16 %v59
  %v146 = vunpack.c.l.b16 %v60
  %v147 = vunpack.c.h.b16 %v60
  %v148 = vunpack.c.l.b16 %v61
  %v149 = vunpack.c.l.b16 %v62
  %v150 = vunpack.c.h.b16 %v62
  %v151 = vunpack.c.l.b16 %v63
  %v152 = vunpack.c.l.b16 %v64
  %v153 = vunpack.c.h.b16 %v64
  %v154 = vunpack.c.l.b16 %v65
  %v155 = vunpack.c.l.b16 %v66
  %v156 = vunpack.c.h.b16 %v66
  %v157 = vunpack.c.l.b16 %v67
  %v158 = vunpack.c.l.b16 %v68
  %v159 = vunpack.c.h.b16 %v68
  %v160 = vunpack.c.l.b16 %v69
  %v161 = vunpack.c.l.b16 %v70
  %v162 = vunpack.c.h.b16 %v70
  %v163 = vunpack.c.l.b16 %v71
  %v164 = vunpack.c.l.b16 %v72
  %v165 = vunpack.c.h.b16 %v72
  %v166 = vunpack.c.l.b16 %v73
  %v167 = vunpack.c.l.b16 %v74
  %v168 = vunpack.c.h.b16 %v74
  %v169 = vunpack.c.l.b16 %v75
  %v170 = vunpack.c.l.b16 %v76
  %v171 = vunpack.c.h.b16 %v76
  %v172 = vunpack.c.l.b16 %v77
  %v173 = vunpack.c.l.b16 %v78
  %v174 = vunpack.c.h.b16 %v78
  %v175 = vunpack.c.l.b16 %v79
  %v176 = vunpack.c.l.b16 %v80
  %v177 = vunpack.c.h.b16 %v80
  %v178 = vunpack.c.l.b16 %v81
  %v179 = vunpack.c.l.b16 %v82
  %v180 = vunpack.c.h.b16 %v82
  %v181 = vunpack.c.l.b16 %v83
  %v182 = vunpack.c.l.b16 %v84
  %v183 = vunpack.c.h.b16 %v84
  %v184 = vunpack.c.l.b16 %v85
  %v185 = vunpack.c.l.b16 %v86
  %v186 = vunpack.c.h.b16 %v86
  %v187 = vunpack.c.l.b16 %v87
  %v188 = vpack.c.b16 %v143, %v140
  %v189 = vpack.c.b16 %v144, %v141
  %v190 = vpack.c.b16 %v145, %v142
  %v191 = vpack.c.b16 %v149, %v146
  %v192 = vpack.c.b16 %v150, %v147
  %v193 = vpack.c.b16 %v151, %v148
  %v194 = vpack.c.b16 %v155, %v152
  %v195 = vpack.c.b16 %v156, %v153
  %v196 = vpack.c.b16 %v157, %v154
  %v197 = vpack.c.b16 %v161, %v158
  %v198 = vpack.c.b16 %v162, %v159
  %v199 = vpack.c.b16 %v163, %v160
  %v200 = vpack.c.b16 %v167, %v164
  %v201 = vpack.c.b16 %v168, %v165
  %v202 = vpack.c.b16 %v169, %v166
  %v203 = vpack.c.b16 %v173, %v170
  %v204 = vpack.c.b16 %v174, %v171
  %v205 = vpack.c.b16 %v175, %v172
  %v206 = vpack.c.b16 %v179, %v176
  %v207 = vpack.c.b16 %v180, %v177
  %v208 = vpack.c.b16 %v181, %v178
  %v209 = vpack.c.b16 %v185, %v182
  %v210 = vpack.c.b16 %v186, %v183
  %v211 = vpack.c.b16 %v187, %v184
  %236 = vmatprep.subr.bf16.mxu0 %v189
  %237 = vmatpush1.bf16.msra.mxu0 %v188
  %238 = vmatprep.subr.bf16.mxu0 %v192
  %239 = vmatpush1.bf16.msra.mxu0 %v191
  %240 = vmatprep.subr.bf16.mxu0 %v195
  %241 = vmatpush1.bf16.msra.mxu0 %v194
  %242 = vmatprep.subr.bf16.mxu0 %v198
  %243 = vmatpush1.bf16.msra.mxu0 %v197
  %244 = vmatprep.subr.bf16.mxu0 %v201
  %245 = vmatpush1.bf16.msra.mxu0 %v200
  %246 = vmatprep.subr.bf16.mxu0 %v204
  %247 = vmatpush1.bf16.msra.mxu0 %v203
  %248 = vmatprep.subr.bf16.mxu0 %v207
  %249 = vmatpush1.bf16.msra.mxu0 %v206
  %250 = vmatprep.subr.bf16.mxu0 %v210
  %251 = vmatpush1.bf16.msra.mxu0 %v209
  %252 = vmatprep.subr.bf16.mxu0 0
  %253 = vmatpush1.bf16.msra.mxu0 0
  %254 = vmatprep.subr.bf16.mxu0 0
  %255 = vmatpush1.bf16.msra.mxu0 0
  %256 = vmatprep.subr.bf16.mxu0 0
  %257 = vmatpush1.bf16.msra.mxu0 0
  %258 = vmatprep.subr.bf16.mxu0 0
  %259 = vmatpush1.bf16.msra.mxu0 0
  %260 = vmatprep.subr.bf16.mxu0 0
  %261 = vmatpush1.bf16.msra.mxu0 0
  %262 = vmatprep.subr.bf16.mxu0 0
  %263 = vmatpush1.bf16.msra.mxu0 0
  %264 = vmatprep.subr.bf16.mxu0 0
  %265 = vmatpush1.bf16.msra.mxu0 0
  %266 = vmatprep.subr.bf16.mxu0 0
  %267 = vmatpush1.bf16.msra.mxu0 0
  %268 = vmatprep.mubr.bf16.mxu0 0
  %269 = vmatmul.mubr.bf16.gmra.mrb[0].mxu0 0
  %v270 = vpop.f32.mrb[0].mxu0
  %v271 = vadd.f32 0.0, %v270
  %v272 = vpop.f32.mrb[0].mxu0
  %v273 = vadd.f32 0.0, %v272
  %v274 = vpop.f32.mrb[0].mxu0
  %v275 = vpop.f32.mrb[0].mxu0
  %276 = vdwg.mxu0
  %277 = vmatprep.subr.bf16.mxu0 0
  %278 = vmatpush1.bf16.msra.mxu0 %v190
  %279 = vmatprep.subr.bf16.mxu0 0
  %280 = vmatpush1.bf16.msra.mxu0 %v193
  %281 = vmatprep.subr.bf16.mxu0 0
  %282 = vmatpush1.bf16.msra.mxu0 %v196
  %283 = vmatprep.subr.bf16.mxu0 0
  %284 = vmatpush1.bf16.msra.mxu0 %v199
  %285 = vmatprep.subr.bf16.mxu0 0
  %286 = vmatpush1.bf16.msra.mxu0 %v202
  %287 = vmatprep.subr.bf16.mxu0 0
  %288 = vmatpush1.bf16.msra.mxu0 %v205
  %289 = vmatprep.subr.bf16.mxu0 0
  %290 = vmatpush1.bf16.msra.mxu0 %v208
  %291 = vmatprep.subr.bf16.mxu0 0
  %292 = vmatpush1.bf16.msra.mxu0 %v211
  %293 = vmatprep.subr.bf16.mxu0 0
  %294 = vmatpush1.bf16.msra.mxu0 0
  %295 = vmatprep.subr.bf16.mxu0 0
  %296 = vmatpush1.bf16.msra.mxu0 0
  %297 = vmatprep.subr.bf16.mxu0 0
  %298 = vmatpush1.bf16.msra.mxu0 0
  %299 = vmatprep.subr.bf16.mxu0 0
  %300 = vmatpush1.bf16.msra.mxu0 0
  %301 = vmatprep.subr.bf16.mxu0 0
  %302 = vmatpush1.bf16.msra.mxu0 0
  %303 = vmatprep.subr.bf16.mxu0 0
  %304 = vmatpush1.bf16.msra.mxu0 0
  %305 = vmatprep.subr.bf16.mxu0 0
  %306 = vmatpush1.bf16.msra.mxu0 0
  %307 = vmatprep.subr.bf16.mxu0 0
  %308 = vmatpush1.bf16.msra.mxu0 0
  %309 = vmatprep.mubr.bf16.mxu0 0
  %310 = vmatmul.mubr.bf16.gmra.mrb[0].mxu0 0
  %v311 = vpop.f32.mrb[0].mxu0
  %v312 = vadd.f32 0.0, %v311
  %v313 = vpop.f32.mrb[0].mxu0
  %v314 = vpop.f32.mrb[0].mxu0
  %v315 = vpop.f32.mrb[0].mxu0
  %316 = vdwg.mxu0
  %v317 = vadd.f32 %v105, %v271
  %v318 = vadd.f32 %v106, %v273
  %v319 = vxor.u32 %v317, 2147483648
  %v320 = vxor.u32 %v318, 2147483648
  %v321 = vmul.f32 %v319, 1.442695
  %v322 = vpow.pop %v321
  %v323 = vmul.f32 %v320, 1.442695
  %v324 = vpow.pop %v323
  %v325 = vadd.f32 %v322, 1.0
  %v326 = vadd.f32 %v324, 1.0
  %v327 = vrcp.pop %v325
  %v328 = vmul.f32 1.0, %v327
  %v329 = vrcp.pop %v326
  %v330 = vmul.f32 1.0, %v329
  %v331 = vadd.f32 %v312, %v100
  %v332 = vmul.f32 %v328, %v331
  %v333 = vadd.f32 %v107, %v332
  %v334 = vtanh.pop %v333
  %v335 = vsub.f32 1.0, %v330
  %v336 = vmul.f32 %v335, %v334
  %v337 = vmul.f32 %v330, 0.0
  %v338 = vadd.f32 %v336, %v337
  %s339 = scalar_lea.vmem [#allocation2], 32
  %340 = vst [vmem:[%s339] sm:$0xff] %v338
  %s341 = scalar_lea.vmem %s1, 36
  %v342 = vld [vmem:[%s341] sm:$0xff]
  %v343 = vld [vmem:[%s341 + $0x8] sm:$0xf]
  %v344 = vunpack.c.l.bf16 %v342
  %v345 = vunpack.c.h.bf16 %v342
  %v346 = vunpack.c.l.bf16 %v343
  %v347 = vpack.c.bf16 %v338, %v338
  %348 = vmatprep.subr.bf16.mxu0 %v189
  %349 = vmatpush1.bf16.msra.mxu0 %v188
  %350 = vmatprep.subr.bf16.mxu0 %v192
  %351 = vmatpush1.bf16.msra.mxu0 %v191
  %352 = vmatprep.subr.bf16.mxu0 %v195
  %353 = vmatpush1.bf16.msra.mxu0 %v194
  %354 = vmatprep.subr.bf16.mxu0 %v198
  %355 = vmatpush1.bf16.msra.mxu0 %v197
  %356 = vmatprep.subr.bf16.mxu0 %v201
  %357 = vmatpush1.bf16.msra.mxu0 %v200
  %358 = vmatprep.subr.bf16.mxu0 %v204
  %359 = vmatpush1.bf16.msra.mxu0 %v203
  %360 = vmatprep.subr.bf16.mxu0 %v207
  %361 = vmatpush1.bf16.msra.mxu0 %v206
  %362 = vmatprep.subr.bf16.mxu0 %v210
  %363 = vmatpush1.bf16.msra.mxu0 %v209
  %364 = vmatprep.subr.bf16.mxu0 0
  %365 = vmatpush1.bf16.msra.mxu0 0
  %366 = vmatprep.subr.bf16.mxu0 0
  %367 = vmatpush1.bf16.msra.mxu0 0
  %368 = vmatprep.subr.bf16.mxu0 0
  %369 = vmatpush1.bf16.msra.mxu0 0
  %370 = vmatprep.subr.bf16.mxu0 0
  %371 = vmatpush1.bf16.msra.mxu0 0
  %372 = vmatprep.subr.bf16.mxu0 0
  %373 = vmatpush1.bf16.msra.mxu0 0
  %374 = vmatprep.subr.bf16.mxu0 0
  %375 = vmatpush1.bf16.msra.mxu0 0
  %376 = vmatprep.subr.bf16.mxu0 0
  %377 = vmatpush1.bf16.msra.mxu0 0
  %378 = vmatprep.subr.bf16.mxu0 0
  %379 = vmatpush1.bf16.msra.mxu0 0
  %380 = vmatprep.mubr.bf16.mxu0 0
  %381 = vmatmul.mubr.bf16.gmra.mrb[0].mxu0 %v347
  %v382 = vpop.f32.mrb[0].mxu0
  %v383 = vadd.f32 0.0, %v382
  %v384 = vpop.f32.mrb[0].mxu0
  %v385 = vadd.f32 0.0, %v384
  %v386 = vpop.f32.mrb[0].mxu0
  %v387 = vpop.f32.mrb[0].mxu0
  %388 = vdwg.mxu0
  %389 = vmatprep.subr.bf16.mxu0 0
  %390 = vmatpush1.bf16.msra.mxu0 %v190
  %391 = vmatprep.subr.bf16.mxu0 0
  %392 = vmatpush1.bf16.msra.mxu0 %v193
  %393 = vmatprep.subr.bf16.mxu0 0
  %394 = vmatpush1.bf16.msra.mxu0 %v196
  %395 = vmatprep.subr.bf16.mxu0 0
  %396 = vmatpush1.bf16.msra.mxu0 %v199
  %397 = vmatprep.subr.bf16.mxu0 0
  %398 = vmatpush1.bf16.msra.mxu0 %v202
  %399 = vmatprep.subr.bf16.mxu0 0
  %400 = vmatpush1.bf16.msra.mxu0 %v205
  %401 = vmatprep.subr.bf16.mxu0 0
  %402 = vmatpush1.bf16.msra.mxu0 %v208
  %403 = vmatprep.subr.bf16.mxu0 0
  %404 = vmatpush1.bf16.msra.mxu0 %v211
  %405 = vmatprep.subr.bf16.mxu0 0
  %406 = vmatpush1.bf16.msra.mxu0 0
  %407 = vmatprep.subr.bf16.mxu0 0
  %408 = vmatpush1.bf16.msra.mxu0 0
  %409 = vmatprep.subr.bf16.mxu0 0
  %410 = vmatpush1.bf16.msra.mxu0 0
  %411 = vmatprep.subr.bf16.mxu0 0
  %412 = vmatpush1.bf16.msra.mxu0 0
  %413 = vmatprep.subr.bf16.mxu0 0
  %414 = vmatpush1.bf16.msra.mxu0 0
  %415 = vmatprep.subr.bf16.mxu0 0
  %416 = vmatpush1.bf16.msra.mxu0 0
  %417 = vmatprep.subr.bf16.mxu0 0
  %418 = vmatpush1.bf16.msra.mxu0 0
  %419 = vmatprep.subr.bf16.mxu0 0
  %420 = vmatpush1.bf16.msra.mxu0 0
  %421 = vmatprep.mubr.bf16.mxu0 0
  %422 = vmatmul.mubr.bf16.gmra.mrb[0].mxu0 %v347
  %v423 = vpop.f32.mrb[0].mxu0
  %v424 = vadd.f32 0.0, %v423
  %v425 = vpop.f32.mrb[0].mxu0
  %v426 = vpop.f32.mrb[0].mxu0
  %v427 = vpop.f32.mrb[0].mxu0
  %428 = vdwg.mxu0
  %v429 = vadd.f32 %v344, %v383
  %v430 = vadd.f32 %v345, %v385
  %v431 = vxor.u32 %v429, 2147483648
  %v432 = vxor.u32 %v430, 2147483648
  %v433 = vmul.f32 %v431, 1.442695
  %v434 = vpow.pop %v433
  %v435 = vmul.f32 %v432, 1.442695
  %v436 = vpow.pop %v435
  %v437 = vadd.f32 %v434, 1.0
  %v438 = vadd.f32 %v436, 1.0
  %v439 = vrcp.pop %v437
  %v440 = vmul.f32 1.0, %v439
  %v441 = vrcp.pop %v438
  %v442 = vmul.f32 1.0, %v441
  %v443 = vadd.f32 %v424, %v100
  %v444 = vmul.f32 %v440, %v443
  %v445 = vadd.f32 %v346, %v444
  %v446 = vtanh.pop %v445
  %v447 = vsub.f32 1.0, %v442
  %v448 = vmul.f32 %v447, %v446
  %v449 = vmul.f32 %v442, %v338
  %v450 = vadd.f32 %v448, %v449
  %s451 = scalar_lea.vmem [#allocation2], 24
  %452 = vst [vmem:[%s451] sm:$0xff] %v450
  %s453 = scalar_lea.vmem %s1, 24
  %v454 = vld [vmem:[%s453] sm:$0xff]
  %v455 = vld [vmem:[%s453 + $0x8] sm:$0xf]
  %v456 = vunpack.c.l.bf16 %v454
  %v457 = vunpack.c.h.bf16 %v454
  %v458 = vunpack.c.l.bf16 %v455
  %v459 = vpack.c.bf16 %v450, %v450
  %460 = vmatprep.subr.bf16.mxu0 %v189
  %461 = vmatpush1.bf16.msra.mxu0 %v188
  %462 = vmatprep.subr.bf16.mxu0 %v192
  %463 = vmatpush1.bf16.msra.mxu0 %v191
  %464 = vmatprep.subr.bf16.mxu0 %v195
  %465 = vmatpush1.bf16.msra.mxu0 %v194
  %466 = vmatprep.subr.bf16.mxu0 %v198
  %467 = vmatpush1.bf16.msra.mxu0 %v197
  %468 = vmatprep.subr.bf16.mxu0 %v201
  %469 = vmatpush1.bf16.msra.mxu0 %v200
  %470 = vmatprep.subr.bf16.mxu0 %v204
  %471 = vmatpush1.bf16.msra.mxu0 %v203
  %472 = vmatprep.subr.bf16.mxu0 %v207
  %473 = vmatpush1.bf16.msra.mxu0 %v206
  %474 = vmatprep.subr.bf16.mxu0 %v210
  %475 = vmatpush1.bf16.msra.mxu0 %v209
  %476 = vmatprep.subr.bf16.mxu0 0
  %477 = vmatpush1.bf16.msra.mxu0 0
  %478 = vmatprep.subr.bf16.mxu0 0
  %479 = vmatpush1.bf16.msra.mxu0 0
  %480 = vmatprep.subr.bf16.mxu0 0
  %481 = vmatpush1.bf16.msra.mxu0 0
  %482 = vmatprep.subr.bf16.mxu0 0
  %483 = vmatpush1.bf16.msra.mxu0 0
  %484 = vmatprep.subr.bf16.mxu0 0
  %485 = vmatpush1.bf16.msra.mxu0 0
  %486 = vmatprep.subr.bf16.mxu0 0
  %487 = vmatpush1.bf16.msra.mxu0 0
  %488 = vmatprep.subr.bf16.mxu0 0
  %489 = vmatpush1.bf16.msra.mxu0 0
  %490 = vmatprep.subr.bf16.mxu0 0
  %491 = vmatpush1.bf16.msra.mxu0 0
  %492 = vmatprep.mubr.bf16.mxu0 0
  %493 = vmatmul.mubr.bf16.gmra.mrb[0].mxu0 %v459
  %v494 = vpop.f32.mrb[0].mxu0
  %v495 = vadd.f32 0.0, %v494
  %v496 = vpop.f32.mrb[0].mxu0
  %v497 = vadd.f32 0.0, %v496
  %v498 = vpop.f32.mrb[0].mxu0
  %v499 = vpop.f32.mrb[0].mxu0
  %500 = vdwg.mxu0
  %501 = vmatprep.subr.bf16.mxu0 0
  %502 = vmatpush1.bf16.msra.mxu0 %v190
  %503 = vmatprep.subr.bf16.mxu0 0
  %504 = vmatpush1.bf16.msra.mxu0 %v193
  %505 = vmatprep.subr.bf16.mxu0 0
  %506 = vmatpush1.bf16.msra.mxu0 %v196
  %507 = vmatprep.subr.bf16.mxu0 0
  %508 = vmatpush1.bf16.msra.mxu0 %v199
  %509 = vmatprep.subr.bf16.mxu0 0
  %510 = vmatpush1.bf16.msra.mxu0 %v202
  %511 = vmatprep.subr.bf16.mxu0 0
  %512 = vmatpush1.bf16.msra.mxu0 %v205
  %513 = vmatprep.subr.bf16.mxu0 0
  %514 = vmatpush1.bf16.msra.mxu0 %v208
  %515 = vmatprep.subr.bf16.mxu0 0
  %516 = vmatpush1.bf16.msra.mxu0 %v211
  %517 = vmatprep.subr.bf16.mxu0 0
  %518 = vmatpush1.bf16.msra.mxu0 0
  %519 = vmatprep.subr.bf16.mxu0 0
  %520 = vmatpush1.bf16.msra.mxu0 0
  %521 = vmatprep.subr.bf16.mxu0 0
  %522 = vmatpush1.bf16.msra.mxu0 0
  %523 = vmatprep.subr.bf16.mxu0 0
  %524 = vmatpush1.bf16.msra.mxu0 0
  %525 = vmatprep.subr.bf16.mxu0 0
  %526 = vmatpush1.bf16.msra.mxu0 0
  %527 = vmatprep.subr.bf16.mxu0 0
  %528 = vmatpush1.bf16.msra.mxu0 0
  %529 = vmatprep.subr.bf16.mxu0 0
  %530 = vmatpush1.bf16.msra.mxu0 0
  %531 = vmatprep.subr.bf16.mxu0 0
  %532 = vmatpush1.bf16.msra.mxu0 0
  %533 = vmatprep.mubr.bf16.mxu0 0
  %534 = vmatmul.mubr.bf16.gmra.mrb[0].mxu0 %v459
  %v535 = vpop.f32.mrb[0].mxu0
  %v536 = vadd.f32 0.0, %v535
  %v537 = vpop.f32.mrb[0].mxu0
  %v538 = vpop.f32.mrb[0].mxu0
  %v539 = vpop.f32.mrb[0].mxu0
  %540 = vdwg.mxu0
  %v541 = vadd.f32 %v456, %v495
  %v542 = vadd.f32 %v457, %v497
  %v543 = vxor.u32 %v541, 2147483648
  %v544 = vxor.u32 %v542, 2147483648
  %v545 = vmul.f32 %v543, 1.442695
  %v546 = vpow.pop %v545
  %v547 = vmul.f32 %v544, 1.442695
  %v548 = vpow.pop %v547
  %v549 = vadd.f32 %v546, 1.0
  %v550 = vadd.f32 %v548, 1.0
  %v551 = vrcp.pop %v549
  %v552 = vmul.f32 1.0, %v551
  %v553 = vrcp.pop %v550
  %v554 = vmul.f32 1.0, %v553
  %v555 = vadd.f32 %v536, %v100
  %v556 = vmul.f32 %v552, %v555
  %v557 = vadd.f32 %v458, %v556
  %v558 = vtanh.pop %v557
  %v559 = vsub.f32 1.0, %v554
  %v560 = vmul.f32 %v559, %v558
  %v561 = vmul.f32 %v554, %v450
  %v562 = vadd.f32 %v560, %v561
  %s563 = scalar_lea.vmem [#allocation2], 16
  %564 = vst [vmem:[%s563] sm:$0xff] %v562
  %s565 = scalar_lea.vmem %s1, 12
  %v566 = vld [vmem:[%s565] sm:$0xff]
  %v567 = vld [vmem:[%s565 + $0x8] sm:$0xf]
  %v568 = vunpack.c.l.bf16 %v566
  %v569 = vunpack.c.h.bf16 %v566
  %v570 = vunpack.c.l.bf16 %v567
  %v571 = vpack.c.bf16 %v562, %v562
  %572 = vmatprep.subr.bf16.mxu0 %v189
  %573 = vmatpush1.bf16.msra.mxu0 %v188
  %574 = vmatprep.subr.bf16.mxu0 %v192
  %575 = vmatpush1.bf16.msra.mxu0 %v191
  %576 = vmatprep.subr.bf16.mxu0 %v195
  %577 = vmatpush1.bf16.msra.mxu0 %v194
  %578 = vmatprep.subr.bf16.mxu0 %v198
  %579 = vmatpush1.bf16.msra.mxu0 %v197
  %580 = vmatprep.subr.bf16.mxu0 %v201
  %581 = vmatpush1.bf16.msra.mxu0 %v200
  %582 = vmatprep.subr.bf16.mxu0 %v204
  %583 = vmatpush1.bf16.msra.mxu0 %v203
  %584 = vmatprep.subr.bf16.mxu0 %v207
  %585 = vmatpush1.bf16.msra.mxu0 %v206
  %586 = vmatprep.subr.bf16.mxu0 %v210
  %587 = vmatpush1.bf16.msra.mxu0 %v209
  %588 = vmatprep.subr.bf16.mxu0 0
  %589 = vmatpush1.bf16.msra.mxu0 0
  %590 = vmatprep.subr.bf16.mxu0 0
  %591 = vmatpush1.bf16.msra.mxu0 0
  %592 = vmatprep.subr.bf16.mxu0 0
  %593 = vmatpush1.bf16.msra.mxu0 0
  %594 = vmatprep.subr.bf16.mxu0 0
  %595 = vmatpush1.bf16.msra.mxu0 0
  %596 = vmatprep.subr.bf16.mxu0 0
  %597 = vmatpush1.bf16.msra.mxu0 0
  %598 = vmatprep.subr.bf16.mxu0 0
  %599 = vmatpush1.bf16.msra.mxu0 0
  %600 = vmatprep.subr.bf16.mxu0 0
  %601 = vmatpush1.bf16.msra.mxu0 0
  %602 = vmatprep.subr.bf16.mxu0 0
  %603 = vmatpush1.bf16.msra.mxu0 0
  %604 = vmatprep.mubr.bf16.mxu0 0
  %605 = vmatmul.mubr.bf16.gmra.mrb[0].mxu0 %v571
  %v606 = vpop.f32.mrb[0].mxu0
  %v607 = vadd.f32 0.0, %v606
  %v608 = vpop.f32.mrb[0].mxu0
  %v609 = vadd.f32 0.0, %v608
  %v610 = vpop.f32.mrb[0].mxu0
  %v611 = vpop.f32.mrb[0].mxu0
  %612 = vdwg.mxu0
  %613 = vmatprep.subr.bf16.mxu0 0
  %614 = vmatpush1.bf16.msra.mxu0 %v190
  %615 = vmatprep.subr.bf16.mxu0 0
  %616 = vmatpush1.bf16.msra.mxu0 %v193
  %617 = vmatprep.subr.bf16.mxu0 0
  %618 = vmatpush1.bf16.msra.mxu0 %v196
  %619 = vmatprep.subr.bf16.mxu0 0
  %620 = vmatpush1.bf16.msra.mxu0 %v199
  %621 = vmatprep.subr.bf16.mxu0 0
  %622 = vmatpush1.bf16.msra.mxu0 %v202
  %623 = vmatprep.subr.bf16.mxu0 0
  %624 = vmatpush1.bf16.msra.mxu0 %v205
  %625 = vmatprep.subr.bf16.mxu0 0
  %626 = vmatpush1.bf16.msra.mxu0 %v208
  %627 = vmatprep.subr.bf16.mxu0 0
  %628 = vmatpush1.bf16.msra.mxu0 %v211
  %629 = vmatprep.subr.bf16.mxu0 0
  %630 = vmatpush1.bf16.msra.mxu0 0
  %631 = vmatprep.subr.bf16.mxu0 0
  %632 = vmatpush1.bf16.msra.mxu0 0
  %633 = vmatprep.subr.bf16.mxu0 0
  %634 = vmatpush1.bf16.msra.mxu0 0
  %635 = vmatprep.subr.bf16.mxu0 0
  %636 = vmatpush1.bf16.msra.mxu0 0
  %637 = vmatprep.subr.bf16.mxu0 0
  %638 = vmatpush1.bf16.msra.mxu0 0
  %639 = vmatprep.subr.bf16.mxu0 0
  %640 = vmatpush1.bf16.msra.mxu0 0
  %641 = vmatprep.subr.bf16.mxu0 0
  %642 = vmatpush1.bf16.msra.mxu0 0
  %643 = vmatprep.subr.bf16.mxu0 0
  %644 = vmatpush1.bf16.msra.mxu0 0
  %645 = vmatprep.mubr.bf16.mxu0 0
  %646 = vmatmul.mubr.bf16.gmra.mrb[0].mxu0 %v571
  %v647 = vpop.f32.mrb[0].mxu0
  %v648 = vadd.f32 0.0, %v647
  %v649 = vpop.f32.mrb[0].mxu0
  %v650 = vpop.f32.mrb[0].mxu0
  %v651 = vpop.f32.mrb[0].mxu0
  %652 = vdwg.mxu0
  %v653 = vadd.f32 %v568, %v607
  %v654 = vadd.f32 %v569, %v609
  %v655 = vxor.u32 %v653, 2147483648
  %v656 = vxor.u32 %v654, 2147483648
  %v657 = vmul.f32 %v655, 1.442695
  %v658 = vpow.pop %v657
  %v659 = vmul.f32 %v656, 1.442695
  %v660 = vpow.pop %v659
  %v661 = vadd.f32 %v658, 1.0
  %v662 = vadd.f32 %v660, 1.0
  %v663 = vrcp.pop %v661
  %v664 = vmul.f32 1.0, %v663
  %v665 = vrcp.pop %v662
  %v666 = vmul.f32 1.0, %v665
  %v667 = vadd.f32 %v648, %v100
  %v668 = vmul.f32 %v664, %v667
  %v669 = vadd.f32 %v570, %v668
  %v670 = vtanh.pop %v669
  %v671 = vsub.f32 1.0, %v666
  %v672 = vmul.f32 %v671, %v670
  %v673 = vmul.f32 %v666, %v562
  %v674 = vadd.f32 %v672, %v673
  %s675 = scalar_lea.vmem [#allocation2], 8
  %676 = vst [vmem:[%s675] sm:$0xff] %v674
  %v677 = vld [vmem:[%s1] sm:$0xff]
  %v678 = vld [vmem:[%s1 + $0x8] sm:$0xf]
  %v679 = vunpack.c.l.bf16 %v677
  %v680 = vunpack.c.h.bf16 %v677
  %v681 = vunpack.c.l.bf16 %v678
  %v682 = vpack.c.bf16 %v674, %v674
  %683 = vmatprep.subr.bf16.mxu0 %v189
  %684 = vmatpush1.bf16.msra.mxu0 %v188
  %685 = vmatprep.subr.bf16.mxu0 %v192
  %686 = vmatpush1.bf16.msra.mxu0 %v191
  %687 = vmatprep.subr.bf16.mxu0 %v195
  %688 = vmatpush1.bf16.msra.mxu0 %v194
  %689 = vmatprep.subr.bf16.mxu0 %v198
  %690 = vmatpush1.bf16.msra.mxu0 %v197
  %691 = vmatprep.subr.bf16.mxu0 %v201
  %692 = vmatpush1.bf16.msra.mxu0 %v200
  %693 = vmatprep.subr.bf16.mxu0 %v204
  %694 = vmatpush1.bf16.msra.mxu0 %v203
  %695 = vmatprep.subr.bf16.mxu0 %v207
  %696 = vmatpush1.bf16.msra.mxu0 %v206
  %697 = vmatprep.subr.bf16.mxu0 %v210
  %698 = vmatpush1.bf16.msra.mxu0 %v209
  %699 = vmatprep.subr.bf16.mxu0 0
  %700 = vmatpush1.bf16.msra.mxu0 0
  %701 = vmatprep.subr.bf16.mxu0 0
  %702 = vmatpush1.bf16.msra.mxu0 0
  %703 = vmatprep.subr.bf16.mxu0 0
  %704 = vmatpush1.bf16.msra.mxu0 0
  %705 = vmatprep.subr.bf16.mxu0 0
  %706 = vmatpush1.bf16.msra.mxu0 0
  %707 = vmatprep.subr.bf16.mxu0 0
  %708 = vmatpush1.bf16.msra.mxu0 0
  %709 = vmatprep.subr.bf16.mxu0 0
  %710 = vmatpush1.bf16.msra.mxu0 0
  %711 = vmatprep.subr.bf16.mxu0 0
  %712 = vmatpush1.bf16.msra.mxu0 0
  %713 = vmatprep.subr.bf16.mxu0 0
  %714 = vmatpush1.bf16.msra.mxu0 0
  %715 = vmatprep.mubr.bf16.mxu0 0
  %716 = vmatmul.mubr.bf16.gmra.mrb[0].mxu0 %v682
  %v717 = vpop.f32.mrb[0].mxu0
  %v718 = vadd.f32 0.0, %v717
  %v719 = vpop.f32.mrb[0].mxu0
  %v720 = vadd.f32 0.0, %v719
  %v721 = vpop.f32.mrb[0].mxu0
  %v722 = vpop.f32.mrb[0].mxu0
  %723 = vdwg.mxu0
  %724 = vmatprep.subr.bf16.mxu0 0
  %725 = vmatpush1.bf16.msra.mxu0 %v190
  %726 = vmatprep.subr.bf16.mxu0 0
  %727 = vmatpush1.bf16.msra.mxu0 %v193
  %728 = vmatprep.subr.bf16.mxu0 0
  %729 = vmatpush1.bf16.msra.mxu0 %v196
  %730 = vmatprep.subr.bf16.mxu0 0
  %731 = vmatpush1.bf16.msra.mxu0 %v199
  %732 = vmatprep.subr.bf16.mxu0 0
  %733 = vmatpush1.bf16.msra.mxu0 %v202
  %734 = vmatprep.subr.bf16.mxu0 0
  %735 = vmatpush1.bf16.msra.mxu0 %v205
  %736 = vmatprep.subr.bf16.mxu0 0
  %737 = vmatpush1.bf16.msra.mxu0 %v208
  %738 = vmatprep.subr.bf16.mxu0 0
  %739 = vmatpush1.bf16.msra.mxu0 %v211
  %740 = vmatprep.subr.bf16.mxu0 0
  %741 = vmatpush1.bf16.msra.mxu0 0
  %742 = vmatprep.subr.bf16.mxu0 0
  %743 = vmatpush1.bf16.msra.mxu0 0
  %744 = vmatprep.subr.bf16.mxu0 0
  %745 = vmatpush1.bf16.msra.mxu0 0
  %746 = vmatprep.subr.bf16.mxu0 0
  %747 = vmatpush1.bf16.msra.mxu0 0
  %748 = vmatprep.subr.bf16.mxu0 0
  %749 = vmatpush1.bf16.msra.mxu0 0
  %750 = vmatprep.subr.bf16.mxu0 0
  %751 = vmatpush1.bf16.msra.mxu0 0
  %752 = vmatprep.subr.bf16.mxu0 0
  %753 = vmatpush1.bf16.msra.mxu0 0
  %754 = vmatprep.subr.bf16.mxu0 0
  %755 = vmatpush1.bf16.msra.mxu0 0
  %756 = vmatprep.mubr.bf16.mxu0 0
  %757 = vmatmul.mubr.bf16.gmra.mrb[0].mxu0 %v682
  %v758 = vpop.f32.mrb[0].mxu0
  %v759 = vadd.f32 0.0, %v758
  %v760 = vpop.f32.mrb[0].mxu0
  %v761 = vpop.f32.mrb[0].mxu0
  %v762 = vpop.f32.mrb[0].mxu0
  %763 = vdwg.mxu0
  %v764 = vadd.f32 %v679, %v718
  %v765 = vadd.f32 %v680, %v720
  %v766 = vxor.u32 %v764, 2147483648
  %v767 = vxor.u32 %v765, 2147483648
  %v768 = vmul.f32 %v766, 1.442695
  %v769 = vpow.pop %v768
  %v770 = vmul.f32 %v767, 1.442695
  %v771 = vpow.pop %v770
  %v772 = vadd.f32 %v769, 1.0
  %v773 = vadd.f32 %v771, 1.0
  %v774 = vrcp.pop %v772
  %v775 = vmul.f32 1.0, %v774
  %v776 = vrcp.pop %v773
  %v777 = vmul.f32 1.0, %v776
  %v778 = vadd.f32 %v759, %v100
  %v779 = vmul.f32 %v775, %v778
  %v780 = vadd.f32 %v681, %v779
  %v781 = vtanh.pop %v780
  %v782 = vsub.f32 1.0, %v777
  %v783 = vmul.f32 %v782, %v781
  %v784 = vmul.f32 %v777, %v674
  %v785 = vadd.f32 %v783, %v784
  %786 = vst [vmem:[#allocation2] sm:$0xff] %v785
  %v787 = vld [vmem:[%s0] sm:$0xff]
  %v788 = vld [vmem:[%s0 + $0x8] sm:$0xf]
  %v789 = vunpack.c.l.bf16 %v787
  %v790 = vunpack.c.h.bf16 %v787
  %v791 = vunpack.c.l.bf16 %v788
  %v824 = vunpack.c.l.b16 %v24
  %v825 = vunpack.c.h.b16 %v24
  %v826 = vunpack.c.l.b16 %v25
  %v827 = vunpack.c.l.b16 %v26
  %v828 = vunpack.c.h.b16 %v26
  %v829 = vunpack.c.l.b16 %v27
  %v830 = vunpack.c.l.b16 %v28
  %v831 = vunpack.c.h.b16 %v28
  %v832 = vunpack.c.l.b16 %v29
  %v833 = vunpack.c.l.b16 %v30
  %v834 = vunpack.c.h.b16 %v30
  %v835 = vunpack.c.l.b16 %v31
  %v836 = vunpack.c.l.b16 %v32
  %v837 = vunpack.c.h.b16 %v32
  %v838 = vunpack.c.l.b16 %v33
  %v839 = vunpack.c.l.b16 %v34
  %v840 = vunpack.c.h.b16 %v34
  %v841 = vunpack.c.l.b16 %v35
  %v842 = vunpack.c.l.b16 %v36
  %v843 = vunpack.c.h.b16 %v36
  %v844 = vunpack.c.l.b16 %v37
  %v845 = vunpack.c.l.b16 %v38
  %v846 = vunpack.c.h.b16 %v38
  %v847 = vunpack.c.l.b16 %v39
  %v848 = vunpack.c.l.b16 %v40
  %v849 = vunpack.c.h.b16 %v40
  %v850 = vunpack.c.l.b16 %v41
  %v851 = vunpack.c.l.b16 %v42
  %v852 = vunpack.c.h.b16 %v42
  %v853 = vunpack.c.l.b16 %v43
  %v854 = vunpack.c.l.b16 %v44
  %v855 = vunpack.c.h.b16 %v44
  %v856 = vunpack.c.l.b16 %v45
  %v857 = vunpack.c.l.b16 %v46
  %v858 = vunpack.c.h.b16 %v46
  %v859 = vunpack.c.l.b16 %v47
  %v860 = vunpack.c.l.b16 %v48
  %v861 = vunpack.c.h.b16 %v48
  %v862 = vunpack.c.l.b16 %v49
  %v863 = vunpack.c.l.b16 %v50
  %v864 = vunpack.c.h.b16 %v50
  %v865 = vunpack.c.l.b16 %v51
  %v866 = vunpack.c.l.b16 %v52
  %v867 = vunpack.c.h.b16 %v52
  %v868 = vunpack.c.l.b16 %v53
  %v869 = vunpack.c.l.b16 %v54
  %v870 = vunpack.c.h.b16 %v54
  %v871 = vunpack.c.l.b16 %v55
  %v872 = vpack.c.b16 %v827, %v824
  %v873 = vpack.c.b16 %v828, %v825
  %v874 = vpack.c.b16 %v829, %v826
  %v875 = vpack.c.b16 %v833, %v830
  %v876 = vpack.c.b16 %v834, %v831
  %v877 = vpack.c.b16 %v835, %v832
  %v878 = vpack.c.b16 %v839, %v836
  %v879 = vpack.c.b16 %v840, %v837
  %v880 = vpack.c.b16 %v841, %v838
  %v881 = vpack.c.b16 %v845, %v842
  %v882 = vpack.c.b16 %v846, %v843
  %v883 = vpack.c.b16 %v847, %v844
  %v884 = vpack.c.b16 %v851, %v848
  %v885 = vpack.c.b16 %v852, %v849
  %v886 = vpack.c.b16 %v853, %v850
  %v887 = vpack.c.b16 %v857, %v854
  %v888 = vpack.c.b16 %v858, %v855
  %v889 = vpack.c.b16 %v859, %v856
  %v890 = vpack.c.b16 %v863, %v860
  %v891 = vpack.c.b16 %v864, %v861
  %v892 = vpack.c.b16 %v865, %v862
  %v893 = vpack.c.b16 %v869, %v866
  %v894 = vpack.c.b16 %v870, %v867
  %v895 = vpack.c.b16 %v871, %v868
  %920 = vmatprep.subr.bf16.mxu0 %v873
  %921 = vmatpush1.bf16.msra.mxu0 %v872
  %922 = vmatprep.subr.bf16.mxu0 %v876
  %923 = vmatpush1.bf16.msra.mxu0 %v875
  %924 = vmatprep.subr.bf16.mxu0 %v879
  %925 = vmatpush1.bf16.msra.mxu0 %v878
  %926 = vmatprep.subr.bf16.mxu0 %v882
  %927 = vmatpush1.bf16.msra.mxu0 %v881
  %928 = vmatprep.subr.bf16.mxu0 %v885
  %929 = vmatpush1.bf16.msra.mxu0 %v884
  %930 = vmatprep.subr.bf16.mxu0 %v888
  %931 = vmatpush1.bf16.msra.mxu0 %v887
  %932 = vmatprep.subr.bf16.mxu0 %v891
  %933 = vmatpush1.bf16.msra.mxu0 %v890
  %934 = vmatprep.subr.bf16.mxu0 %v894
  %935 = vmatpush1.bf16.msra.mxu0 %v893
  %936 = vmatprep.subr.bf16.mxu0 0
  %937 = vmatpush1.bf16.msra.mxu0 0
  %938 = vmatprep.subr.bf16.mxu0 0
  %939 = vmatpush1.bf16.msra.mxu0 0
  %940 = vmatprep.subr.bf16.mxu0 0
  %941 = vmatpush1.bf16.msra.mxu0 0
  %942 = vmatprep.subr.bf16.mxu0 0
  %943 = vmatpush1.bf16.msra.mxu0 0
  %944 = vmatprep.subr.bf16.mxu0 0
  %945 = vmatpush1.bf16.msra.mxu0 0
  %946 = vmatprep.subr.bf16.mxu0 0
  %947 = vmatpush1.bf16.msra.mxu0 0
  %948 = vmatprep.subr.bf16.mxu0 0
  %949 = vmatpush1.bf16.msra.mxu0 0
  %950 = vmatprep.subr.bf16.mxu0 0
  %951 = vmatpush1.bf16.msra.mxu0 0
  %952 = vmatprep.mubr.bf16.mxu0 0
  %953 = vmatmul.mubr.bf16.gmra.mrb[0].mxu0 0
  %v954 = vpop.f32.mrb[0].mxu0
  %v955 = vadd.f32 0.0, %v954
  %v956 = vpop.f32.mrb[0].mxu0
  %v957 = vadd.f32 0.0, %v956
  %v958 = vpop.f32.mrb[0].mxu0
  %v959 = vpop.f32.mrb[0].mxu0
  %960 = vdwg.mxu0
  %961 = vmatprep.subr.bf16.mxu0 0
  %962 = vmatpush1.bf16.msra.mxu0 %v874
  %963 = vmatprep.subr.bf16.mxu0 0
  %964 = vmatpush1.bf16.msra.mxu0 %v877
  %965 = vmatprep.subr.bf16.mxu0 0
  %966 = vmatpush1.bf16.msra.mxu0 %v880
  %967 = vmatprep.subr.bf16.mxu0 0
  %968 = vmatpush1.bf16.msra.mxu0 %v883
  %969 = vmatprep.subr.bf16.mxu0 0
  %970 = vmatpush1.bf16.msra.mxu0 %v886
  %971 = vmatprep.subr.bf16.mxu0 0
  %972 = vmatpush1.bf16.msra.mxu0 %v889
  %973 = vmatprep.subr.bf16.mxu0 0
  %974 = vmatpush1.bf16.msra.mxu0 %v892
  %975 = vmatprep.subr.bf16.mxu0 0
  %976 = vmatpush1.bf16.msra.mxu0 %v895
  %977 = vmatprep.subr.bf16.mxu0 0
  %978 = vmatpush1.bf16.msra.mxu0 0
  %979 = vmatprep.subr.bf16.mxu0 0
  %980 = vmatpush1.bf16.msra.mxu0 0
  %981 = vmatprep.subr.bf16.mxu0 0
  %982 = vmatpush1.bf16.msra.mxu0 0
  %983 = vmatprep.subr.bf16.mxu0 0
  %984 = vmatpush1.bf16.msra.mxu0 0
  %985 = vmatprep.subr.bf16.mxu0 0
  %986 = vmatpush1.bf16.msra.mxu0 0
  %987 = vmatprep.subr.bf16.mxu0 0
  %988 = vmatpush1.bf16.msra.mxu0 0
  %989 = vmatprep.subr.bf16.mxu0 0
  %990 = vmatpush1.bf16.msra.mxu0 0
  %991 = vmatprep.subr.bf16.mxu0 0
  %992 = vmatpush1.bf16.msra.mxu0 0
  %993 = vmatprep.mubr.bf16.mxu0 0
  %994 = vmatmul.mubr.bf16.gmra.mrb[0].mxu0 0
  %v995 = vpop.f32.mrb[0].mxu0
  %v996 = vadd.f32 0.0, %v995
  %v997 = vpop.f32.mrb[0].mxu0
  %v998 = vpop.f32.mrb[0].mxu0
  %v999 = vpop.f32.mrb[0].mxu0
  %1000 = vdwg.mxu0
  %v1001 = vadd.f32 %v789, %v955
  %v1002 = vadd.f32 %v790, %v957
  %v1003 = vxor.u32 %v1001, 2147483648
  %v1004 = vxor.u32 %v1002, 2147483648
  %v1005 = vmul.f32 %v1003, 1.442695
  %v1006 = vpow.pop %v1005
  %v1007 = vmul.f32 %v1004, 1.442695
  %v1008 = vpow.pop %v1007
  %v1009 = vadd.f32 %v1006, 1.0
  %v1010 = vadd.f32 %v1008, 1.0
  %v1011 = vrcp.pop %v1009
  %v1012 = vmul.f32 1.0, %v1011
  %v1013 = vrcp.pop %v1010
  %v1014 = vmul.f32 1.0, %v1013
  %v1015 = vadd.f32 %v996, %v93
  %v1016 = vmul.f32 %v1012, %v1015
  %v1017 = vadd.f32 %v791, %v1016
  %v1018 = vtanh.pop %v1017
  %v1019 = vsub.f32 1.0, %v1014
  %v1020 = vmul.f32 %v1019, %v1018
  %v1021 = vmul.f32 %v1014, 0.0
  %v1022 = vadd.f32 %v1020, %v1021
  %v1023 = vld [vmem:[#allocation2] sm:$0xff]
  %1024 = vst [vmem:[%s6] sm:$0xff] %v1022
  %1025 = vst [vmem:[%s6 + $0x8] sm:$0xff] %v1023
  %s1026 = scalar_lea.vmem %s0, 12
  %v1027 = vld [vmem:[%s1026] sm:$0xff]
  %v1028 = vld [vmem:[%s1026 + $0x8] sm:$0xf]
  %v1029 = vunpack.c.l.bf16 %v1027
  %v1030 = vunpack.c.h.bf16 %v1027
  %v1031 = vunpack.c.l.bf16 %v1028
  %v1032 = vpack.c.bf16 %v1022, %v1022
  %1033 = vmatprep.subr.bf16.mxu0 %v873
  %1034 = vmatpush1.bf16.msra.mxu0 %v872
  %1035 = vmatprep.subr.bf16.mxu0 %v876
  %1036 = vmatpush1.bf16.msra.mxu0 %v875
  %1037 = vmatprep.subr.bf16.mxu0 %v879
  %1038 = vmatpush1.bf16.msra.mxu0 %v878
  %1039 = vmatprep.subr.bf16.mxu0 %v882
  %1040 = vmatpush1.bf16.msra.mxu0 %v881
  %1041 = vmatprep.subr.bf16.mxu0 %v885
  %1042 = vmatpush1.bf16.msra.mxu0 %v884
  %1043 = vmatprep.subr.bf16.mxu0 %v888
  %1044 = vmatpush1.bf16.msra.mxu0 %v887
  %1045 = vmatprep.subr.bf16.mxu0 %v891
  %1046 = vmatpush1.bf16.msra.mxu0 %v890
  %1047 = vmatprep.subr.bf16.mxu0 %v894
  %1048 = vmatpush1.bf16.msra.mxu0 %v893
  %1049 = vmatprep.subr.bf16.mxu0 0
  %1050 = vmatpush1.bf16.msra.mxu0 0
  %1051 = vmatprep.subr.bf16.mxu0 0
  %1052 = vmatpush1.bf16.msra.mxu0 0
  %1053 = vmatprep.subr.bf16.mxu0 0
  %1054 = vmatpush1.bf16.msra.mxu0 0
  %1055 = vmatprep.subr.bf16.mxu0 0
  %1056 = vmatpush1.bf16.msra.mxu0 0
  %1057 = vmatprep.subr.bf16.mxu0 0
  %1058 = vmatpush1.bf16.msra.mxu0 0
  %1059 = vmatprep.subr.bf16.mxu0 0
  %1060 = vmatpush1.bf16.msra.mxu0 0
  %1061 = vmatprep.subr.bf16.mxu0 0
  %1062 = vmatpush1.bf16.msra.mxu0 0
  %1063 = vmatprep.subr.bf16.mxu0 0
  %1064 = vmatpush1.bf16.msra.mxu0 0
  %1065 = vmatprep.mubr.bf16.mxu0 0
  %1066 = vmatmul.mubr.bf16.gmra.mrb[0].mxu0 %v1032
  %v1067 = vpop.f32.mrb[0].mxu0
  %v1068 = vadd.f32 0.0, %v1067
  %v1069 = vpop.f32.mrb[0].mxu0
  %v1070 = vadd.f32 0.0, %v1069
  %v1071 = vpop.f32.mrb[0].mxu0
  %v1072 = vpop.f32.mrb[0].mxu0
  %1073 = vdwg.mxu0
  %1074 = vmatprep.subr.bf16.mxu0 0
  %1075 = vmatpush1.bf16.msra.mxu0 %v874
  %1076 = vmatprep.subr.bf16.mxu0 0
  %1077 = vmatpush1.bf16.msra.mxu0 %v877
  %1078 = vmatprep.subr.bf16.mxu0 0
  %1079 = vmatpush1.bf16.msra.mxu0 %v880
  %1080 = vmatprep.subr.bf16.mxu0 0
  %1081 = vmatpush1.bf16.msra.mxu0 %v883
  %1082 = vmatprep.subr.bf16.mxu0 0
  %1083 = vmatpush1.bf16.msra.mxu0 %v886
  %1084 = vmatprep.subr.bf16.mxu0 0
  %1085 = vmatpush1.bf16.msra.mxu0 %v889
  %1086 = vmatprep.subr.bf16.mxu0 0
  %1087 = vmatpush1.bf16.msra.mxu0 %v892
  %1088 = vmatprep.subr.bf16.mxu0 0
  %1089 = vmatpush1.bf16.msra.mxu0 %v895
  %1090 = vmatprep.subr.bf16.mxu0 0
  %1091 = vmatpush1.bf16.msra.mxu0 0
  %1092 = vmatprep.subr.bf16.mxu0 0
  %1093 = vmatpush1.bf16.msra.mxu0 0
  %1094 = vmatprep.subr.bf16.mxu0 0
  %1095 = vmatpush1.bf16.msra.mxu0 0
  %1096 = vmatprep.subr.bf16.mxu0 0
  %1097 = vmatpush1.bf16.msra.mxu0 0
  %1098 = vmatprep.subr.bf16.mxu0 0
  %1099 = vmatpush1.bf16.msra.mxu0 0
  %1100 = vmatprep.subr.bf16.mxu0 0
  %1101 = vmatpush1.bf16.msra.mxu0 0
  %1102 = vmatprep.subr.bf16.mxu0 0
  %1103 = vmatpush1.bf16.msra.mxu0 0
  %1104 = vmatprep.subr.bf16.mxu0 0
  %1105 = vmatpush1.bf16.msra.mxu0 0
  %1106 = vmatprep.mubr.bf16.mxu0 0
  %1107 = vmatmul.mubr.bf16.gmra.mrb[0].mxu0 %v1032
  %v1108 = vpop.f32.mrb[0].mxu0
  %v1109 = vadd.f32 0.0, %v1108
  %v1110 = vpop.f32.mrb[0].mxu0
  %v1111 = vpop.f32.mrb[0].mxu0
  %v1112 = vpop.f32.mrb[0].mxu0
  %1113 = vdwg.mxu0
  %v1114 = vadd.f32 %v1029, %v1068
  %v1115 = vadd.f32 %v1030, %v1070
  %v1116 = vxor.u32 %v1114, 2147483648
  %v1117 = vxor.u32 %v1115, 2147483648
  %v1118 = vmul.f32 %v1116, 1.442695
  %v1119 = vpow.pop %v1118
  %v1120 = vmul.f32 %v1117, 1.442695
  %v1121 = vpow.pop %v1120
  %v1122 = vadd.f32 %v1119, 1.0
  %v1123 = vadd.f32 %v1121, 1.0
  %v1124 = vrcp.pop %v1122
  %v1125 = vmul.f32 1.0, %v1124
  %v1126 = vrcp.pop %v1123
  %v1127 = vmul.f32 1.0, %v1126
  %v1128 = vadd.f32 %v1109, %v93
  %v1129 = vmul.f32 %v1125, %v1128
  %v1130 = vadd.f32 %v1031, %v1129
  %v1131 = vtanh.pop %v1130
  %v1132 = vsub.f32 1.0, %v1127
  %v1133 = vmul.f32 %v1132, %v1131
  %v1134 = vmul.f32 %v1127, %v1022
  %v1135 = vadd.f32 %v1133, %v1134
  %v1136 = vld [vmem:[%s675] sm:$0xff]
  %s1137 = scalar_lea.vmem %s6, 16
  %1138 = vst [vmem:[%s1137] sm:$0xff] %v1135
  %1139 = vst [vmem:[%s1137 + $0x8] sm:$0xff] %v1136
  %s1140 = scalar_lea.vmem %s0, 24
  %v1141 = vld [vmem:[%s1140] sm:$0xff]
  %v1142 = vld [vmem:[%s1140 + $0x8] sm:$0xf]
  %v1143 = vunpack.c.l.bf16 %v1141
  %v1144 = vunpack.c.h.bf16 %v1141
  %v1145 = vunpack.c.l.bf16 %v1142
  %v1146 = vpack.c.bf16 %v1135, %v1135
  %1147 = vmatprep.subr.bf16.mxu0 %v873
  %1148 = vmatpush1.bf16.msra.mxu0 %v872
  %1149 = vmatprep.subr.bf16.mxu0 %v876
  %1150 = vmatpush1.bf16.msra.mxu0 %v875
  %1151 = vmatprep.subr.bf16.mxu0 %v879
  %1152 = vmatpush1.bf16.msra.mxu0 %v878
  %1153 = vmatprep.subr.bf16.mxu0 %v882
  %1154 = vmatpush1.bf16.msra.mxu0 %v881
  %1155 = vmatprep.subr.bf16.mxu0 %v885
  %1156 = vmatpush1.bf16.msra.mxu0 %v884
  %1157 = vmatprep.subr.bf16.mxu0 %v888
  %1158 = vmatpush1.bf16.msra.mxu0 %v887
  %1159 = vmatprep.subr.bf16.mxu0 %v891
  %1160 = vmatpush1.bf16.msra.mxu0 %v890
  %1161 = vmatprep.subr.bf16.mxu0 %v894
  %1162 = vmatpush1.bf16.msra.mxu0 %v893
  %1163 = vmatprep.subr.bf16.mxu0 0
  %1164 = vmatpush1.bf16.msra.mxu0 0
  %1165 = vmatprep.subr.bf16.mxu0 0
  %1166 = vmatpush1.bf16.msra.mxu0 0
  %1167 = vmatprep.subr.bf16.mxu0 0
  %1168 = vmatpush1.bf16.msra.mxu0 0
  %1169 = vmatprep.subr.bf16.mxu0 0
  %1170 = vmatpush1.bf16.msra.mxu0 0
  %1171 = vmatprep.subr.bf16.mxu0 0
  %1172 = vmatpush1.bf16.msra.mxu0 0
  %1173 = vmatprep.subr.bf16.mxu0 0
  %1174 = vmatpush1.bf16.msra.mxu0 0
  %1175 = vmatprep.subr.bf16.mxu0 0
  %1176 = vmatpush1.bf16.msra.mxu0 0
  %1177 = vmatprep.subr.bf16.mxu0 0
  %1178 = vmatpush1.bf16.msra.mxu0 0
  %1179 = vmatprep.mubr.bf16.mxu0 0
  %1180 = vmatmul.mubr.bf16.gmra.mrb[0].mxu0 %v1146
  %v1181 = vpop.f32.mrb[0].mxu0
  %v1182 = vadd.f32 0.0, %v1181
  %v1183 = vpop.f32.mrb[0].mxu0
  %v1184 = vadd.f32 0.0, %v1183
  %v1185 = vpop.f32.mrb[0].mxu0
  %v1186 = vpop.f32.mrb[0].mxu0
  %1187 = vdwg.mxu0
  %1188 = vmatprep.subr.bf16.mxu0 0
  %1189 = vmatpush1.bf16.msra.mxu0 %v874
  %1190 = vmatprep.subr.bf16.mxu0 0
  %1191 = vmatpush1.bf16.msra.mxu0 %v877
  %1192 = vmatprep.subr.bf16.mxu0 0
  %1193 = vmatpush1.bf16.msra.mxu0 %v880
  %1194 = vmatprep.subr.bf16.mxu0 0
  %1195 = vmatpush1.bf16.msra.mxu0 %v883
  %1196 = vmatprep.subr.bf16.mxu0 0
  %1197 = vmatpush1.bf16.msra.mxu0 %v886
  %1198 = vmatprep.subr.bf16.mxu0 0
  %1199 = vmatpush1.bf16.msra.mxu0 %v889
  %1200 = vmatprep.subr.bf16.mxu0 0
  %1201 = vmatpush1.bf16.msra.mxu0 %v892
  %1202 = vmatprep.subr.bf16.mxu0 0
  %1203 = vmatpush1.bf16.msra.mxu0 %v895
  %1204 = vmatprep.subr.bf16.mxu0 0
  %1205 = vmatpush1.bf16.msra.mxu0 0
  %1206 = vmatprep.subr.bf16.mxu0 0
  %1207 = vmatpush1.bf16.msra.mxu0 0
  %1208 = vmatprep.subr.bf16.mxu0 0
  %1209 = vmatpush1.bf16.msra.mxu0 0
  %1210 = vmatprep.subr.bf16.mxu0 0
  %1211 = vmatpush1.bf16.msra.mxu0 0
  %1212 = vmatprep.subr.bf16.mxu0 0
  %1213 = vmatpush1.bf16.msra.mxu0 0
  %1214 = vmatprep.subr.bf16.mxu0 0
  %1215 = vmatpush1.bf16.msra.mxu0 0
  %1216 = vmatprep.subr.bf16.mxu0 0
  %1217 = vmatpush1.bf16.msra.mxu0 0
  %1218 = vmatprep.subr.bf16.mxu0 0
  %1219 = vmatpush1.bf16.msra.mxu0 0
  %1220 = vmatprep.mubr.bf16.mxu0 0
  %1221 = vmatmul.mubr.bf16.gmra.mrb[0].mxu0 %v1146
  %v1222 = vpop.f32.mrb[0].mxu0
  %v1223 = vadd.f32 0.0, %v1222
  %v1224 = vpop.f32.mrb[0].mxu0
  %v1225 = vpop.f32.mrb[0].mxu0
  %v1226 = vpop.f32.mrb[0].mxu0
  %1227 = vdwg.mxu0
  %v1228 = vadd.f32 %v1143, %v1182
  %v1229 = vadd.f32 %v1144, %v1184
  %v1230 = vxor.u32 %v1228, 2147483648
  %v1231 = vxor.u32 %v1229, 2147483648
  %v1232 = vmul.f32 %v1230, 1.442695
  %v1233 = vpow.pop %v1232
  %v1234 = vmul.f32 %v1231, 1.442695
  %v1235 = vpow.pop %v1234
  %v1236 = vadd.f32 %v1233, 1.0
  %v1237 = vadd.f32 %v1235, 1.0
  %v1238 = vrcp.pop %v1236
  %v1239 = vmul.f32 1.0, %v1238
  %v1240 = vrcp.pop %v1237
  %v1241 = vmul.f32 1.0, %v1240
  %v1242 = vadd.f32 %v1223, %v93
  %v1243 = vmul.f32 %v1239, %v1242
  %v1244 = vadd.f32 %v1145, %v1243
  %v1245 = vtanh.pop %v1244
  %v1246 = vsub.f32 1.0, %v1241
  %v1247 = vmul.f32 %v1246, %v1245
  %v1248 = vmul.f32 %v1241, %v1135
  %v1249 = vadd.f32 %v1247, %v1248
  %v1250 = vld [vmem:[%s563] sm:$0xff]
  %s1251 = scalar_lea.vmem %s6, 32
  %1252 = vst [vmem:[%s1251] sm:$0xff] %v1249
  %1253 = vst [vmem:[%s1251 + $0x8] sm:$0xff] %v1250
  %s1254 = scalar_lea.vmem %s0, 36
  %v1255 = vld [vmem:[%s1254] sm:$0xff]
  %v1256 = vld [vmem:[%s1254 + $0x8] sm:$0xf]
  %v1257 = vunpack.c.l.bf16 %v1255
  %v1258 = vunpack.c.h.bf16 %v1255
  %v1259 = vunpack.c.l.bf16 %v1256
  %v1260 = vpack.c.bf16 %v1249, %v1249
  %1261 = vmatprep.subr.bf16.mxu0 %v873
  %1262 = vmatpush1.bf16.msra.mxu0 %v872
  %1263 = vmatprep.subr.bf16.mxu0 %v876
  %1264 = vmatpush1.bf16.msra.mxu0 %v875
  %1265 = vmatprep.subr.bf16.mxu0 %v879
  %1266 = vmatpush1.bf16.msra.mxu0 %v878
  %1267 = vmatprep.subr.bf16.mxu0 %v882
  %1268 = vmatpush1.bf16.msra.mxu0 %v881
  %1269 = vmatprep.subr.bf16.mxu0 %v885
  %1270 = vmatpush1.bf16.msra.mxu0 %v884
  %1271 = vmatprep.subr.bf16.mxu0 %v888
  %1272 = vmatpush1.bf16.msra.mxu0 %v887
  %1273 = vmatprep.subr.bf16.mxu0 %v891
  %1274 = vmatpush1.bf16.msra.mxu0 %v890
  %1275 = vmatprep.subr.bf16.mxu0 %v894
  %1276 = vmatpush1.bf16.msra.mxu0 %v893
  %1277 = vmatprep.subr.bf16.mxu0 0
  %1278 = vmatpush1.bf16.msra.mxu0 0
  %1279 = vmatprep.subr.bf16.mxu0 0
  %1280 = vmatpush1.bf16.msra.mxu0 0
  %1281 = vmatprep.subr.bf16.mxu0 0
  %1282 = vmatpush1.bf16.msra.mxu0 0
  %1283 = vmatprep.subr.bf16.mxu0 0
  %1284 = vmatpush1.bf16.msra.mxu0 0
  %1285 = vmatprep.subr.bf16.mxu0 0
  %1286 = vmatpush1.bf16.msra.mxu0 0
  %1287 = vmatprep.subr.bf16.mxu0 0
  %1288 = vmatpush1.bf16.msra.mxu0 0
  %1289 = vmatprep.subr.bf16.mxu0 0
  %1290 = vmatpush1.bf16.msra.mxu0 0
  %1291 = vmatprep.subr.bf16.mxu0 0
  %1292 = vmatpush1.bf16.msra.mxu0 0
  %1293 = vmatprep.mubr.bf16.mxu0 0
  %1294 = vmatmul.mubr.bf16.gmra.mrb[0].mxu0 %v1260
  %v1295 = vpop.f32.mrb[0].mxu0
  %v1296 = vadd.f32 0.0, %v1295
  %v1297 = vpop.f32.mrb[0].mxu0
  %v1298 = vadd.f32 0.0, %v1297
  %v1299 = vpop.f32.mrb[0].mxu0
  %v1300 = vpop.f32.mrb[0].mxu0
  %1301 = vdwg.mxu0
  %1302 = vmatprep.subr.bf16.mxu0 0
  %1303 = vmatpush1.bf16.msra.mxu0 %v874
  %1304 = vmatprep.subr.bf16.mxu0 0
  %1305 = vmatpush1.bf16.msra.mxu0 %v877
  %1306 = vmatprep.subr.bf16.mxu0 0
  %1307 = vmatpush1.bf16.msra.mxu0 %v880
  %1308 = vmatprep.subr.bf16.mxu0 0
  %1309 = vmatpush1.bf16.msra.mxu0 %v883
  %1310 = vmatprep.subr.bf16.mxu0 0
  %1311 = vmatpush1.bf16.msra.mxu0 %v886
  %1312 = vmatprep.subr.bf16.mxu0 0
  %1313 = vmatpush1.bf16.msra.mxu0 %v889
  %1314 = vmatprep.subr.bf16.mxu0 0
  %1315 = vmatpush1.bf16.msra.mxu0 %v892
  %1316 = vmatprep.subr.bf16.mxu0 0
  %1317 = vmatpush1.bf16.msra.mxu0 %v895
  %1318 = vmatprep.subr.bf16.mxu0 0
  %1319 = vmatpush1.bf16.msra.mxu0 0
  %1320 = vmatprep.subr.bf16.mxu0 0
  %1321 = vmatpush1.bf16.msra.mxu0 0
  %1322 = vmatprep.subr.bf16.mxu0 0
  %1323 = vmatpush1.bf16.msra.mxu0 0
  %1324 = vmatprep.subr.bf16.mxu0 0
  %1325 = vmatpush1.bf16.msra.mxu0 0
  %1326 = vmatprep.subr.bf16.mxu0 0
  %1327 = vmatpush1.bf16.msra.mxu0 0
  %1328 = vmatprep.subr.bf16.mxu0 0
  %1329 = vmatpush1.bf16.msra.mxu0 0
  %1330 = vmatprep.subr.bf16.mxu0 0
  %1331 = vmatpush1.bf16.msra.mxu0 0
  %1332 = vmatprep.subr.bf16.mxu0 0
  %1333 = vmatpush1.bf16.msra.mxu0 0
  %1334 = vmatprep.mubr.bf16.mxu0 0
  %1335 = vmatmul.mubr.bf16.gmra.mrb[0].mxu0 %v1260
  %v1336 = vpop.f32.mrb[0].mxu0
  %v1337 = vadd.f32 0.0, %v1336
  %v1338 = vpop.f32.mrb[0].mxu0
  %v1339 = vpop.f32.mrb[0].mxu0
  %v1340 = vpop.f32.mrb[0].mxu0
  %1341 = vdwg.mxu0
  %v1342 = vadd.f32 %v1257, %v1296
  %v1343 = vadd.f32 %v1258, %v1298
  %v1344 = vxor.u32 %v1342, 2147483648
  %v1345 = vxor.u32 %v1343, 2147483648
  %v1346 = vmul.f32 %v1344, 1.442695
  %v1347 = vpow.pop %v1346
  %v1348 = vmul.f32 %v1345, 1.442695
  %v1349 = vpow.pop %v1348
  %v1350 = vadd.f32 %v1347, 1.0
  %v1351 = vadd.f32 %v1349, 1.0
  %v1352 = vrcp.pop %v1350
  %v1353 = vmul.f32 1.0, %v1352
  %v1354 = vrcp.pop %v1351
  %v1355 = vmul.f32 1.0, %v1354
  %v1356 = vadd.f32 %v1337, %v93
  %v1357 = vmul.f32 %v1353, %v1356
  %v1358 = vadd.f32 %v1259, %v1357
  %v1359 = vtanh.pop %v1358
  %v1360 = vsub.f32 1.0, %v1355
  %v1361 = vmul.f32 %v1360, %v1359
  %v1362 = vmul.f32 %v1355, %v1249
  %v1363 = vadd.f32 %v1361, %v1362
  %v1364 = vld [vmem:[%s451] sm:$0xff]
  %s1365 = scalar_lea.vmem %s6, 48
  %1366 = vst [vmem:[%s1365] sm:$0xff] %v1363
  %1367 = vst [vmem:[%s1365 + $0x8] sm:$0xff] %v1364
  %s1368 = scalar_lea.vmem %s0, 48
  %v1369 = vld [vmem:[%s1368] sm:$0xff]
  %v1370 = vld [vmem:[%s1368 + $0x8] sm:$0xf]
  %v1371 = vunpack.c.l.bf16 %v1369
  %v1372 = vunpack.c.h.bf16 %v1369
  %v1373 = vunpack.c.l.bf16 %v1370
  %v1374 = vpack.c.bf16 %v1363, %v1363
  %1375 = vmatprep.subr.bf16.mxu0 %v873
  %1376 = vmatpush1.bf16.msra.mxu0 %v872
  %1377 = vmatprep.subr.bf16.mxu0 %v876
  %1378 = vmatpush1.bf16.msra.mxu0 %v875
  %1379 = vmatprep.subr.bf16.mxu0 %v879
  %1380 = vmatpush1.bf16.msra.mxu0 %v878
  %1381 = vmatprep.subr.bf16.mxu0 %v882
  %1382 = vmatpush1.bf16.msra.mxu0 %v881
  %1383 = vmatprep.subr.bf16.mxu0 %v885
  %1384 = vmatpush1.bf16.msra.mxu0 %v884
  %1385 = vmatprep.subr.bf16.mxu0 %v888
  %1386 = vmatpush1.bf16.msra.mxu0 %v887
  %1387 = vmatprep.subr.bf16.mxu0 %v891
  %1388 = vmatpush1.bf16.msra.mxu0 %v890
  %1389 = vmatprep.subr.bf16.mxu0 %v894
  %1390 = vmatpush1.bf16.msra.mxu0 %v893
  %1391 = vmatprep.subr.bf16.mxu0 0
  %1392 = vmatpush1.bf16.msra.mxu0 0
  %1393 = vmatprep.subr.bf16.mxu0 0
  %1394 = vmatpush1.bf16.msra.mxu0 0
  %1395 = vmatprep.subr.bf16.mxu0 0
  %1396 = vmatpush1.bf16.msra.mxu0 0
  %1397 = vmatprep.subr.bf16.mxu0 0
  %1398 = vmatpush1.bf16.msra.mxu0 0
  %1399 = vmatprep.subr.bf16.mxu0 0
  %1400 = vmatpush1.bf16.msra.mxu0 0
  %1401 = vmatprep.subr.bf16.mxu0 0
  %1402 = vmatpush1.bf16.msra.mxu0 0
  %1403 = vmatprep.subr.bf16.mxu0 0
  %1404 = vmatpush1.bf16.msra.mxu0 0
  %1405 = vmatprep.subr.bf16.mxu0 0
  %1406 = vmatpush1.bf16.msra.mxu0 0
  %1407 = vmatprep.mubr.bf16.mxu0 0
  %1408 = vmatmul.mubr.bf16.gmra.mrb[0].mxu0 %v1374
  %v1409 = vpop.f32.mrb[0].mxu0
  %v1410 = vadd.f32 0.0, %v1409
  %v1411 = vpop.f32.mrb[0].mxu0
  %v1412 = vadd.f32 0.0, %v1411
  %v1413 = vpop.f32.mrb[0].mxu0
  %v1414 = vpop.f32.mrb[0].mxu0
  %1415 = vdwg.mxu0
  %1416 = vmatprep.subr.bf16.mxu0 0
  %1417 = vmatpush1.bf16.msra.mxu0 %v874
  %1418 = vmatprep.subr.bf16.mxu0 0
  %1419 = vmatpush1.bf16.msra.mxu0 %v877
  %1420 = vmatprep.subr.bf16.mxu0 0
  %1421 = vmatpush1.bf16.msra.mxu0 %v880
  %1422 = vmatprep.subr.bf16.mxu0 0
  %1423 = vmatpush1.bf16.msra.mxu0 %v883
  %1424 = vmatprep.subr.bf16.mxu0 0
  %1425 = vmatpush1.bf16.msra.mxu0 %v886
  %1426 = vmatprep.subr.bf16.mxu0 0
  %1427 = vmatpush1.bf16.msra.mxu0 %v889
  %1428 = vmatprep.subr.bf16.mxu0 0
  %1429 = vmatpush1.bf16.msra.mxu0 %v892
  %1430 = vmatprep.subr.bf16.mxu0 0
  %1431 = vmatpush1.bf16.msra.mxu0 %v895
  %1432 = vmatprep.subr.bf16.mxu0 0
  %1433 = vmatpush1.bf16.msra.mxu0 0
  %1434 = vmatprep.subr.bf16.mxu0 0
  %1435 = vmatpush1.bf16.msra.mxu0 0
  %1436 = vmatprep.subr.bf16.mxu0 0
  %1437 = vmatpush1.bf16.msra.mxu0 0
  %1438 = vmatprep.subr.bf16.mxu0 0
  %1439 = vmatpush1.bf16.msra.mxu0 0
  %1440 = vmatprep.subr.bf16.mxu0 0
  %1441 = vmatpush1.bf16.msra.mxu0 0
  %1442 = vmatprep.subr.bf16.mxu0 0
  %1443 = vmatpush1.bf16.msra.mxu0 0
  %1444 = vmatprep.subr.bf16.mxu0 0
  %1445 = vmatpush1.bf16.msra.mxu0 0
  %1446 = vmatprep.subr.bf16.mxu0 0
  %1447 = vmatpush1.bf16.msra.mxu0 0
  %1448 = vmatprep.mubr.bf16.mxu0 0
  %1449 = vmatmul.mubr.bf16.gmra.mrb[0].mxu0 %v1374
  %v1450 = vpop.f32.mrb[0].mxu0
  %v1451 = vadd.f32 0.0, %v1450
  %v1452 = vpop.f32.mrb[0].mxu0
  %v1453 = vpop.f32.mrb[0].mxu0
  %v1454 = vpop.f32.mrb[0].mxu0
  %1455 = vdwg.mxu0
  %v1456 = vadd.f32 %v1371, %v1410
  %v1457 = vadd.f32 %v1372, %v1412
  %v1458 = vxor.u32 %v1456, 2147483648
  %v1459 = vxor.u32 %v1457, 2147483648
  %v1460 = vmul.f32 %v1458, 1.442695
  %v1461 = vpow.pop %v1460
  %v1462 = vmul.f32 %v1459, 1.442695
  %v1463 = vpow.pop %v1462
  %v1464 = vadd.f32 %v1461, 1.0
  %v1465 = vadd.f32 %v1463, 1.0
  %v1466 = vrcp.pop %v1464
  %v1467 = vmul.f32 1.0, %v1466
  %v1468 = vrcp.pop %v1465
  %v1469 = vmul.f32 1.0, %v1468
  %v1470 = vadd.f32 %v1451, %v93
  %v1471 = vmul.f32 %v1467, %v1470
  %v1472 = vadd.f32 %v1373, %v1471
  %v1473 = vtanh.pop %v1472
  %v1474 = vsub.f32 1.0, %v1469
  %v1475 = vmul.f32 %v1474, %v1473
  %v1476 = vmul.f32 %v1469, %v1363
  %v1477 = vadd.f32 %v1475, %v1476
  %v1478 = vld [vmem:[%s339] sm:$0xff]
  %s1479 = scalar_lea.vmem %s6, 64
  %1480 = vst [vmem:[%s1479] sm:$0xff] %v1477
  %1481 = vst [vmem:[%s1479 + $0x8] sm:$0xff] %v1478
  // Predicated region
  $region26: #{hierarchical_encoder.5} parent=0 // pred_check
    _
  $region27: #{hierarchical_encoder.5} parent=0 // pred_check_branch
    %1483 = sbr.rel (0) target = $region29
  $region28: #{hierarchical_encoder.5} parent=0 // pred_region
    _
  $region29: #{hierarchical_encoder.5} parent=0 // pred_fallthru
    _
  // Predicated region
  $region30: #{hierarchical_encoder.5} parent=0 // pred_check
    _
  $region31: #{hierarchical_encoder.5} parent=0 // pred_check_branch
    %1485 = sbr.rel (0) target = $region33
  $region32: #{hierarchical_encoder.5} parent=0 // pred_region
    _
  $region33: #{hierarchical_encoder.5} parent=0 // pred_fallthru
    _

</llo_original>
